<compile_context>
chip_gen: v7x
topology: tpu7x:2x2x1
jax: 0.10.0
libtpu: 0.0.40
codegen_flags: <defaults>
</compile_context>

<pallas_src>
import jax
import jax.numpy as jnp
from jax.experimental import pallas as pl
from jax.experimental.pallas import tpu as pltpu

# ---------------------------------------------------------------------------
# Problem sizes (small, consistent with the module's forward)
# ---------------------------------------------------------------------------
SEQ = 4           # sequence length
BATCH_SIZE = 2    # batch
INPUT_SIZE = 16   # external input size
OUTPUT_SIZE = 8   # DNC output size
HIDDEN = 32       # controller hidden size (num_layers = 1)
NUM_READS = 2
NUM_WRITES = 1
WORD_SIZE = 8
MEM_SLOTS = 16

CTRL_IN = INPUT_SIZE + NUM_READS * WORD_SIZE        # controller input size
NUM_READ_MODES = 1 + 2 * NUM_WRITES
READ_FLAT = NUM_READS * WORD_SIZE
PRE_OUT = HIDDEN + READ_FLAT
GATES = 4 * HIDDEN                                   # fused LSTM gate width

# Interface column layout, reordered so the consumed sigmoid-gated fields are
# contiguous (erase_vectors | write_vectors | write_gate).  Column order of
# w_iface / b_iface follows this layout.
IFACE_LAYOUT = [
    ('read_keys', NUM_READS * WORD_SIZE),
    ('read_strengths', NUM_READS),
    ('write_keys', NUM_WRITES * WORD_SIZE),
    ('write_strengths', NUM_WRITES),
    # --- contiguous sigmoid-gated block (consumed) ---
    ('erase_vectors', NUM_WRITES * WORD_SIZE),
    ('write_vectors', NUM_WRITES * WORD_SIZE),
    ('write_gate', NUM_WRITES),
    # --- sigmoid / softmax fields that the (missing) Memory class would use ---
    ('free_gate', NUM_READS),
    ('allocation_gate', NUM_WRITES),
    ('read_modes', NUM_READS * NUM_READ_MODES),
]
IFACE_OFF = {}
_off = 0
for _name, _size in IFACE_LAYOUT:
    IFACE_OFF[_name] = _off
    _off += _size
IFACE_TOTAL = _off
GATED_START = IFACE_OFF['erase_vectors']
GATED_END = IFACE_OFF['write_gate'] + NUM_WRITES     # one contiguous sigmoid range

_EPS = 1e-6


# ---------------------------------------------------------------------------
# In-kernel helpers (pure jnp / lax — traced into the Pallas kernel)
# ---------------------------------------------------------------------------
def _softplus(x):
    # numerically stable softplus
    return jnp.maximum(x, 0.0) + jnp.log(1.0 + jnp.exp(-jnp.abs(x)))


def _oneplus(x):
    # canonical DNC strength activation: 1 + softplus
    return 1.0 + _softplus(x)


def _row_normalize(x):
    # unit-normalize along the last axis (EUP rsqrt; eps-guarded for zeros)
    return x * jax.lax.rsqrt(jnp.sum(x * x, axis=-1, keepdims=True) + _EPS)


def _softmax_last(logits):
    z = logits - jnp.max(logits, axis=-1, keepdims=True)
    p = jnp.exp(z)
    return p / jnp.sum(p, axis=-1, keepdims=True)


# ---------------------------------------------------------------------------
# Fused whole-sequence kernel: grid=(), everything resident in VMEM
# ---------------------------------------------------------------------------
def dnc_fused_kernel(x_flat_ref, h0_ref, c0_ref, rw0_ref, m0_ref,
                     wih_x_ref, wih_r_ref, whh_ref, bl_ref,
                     wif_ref, bif_ref,
                     wout_h_ref, wout_r_ref, bout_ref,
                     out_ref, h_ref, c_ref, rw_ref, m_ref):
    seq = out_ref.shape[0]

    # --- hoisted input projection: one lane-dense (SEQ*B, I)@(I, 4H) matmul
    # covering every timestep; off the recurrent critical path.
    x_pre_all = jnp.dot(x_flat_ref[...], wih_x_ref[...],
                        preferred_element_type=jnp.float32)      # (SEQ*B, 4H)

    # Resident weights (single VMEM load each).
    wih_r = wih_r_ref[...]
    whh = whh_ref[...]
    b_l = bl_ref[...]
    wif = wif_ref[...]
    bif = bif_ref[...]
    wout_h = wout_h_ref[...]
    wout_r = wout_r_ref[...]
    bout = bout_ref[...]

    # Recurrent state carried as values (no HBM round-trips between steps).
    h = h0_ref[...]                      # (B, HIDDEN)
    c = c0_ref[...]                      # (B, HIDDEN)
    rw = rw0_ref[...]                    # (B, READ_FLAT)
    mem = m0_ref[...]                    # (B, MEM_SLOTS, WORD_SIZE)

    o_rk = IFACE_OFF['read_keys']
    o_rs = IFACE_OFF['read_strengths']
    o_wk = IFACE_OFF['write_keys']
    o_ws = IFACE_OFF['write_strengths']

    # seq is a compile-time constant -> the loop is fully unrolled into one
    # basic block (all slices below are static).
    for t in range(seq):
        # ---- LSTM controller, gate-fused (one 4H=128 lane-dense tile) ------
        gates = (x_pre_all[t * BATCH_SIZE:(t + 1) * BATCH_SIZE, :]
                 + jnp.dot(rw, wih_r, preferred_element_type=jnp.float32)
                 + jnp.dot(h, whh, preferred_element_type=jnp.float32)
                 + b_l)                                          # (B, 4H)
        i_g = jax.nn.sigmoid(gates[:, 0 * HIDDEN:1 * HIDDEN])
        f_g = jax.nn.sigmoid(gates[:, 1 * HIDDEN:2 * HIDDEN])
        g_g = jnp.tanh(gates[:, 2 * HIDDEN:3 * HIDDEN])
        o_g = jax.nn.sigmoid(gates[:, 3 * HIDDEN:4 * HIDDEN])
        c = f_g * c + i_g * g_g
        h = o_g * jnp.tanh(c)

        # ---- interface layer: 10 linears fused into one matmul -------------
        iface = (jnp.dot(h, wif, preferred_element_type=jnp.float32)
                 + bif)                                          # (B, IFACE_TOTAL)

        # one sigmoid over the contiguous gated range, then static sub-slices
        gated = jax.nn.sigmoid(iface[:, GATED_START:GATED_END])  # (B, 2W+1)
        ev = gated[:, 0:WORD_SIZE]                               # erase vec (B, W)
        wv = gated[:, WORD_SIZE:2 * WORD_SIZE]                   # write vec (B, W)
        wg = gated[:, 2 * WORD_SIZE:2 * WORD_SIZE + 1]           # write gate (B, 1)

        # ---- content-addressed write (NUM_WRITES == 1), MXU contraction ----
        m_norm = _row_normalize(mem)                             # (B, N, W)
        wk = _row_normalize(iface[:, o_wk:o_wk + WORD_SIZE])     # (B, W)
        sim_w = jnp.einsum('bqw,bnw->bqn', wk[:, None, :], m_norm,
                           preferred_element_type=jnp.float32)[:, 0, :]  # (B, N)
        ws = _oneplus(iface[:, o_ws:o_ws + NUM_WRITES])          # (B, 1)
        cw_w = _softmax_last(ws * sim_w)                         # (B, N)
        ww = wg * cw_w                                           # (B, N)
        mem = (mem * (1.0 - ww[:, :, None] * ev[:, None, :])
               + ww[:, :, None] * wv[:, None, :])                # (B, N, W)

        # ---- content-addressed read: both read heads batched on the MXU ----
        m_norm = _row_normalize(mem)
        rk = jnp.concatenate(
            [iface[:, o_rk + r * WORD_SIZE:o_rk + (r + 1) * WORD_SIZE][:, None, :]
             for r in range(NUM_READS)], axis=1)                 # (B, R, W)
        rkn = _row_normalize(rk)
        sim_r = jnp.einsum('brw,bnw->brn', rkn, m_norm,
                           preferred_element_type=jnp.float32)   # (B, R, N)
        rs = _oneplus(iface[:, o_rs:o_rs + NUM_READS])[:, :, None]  # (B, R, 1)
        cw_r = _softmax_last(rs * sim_r)                         # (B, R, N)
        read = jnp.einsum('brn,bnw->brw', cw_r, mem,
                          preferred_element_type=jnp.float32)    # (B, R, W)
        rw = jnp.concatenate([read[:, r, :] for r in range(NUM_READS)],
                             axis=-1)                            # (B, R*W)

        # TODO(synk): free_gate / allocation_gate / read_modes from the
        # interface layer are not consumed (real Memory class unavailable).

        # ---- output projection (split over [h | read_words], no concat) ----
        out_ref[t] = (jnp.dot(h, wout_h, preferred_element_type=jnp.float32)
                      + jnp.dot(rw, wout_r, preferred_element_type=jnp.float32)
                      + bout)                                    # (B, OUTPUT_SIZE)

    # ---- final recurrent state written once at the end ----------------------
    h_ref[...] = h
    c_ref[...] = c
    rw_ref[...] = rw
    m_ref[...] = mem


# ---------------------------------------------------------------------------
# Wrapper: one pallas_call, no grid, all arrays resident in VMEM
# ---------------------------------------------------------------------------
def _vmem_spec():
    return pl.BlockSpec(memory_space=pltpu.MemorySpace.VMEM)


def dnc_forward(inputs, params, state):
    h0, c0, read_words0, m0 = state
    seq = inputs.shape[0]
    x_flat = inputs.reshape(seq * BATCH_SIZE, INPUT_SIZE)        # host-side, free
    rw0_flat = read_words0.reshape(BATCH_SIZE, READ_FLAT)

    out_shape = (
        jax.ShapeDtypeStruct((seq, BATCH_SIZE, OUTPUT_SIZE), jnp.float32),
        jax.ShapeDtypeStruct((BATCH_SIZE, HIDDEN), jnp.float32),
        jax.ShapeDtypeStruct((BATCH_SIZE, HIDDEN), jnp.float32),
        jax.ShapeDtypeStruct((BATCH_SIZE, READ_FLAT), jnp.float32),
        jax.ShapeDtypeStruct((BATCH_SIZE, MEM_SLOTS, WORD_SIZE), jnp.float32),
    )

    outputs, h_n, c_n, rw_n, m_n = pl.pallas_call(
        dnc_fused_kernel,
        out_shape=out_shape,
        in_specs=[_vmem_spec() for _ in range(14)],
        out_specs=tuple(_vmem_spec() for _ in range(5)),
    )(x_flat, h0, c0, rw0_flat, m0,
      params['w_ih_x'], params['w_ih_r'], params['w_hh'], params['b_lstm'],
      params['w_iface'], params['b_iface'],
      params['w_out_h'], params['w_out_r'], params['b_out'])

    new_state = (h_n, c_n,
                 rw_n.reshape(BATCH_SIZE, NUM_READS, WORD_SIZE), m_n)
    return outputs, new_state


# ---------------------------------------------------------------------------
# Deterministic parameter / state init
# ---------------------------------------------------------------------------
def init_params(key):
    ks = jax.random.split(key, 10)
    s = 0.1
    return {
        # Gate-fused LSTM weights, PyTorch gate order (i, f, g, o) along the
        # 4H columns; the input-side matrix is split into [x | read_words]
        # blocks so no concatenation is needed at run time.
        'w_ih_x': s * jax.random.normal(ks[0], (INPUT_SIZE, GATES), jnp.float32),
        'w_ih_r': s * jax.random.normal(ks[1], (READ_FLAT, GATES), jnp.float32),
        'w_hh': s * jax.random.normal(ks[2], (HIDDEN, GATES), jnp.float32),
        # b_lstm must hold b_ih + b_hh when porting PyTorch weights.
        'b_lstm': s * jax.random.normal(ks[3], (1, GATES), jnp.float32),
        # 10 interface linears fused; columns follow IFACE_LAYOUT ordering.
        'w_iface': s * jax.random.normal(ks[4], (HIDDEN, IFACE_TOTAL), jnp.float32),
        'b_iface': s * jax.random.normal(ks[5], (1, IFACE_TOTAL), jnp.float32),
        # Output layer split over [h | read_words].
        'w_out_h': s * jax.random.normal(ks[6], (HIDDEN, OUTPUT_SIZE), jnp.float32),
        'w_out_r': s * jax.random.normal(ks[7], (READ_FLAT, OUTPUT_SIZE), jnp.float32),
        'b_out': s * jax.random.normal(ks[8], (1, OUTPUT_SIZE), jnp.float32),
    }


def init_state():
    h = jnp.zeros((BATCH_SIZE, HIDDEN), jnp.float32)
    c = jnp.zeros((BATCH_SIZE, HIDDEN), jnp.float32)
    read_words = jnp.zeros((BATCH_SIZE, NUM_READS, WORD_SIZE), jnp.float32)
    mem = jnp.zeros((BATCH_SIZE, MEM_SLOTS, WORD_SIZE), jnp.float32)
    return h, c, read_words, mem


if __name__ == "__main__":
    key = jax.random.PRNGKey(0)
    k_param, k_in = jax.random.split(key)
    params = init_params(k_param)
    state = init_state()
    inputs = jax.random.normal(k_in, (SEQ, BATCH_SIZE, INPUT_SIZE),
                               jnp.float32)

    fwd = jax.jit(dnc_forward)
    outputs, new_state = fwd(inputs, params, state)
    outputs = jax.block_until_ready(outputs)

    assert outputs.shape == (SEQ, BATCH_SIZE, OUTPUT_SIZE)
    assert bool(jnp.all(jnp.isfinite(outputs)))
    assert new_state[0].shape == (BATCH_SIZE, HIDDEN)
    assert new_state[2].shape == (BATCH_SIZE, NUM_READS, WORD_SIZE)
    assert new_state[3].shape == (BATCH_SIZE, MEM_SLOTS, WORD_SIZE)
    print("KERNEL_OK")
</pallas_src>

<mosaic_0001>
module attributes {stable_mosaic.version = 11 : i64} {
  func.func @dnc_fused_kernel(%arg0: memref<8x16xf32, #tpu.memory_space<vmem>>, %arg1: memref<2x32xf32, #tpu.memory_space<vmem>>, %arg2: memref<2x32xf32, #tpu.memory_space<vmem>>, %arg3: memref<2x16xf32, #tpu.memory_space<vmem>>, %arg4: memref<2x16x8xf32, #tpu.memory_space<vmem>>, %arg5: memref<16x128xf32, #tpu.memory_space<vmem>>, %arg6: memref<16x128xf32, #tpu.memory_space<vmem>>, %arg7: memref<32x128xf32, #tpu.memory_space<vmem>>, %arg8: memref<1x128xf32, #tpu.memory_space<vmem>>, %arg9: memref<32x53xf32, #tpu.memory_space<vmem>>, %arg10: memref<1x53xf32, #tpu.memory_space<vmem>>, %arg11: memref<32x8xf32, #tpu.memory_space<vmem>>, %arg12: memref<16x8xf32, #tpu.memory_space<vmem>>, %arg13: memref<1x8xf32, #tpu.memory_space<vmem>>, %arg14: memref<4x2x8xf32, #tpu.memory_space<vmem>>, %arg15: memref<2x32xf32, #tpu.memory_space<vmem>>, %arg16: memref<2x32xf32, #tpu.memory_space<vmem>>, %arg17: memref<2x16xf32, #tpu.memory_space<vmem>>, %arg18: memref<2x16x8xf32, #tpu.memory_space<vmem>>) attributes {dimension_semantics = [], scalar_prefetch = 0 : i64, scratch_operands = 0 : i64, tpu.core_type = #tpu.core_type<tc>} {
    %c0 = arith.constant 0 : index
    %c0_0 = arith.constant 0 : index
    %0 = vector.load %arg0[%c0, %c0_0] : memref<8x16xf32, #tpu.memory_space<vmem>>, vector<8x16xf32>
    %c0_1 = arith.constant 0 : index
    %c0_2 = arith.constant 0 : index
    %1 = vector.load %arg5[%c0_1, %c0_2] : memref<16x128xf32, #tpu.memory_space<vmem>>, vector<16x128xf32>
    %cst = arith.constant dense<0.000000e+00> : vector<8x128xf32>
    %2 = tpu.matmul %0, %1, %cst {dimension_numbers = #tpu.dot_dimension_numbers<[1], [0], [0], [1], [0, 0, 1, 1], [], []>} : vector<8x16xf32>, vector<16x128xf32>, vector<8x128xf32> -> vector<8x128xf32>
    %c0_3 = arith.constant 0 : index
    %c0_4 = arith.constant 0 : index
    %3 = vector.load %arg6[%c0_3, %c0_4] : memref<16x128xf32, #tpu.memory_space<vmem>>, vector<16x128xf32>
    %c0_5 = arith.constant 0 : index
    %c0_6 = arith.constant 0 : index
    %4 = vector.load %arg7[%c0_5, %c0_6] : memref<32x128xf32, #tpu.memory_space<vmem>>, vector<32x128xf32>
    %c0_7 = arith.constant 0 : index
    %c0_8 = arith.constant 0 : index
    %5 = vector.load %arg8[%c0_7, %c0_8] : memref<1x128xf32, #tpu.memory_space<vmem>>, vector<1x128xf32>
    %c0_9 = arith.constant 0 : index
    %c0_10 = arith.constant 0 : index
    %6 = vector.load %arg9[%c0_9, %c0_10] : memref<32x53xf32, #tpu.memory_space<vmem>>, vector<32x53xf32>
    %c0_11 = arith.constant 0 : index
    %c0_12 = arith.constant 0 : index
    %7 = vector.load %arg10[%c0_11, %c0_12] : memref<1x53xf32, #tpu.memory_space<vmem>>, vector<1x53xf32>
    %c0_13 = arith.constant 0 : index
    %c0_14 = arith.constant 0 : index
    %8 = vector.load %arg11[%c0_13, %c0_14] : memref<32x8xf32, #tpu.memory_space<vmem>>, vector<32x8xf32>
    %c0_15 = arith.constant 0 : index
    %c0_16 = arith.constant 0 : index
    %9 = vector.load %arg12[%c0_15, %c0_16] : memref<16x8xf32, #tpu.memory_space<vmem>>, vector<16x8xf32>
    %c0_17 = arith.constant 0 : index
    %c0_18 = arith.constant 0 : index
    %10 = vector.load %arg13[%c0_17, %c0_18] : memref<1x8xf32, #tpu.memory_space<vmem>>, vector<1x8xf32>
    %c0_19 = arith.constant 0 : index
    %c0_20 = arith.constant 0 : index
    %11 = vector.load %arg1[%c0_19, %c0_20] : memref<2x32xf32, #tpu.memory_space<vmem>>, vector<2x32xf32>
    %c0_21 = arith.constant 0 : index
    %c0_22 = arith.constant 0 : index
    %12 = vector.load %arg2[%c0_21, %c0_22] : memref<2x32xf32, #tpu.memory_space<vmem>>, vector<2x32xf32>
    %c0_23 = arith.constant 0 : index
    %c0_24 = arith.constant 0 : index
    %13 = vector.load %arg3[%c0_23, %c0_24] : memref<2x16xf32, #tpu.memory_space<vmem>>, vector<2x16xf32>
    %c0_25 = arith.constant 0 : index
    %c0_26 = arith.constant 0 : index
    %c0_27 = arith.constant 0 : index
    %14 = vector.load %arg4[%c0_25, %c0_26, %c0_27] : memref<2x16x8xf32, #tpu.memory_space<vmem>>, vector<2x16x8xf32>
    %15 = vector.extract_strided_slice %2 {offsets = [0, 0], sizes = [2, 128], strides = [1, 1]} : vector<8x128xf32> to vector<2x128xf32>
    %cst_28 = arith.constant dense<0.000000e+00> : vector<2x128xf32>
    %16 = tpu.matmul %13, %3, %cst_28 {dimension_numbers = #tpu.dot_dimension_numbers<[1], [0], [0], [1], [0, 0, 1, 1], [], []>} : vector<2x16xf32>, vector<16x128xf32>, vector<2x128xf32> -> vector<2x128xf32>
    %17 = arith.addf %15, %16 : vector<2x128xf32>
    %cst_29 = arith.constant dense<0.000000e+00> : vector<2x128xf32>
    %18 = tpu.matmul %11, %4, %cst_29 {dimension_numbers = #tpu.dot_dimension_numbers<[1], [0], [0], [1], [0, 0, 1, 1], [], []>} : vector<2x32xf32>, vector<32x128xf32>, vector<2x128xf32> -> vector<2x128xf32>
    %19 = arith.addf %17, %18 : vector<2x128xf32>
    %20 = vector.broadcast %5 : vector<1x128xf32> to vector<2x128xf32>
    %21 = arith.addf %19, %20 : vector<2x128xf32>
    %22 = vector.extract_strided_slice %21 {offsets = [0, 0], sizes = [2, 32], strides = [1, 1]} : vector<2x128xf32> to vector<2x32xf32>
    %23 = arith.negf %22 : vector<2x32xf32>
    %24 = math.exp %23 : vector<2x32xf32>
    %cst_30 = arith.constant 1.000000e+00 : f32
    %25 = vector.broadcast %cst_30 : f32 to vector<2x32xf32>
    %26 = arith.addf %25, %24 : vector<2x32xf32>
    %27 = arith.divf %25, %26 : vector<2x32xf32>
    %28 = vector.extract_strided_slice %21 {offsets = [0, 32], sizes = [2, 32], strides = [1, 1]} : vector<2x128xf32> to vector<2x32xf32>
    %29 = arith.negf %28 : vector<2x32xf32>
    %30 = math.exp %29 : vector<2x32xf32>
    %cst_31 = arith.constant 1.000000e+00 : f32
    %31 = vector.broadcast %cst_31 : f32 to vector<2x32xf32>
    %32 = arith.addf %31, %30 : vector<2x32xf32>
    %33 = arith.divf %31, %32 : vector<2x32xf32>
    %34 = vector.extract_strided_slice %21 {offsets = [0, 64], sizes = [2, 32], strides = [1, 1]} : vector<2x128xf32> to vector<2x32xf32>
    %35 = math.tanh %34 : vector<2x32xf32>
    %36 = vector.extract_strided_slice %21 {offsets = [0, 96], sizes = [2, 32], strides = [1, 1]} : vector<2x128xf32> to vector<2x32xf32>
    %37 = arith.negf %36 : vector<2x32xf32>
    %38 = math.exp %37 : vector<2x32xf32>
    %cst_32 = arith.constant 1.000000e+00 : f32
    %39 = vector.broadcast %cst_32 : f32 to vector<2x32xf32>
    %40 = arith.addf %39, %38 : vector<2x32xf32>
    %41 = arith.divf %39, %40 : vector<2x32xf32>
    %42 = arith.mulf %33, %12 : vector<2x32xf32>
    %43 = arith.mulf %27, %35 : vector<2x32xf32>
    %44 = arith.addf %42, %43 : vector<2x32xf32>
    %45 = math.tanh %44 : vector<2x32xf32>
    %46 = arith.mulf %41, %45 : vector<2x32xf32>
    %cst_33 = arith.constant dense<0.000000e+00> : vector<2x53xf32>
    %47 = tpu.matmul %46, %6, %cst_33 {dimension_numbers = #tpu.dot_dimension_numbers<[1], [0], [0], [1], [0, 0, 1, 1], [], []>} : vector<2x32xf32>, vector<32x53xf32>, vector<2x53xf32> -> vector<2x53xf32>
    %48 = vector.broadcast %7 : vector<1x53xf32> to vector<2x53xf32>
    %49 = arith.addf %47, %48 : vector<2x53xf32>
    %50 = vector.extract_strided_slice %49 {offsets = [0, 27], sizes = [2, 17], strides = [1, 1]} : vector<2x53xf32> to vector<2x17xf32>
    %51 = arith.negf %50 : vector<2x17xf32>
    %52 = math.exp %51 : vector<2x17xf32>
    %cst_34 = arith.constant 1.000000e+00 : f32
    %53 = vector.broadcast %cst_34 : f32 to vector<2x17xf32>
    %54 = arith.addf %53, %52 : vector<2x17xf32>
    %55 = arith.divf %53, %54 : vector<2x17xf32>
    %56 = vector.extract_strided_slice %55 {offsets = [0, 0], sizes = [2, 8], strides = [1, 1]} : vector<2x17xf32> to vector<2x8xf32>
    %57 = vector.extract_strided_slice %55 {offsets = [0, 8], sizes = [2, 8], strides = [1, 1]} : vector<2x17xf32> to vector<2x8xf32>
    %58 = vector.extract_strided_slice %55 {offsets = [0, 16], sizes = [2, 1], strides = [1, 1]} : vector<2x17xf32> to vector<2x1xf32>
    %59 = arith.mulf %14, %14 : vector<2x16x8xf32>
    %cst_35 = arith.constant dense<0.000000e+00> : vector<2x16xf32>
    %60 = vector.multi_reduction <add>, %59, %cst_35 [2] : vector<2x16x8xf32> to vector<2x16xf32>
    %61 = vector.shape_cast %60 : vector<2x16xf32> to vector<2x16x1xf32>
    %cst_36 = arith.constant 9.99999997E-7 : f32
    %62 = vector.broadcast %cst_36 : f32 to vector<2x16x1xf32>
    %63 = arith.addf %61, %62 : vector<2x16x1xf32>
    %64 = math.rsqrt %63 : vector<2x16x1xf32>
    %65 = vector.broadcast %64 : vector<2x16x1xf32> to vector<2x16x8xf32>
    %66 = arith.mulf %14, %65 : vector<2x16x8xf32>
    %67 = vector.extract_strided_slice %49 {offsets = [0, 18], sizes = [2, 8], strides = [1, 1]} : vector<2x53xf32> to vector<2x8xf32>
    %68 = arith.mulf %67, %67 : vector<2x8xf32>
    %cst_37 = arith.constant dense<0.000000e+00> : vector<2xf32>
    %69 = vector.multi_reduction <add>, %68, %cst_37 [1] : vector<2x8xf32> to vector<2xf32>
    %70 = vector.shape_cast %69 : vector<2xf32> to vector<2x1xf32>
    %cst_38 = arith.constant 9.99999997E-7 : f32
    %71 = vector.broadcast %cst_38 : f32 to vector<2x1xf32>
    %72 = arith.addf %70, %71 : vector<2x1xf32>
    %73 = math.rsqrt %72 : vector<2x1xf32>
    %74 = vector.broadcast %73 : vector<2x1xf32> to vector<2x8xf32>
    %75 = arith.mulf %67, %74 : vector<2x8xf32>
    %76 = vector.shape_cast %75 : vector<2x8xf32> to vector<2x1x8xf32>
    "tpu.trace_start"() <{level = 10 : i32, message = "bqw,bnw->bqn"}> : () -> ()
    %cst_39 = arith.constant dense<0.000000e+00> : vector<2x1x16xf32>
    %77 = tpu.matmul %76, %66, %cst_39 {dimension_numbers = #tpu.dot_dimension_numbers<[2], [2], [1], [1], [0, 0, 0, 1, 1, 1], [0], [0]>} : vector<2x1x8xf32>, vector<2x16x8xf32>, vector<2x1x16xf32> -> vector<2x1x16xf32>
    "tpu.trace_stop"() : () -> ()
    %78 = vector.shape_cast %77 : vector<2x1x16xf32> to vector<2x16xf32>
    %79 = vector.extract_strided_slice %49 {offsets = [0, 26], sizes = [2, 1], strides = [1, 1]} : vector<2x53xf32> to vector<2x1xf32>
    %cst_40 = arith.constant 0.000000e+00 : f32
    %80 = vector.broadcast %cst_40 : f32 to vector<2x1xf32>
    %81 = arith.maximumf %79, %80 : vector<2x1xf32>
    %82 = math.absf %79 : vector<2x1xf32>
    %cst_41 = arith.constant 0.000000e+00 : f32
    %83 = vector.broadcast %cst_41 : f32 to vector<2x1xf32>
    %84 = arith.subf %83, %82 : vector<2x1xf32>
    %85 = math.exp %84 : vector<2x1xf32>
    %cst_42 = arith.constant 1.000000e+00 : f32
    %86 = vector.broadcast %cst_42 : f32 to vector<2x1xf32>
    %87 = arith.addf %86, %85 : vector<2x1xf32>
    %88 = math.log %87 : vector<2x1xf32>
    %89 = arith.addf %81, %88 : vector<2x1xf32>
    %cst_43 = arith.constant 1.000000e+00 : f32
    %90 = vector.broadcast %cst_43 : f32 to vector<2x1xf32>
    %91 = arith.addf %90, %89 : vector<2x1xf32>
    %92 = vector.broadcast %91 : vector<2x1xf32> to vector<2x16xf32>
    %93 = arith.mulf %92, %78 : vector<2x16xf32>
    %cst_44 = arith.constant dense<0xFF800000> : vector<2xf32>
    %94 = vector.multi_reduction <maximumf>, %93, %cst_44 [1] : vector<2x16xf32> to vector<2xf32>
    %95 = vector.shape_cast %94 : vector<2xf32> to vector<2x1xf32>
    %96 = vector.broadcast %95 : vector<2x1xf32> to vector<2x16xf32>
    %97 = arith.subf %93, %96 : vector<2x16xf32>
    %98 = math.exp %97 : vector<2x16xf32>
    %cst_45 = arith.constant dense<0.000000e+00> : vector<2xf32>
    %99 = vector.multi_reduction <add>, %98, %cst_45 [1] : vector<2x16xf32> to vector<2xf32>
    %100 = vector.shape_cast %99 : vector<2xf32> to vector<2x1xf32>
    %101 = vector.broadcast %100 : vector<2x1xf32> to vector<2x16xf32>
    %102 = arith.divf %98, %101 : vector<2x16xf32>
    %103 = vector.broadcast %58 : vector<2x1xf32> to vector<2x16xf32>
    %104 = arith.mulf %103, %102 : vector<2x16xf32>
    %105 = vector.shape_cast %104 : vector<2x16xf32> to vector<2x16x1xf32>
    %106 = vector.shape_cast %56 : vector<2x8xf32> to vector<2x1x8xf32>
    %107 = vector.broadcast %105 : vector<2x16x1xf32> to vector<2x16x8xf32>
    %108 = vector.broadcast %106 : vector<2x1x8xf32> to vector<2x16x8xf32>
    %109 = arith.mulf %107, %108 : vector<2x16x8xf32>
    %cst_46 = arith.constant 1.000000e+00 : f32
    %110 = vector.broadcast %cst_46 : f32 to vector<2x16x8xf32>
    %111 = arith.subf %110, %109 : vector<2x16x8xf32>
    %112 = arith.mulf %14, %111 : vector<2x16x8xf32>
    %113 = vector.shape_cast %104 : vector<2x16xf32> to vector<2x16x1xf32>
    %114 = vector.shape_cast %57 : vector<2x8xf32> to vector<2x1x8xf32>
    %115 = vector.broadcast %113 : vector<2x16x1xf32> to vector<2x16x8xf32>
    %116 = vector.broadcast %114 : vector<2x1x8xf32> to vector<2x16x8xf32>
    %117 = arith.mulf %115, %116 : vector<2x16x8xf32>
    %118 = arith.addf %112, %117 : vector<2x16x8xf32>
    %119 = arith.mulf %118, %118 : vector<2x16x8xf32>
    %cst_47 = arith.constant dense<0.000000e+00> : vector<2x16xf32>
    %120 = vector.multi_reduction <add>, %119, %cst_47 [2] : vector<2x16x8xf32> to vector<2x16xf32>
    %121 = vector.shape_cast %120 : vector<2x16xf32> to vector<2x16x1xf32>
    %cst_48 = arith.constant 9.99999997E-7 : f32
    %122 = vector.broadcast %cst_48 : f32 to vector<2x16x1xf32>
    %123 = arith.addf %121, %122 : vector<2x16x1xf32>
    %124 = math.rsqrt %123 : vector<2x16x1xf32>
    %125 = vector.broadcast %124 : vector<2x16x1xf32> to vector<2x16x8xf32>
    %126 = arith.mulf %118, %125 : vector<2x16x8xf32>
    %127 = vector.extract_strided_slice %49 {offsets = [0, 0], sizes = [2, 8], strides = [1, 1]} : vector<2x53xf32> to vector<2x8xf32>
    %128 = vector.shape_cast %127 : vector<2x8xf32> to vector<2x1x8xf32>
    %129 = vector.extract_strided_slice %49 {offsets = [0, 8], sizes = [2, 8], strides = [1, 1]} : vector<2x53xf32> to vector<2x8xf32>
    %130 = vector.shape_cast %129 : vector<2x8xf32> to vector<2x1x8xf32>
    %131 = tpu.concatenate %128, %130 in 1 : vector<2x1x8xf32>, vector<2x1x8xf32> -> vector<2x2x8xf32>
    %132 = arith.mulf %131, %131 : vector<2x2x8xf32>
    %cst_49 = arith.constant dense<0.000000e+00> : vector<2x2xf32>
    %133 = vector.multi_reduction <add>, %132, %cst_49 [2] : vector<2x2x8xf32> to vector<2x2xf32>
    %134 = vector.shape_cast %133 : vector<2x2xf32> to vector<2x2x1xf32>
    %cst_50 = arith.constant 9.99999997E-7 : f32
    %135 = vector.broadcast %cst_50 : f32 to vector<2x2x1xf32>
    %136 = arith.addf %134, %135 : vector<2x2x1xf32>
    %137 = math.rsqrt %136 : vector<2x2x1xf32>
    %138 = vector.broadcast %137 : vector<2x2x1xf32> to vector<2x2x8xf32>
    %139 = arith.mulf %131, %138 : vector<2x2x8xf32>
    "tpu.trace_start"() <{level = 10 : i32, message = "brw,bnw->brn"}> : () -> ()
    %cst_51 = arith.constant dense<0.000000e+00> : vector<2x2x16xf32>
    %140 = tpu.matmul %139, %126, %cst_51 {dimension_numbers = #tpu.dot_dimension_numbers<[2], [2], [1], [1], [0, 0, 0, 1, 1, 1], [0], [0]>} : vector<2x2x8xf32>, vector<2x16x8xf32>, vector<2x2x16xf32> -> vector<2x2x16xf32>
    "tpu.trace_stop"() : () -> ()
    %141 = vector.extract_strided_slice %49 {offsets = [0, 16], sizes = [2, 2], strides = [1, 1]} : vector<2x53xf32> to vector<2x2xf32>
    %cst_52 = arith.constant 0.000000e+00 : f32
    %142 = vector.broadcast %cst_52 : f32 to vector<2x2xf32>
    %143 = arith.maximumf %141, %142 : vector<2x2xf32>
    %144 = math.absf %141 : vector<2x2xf32>
    %cst_53 = arith.constant 0.000000e+00 : f32
    %145 = vector.broadcast %cst_53 : f32 to vector<2x2xf32>
    %146 = arith.subf %145, %144 : vector<2x2xf32>
    %147 = math.exp %146 : vector<2x2xf32>
    %cst_54 = arith.constant 1.000000e+00 : f32
    %148 = vector.broadcast %cst_54 : f32 to vector<2x2xf32>
    %149 = arith.addf %148, %147 : vector<2x2xf32>
    %150 = math.log %149 : vector<2x2xf32>
    %151 = arith.addf %143, %150 : vector<2x2xf32>
    %cst_55 = arith.constant 1.000000e+00 : f32
    %152 = vector.broadcast %cst_55 : f32 to vector<2x2xf32>
    %153 = arith.addf %152, %151 : vector<2x2xf32>
    %154 = vector.shape_cast %153 : vector<2x2xf32> to vector<2x2x1xf32>
    %155 = vector.broadcast %154 : vector<2x2x1xf32> to vector<2x2x16xf32>
    %156 = arith.mulf %155, %140 : vector<2x2x16xf32>
    %cst_56 = arith.constant dense<0xFF800000> : vector<2x2xf32>
    %157 = vector.multi_reduction <maximumf>, %156, %cst_56 [2] : vector<2x2x16xf32> to vector<2x2xf32>
    %158 = vector.shape_cast %157 : vector<2x2xf32> to vector<2x2x1xf32>
    %159 = vector.broadcast %158 : vector<2x2x1xf32> to vector<2x2x16xf32>
    %160 = arith.subf %156, %159 : vector<2x2x16xf32>
    %161 = math.exp %160 : vector<2x2x16xf32>
    %cst_57 = arith.constant dense<0.000000e+00> : vector<2x2xf32>
    %162 = vector.multi_reduction <add>, %161, %cst_57 [2] : vector<2x2x16xf32> to vector<2x2xf32>
    %163 = vector.shape_cast %162 : vector<2x2xf32> to vector<2x2x1xf32>
    %164 = vector.broadcast %163 : vector<2x2x1xf32> to vector<2x2x16xf32>
    %165 = arith.divf %161, %164 : vector<2x2x16xf32>
    "tpu.trace_start"() <{level = 10 : i32, message = "brn,bnw->brw"}> : () -> ()
    %cst_58 = arith.constant dense<0.000000e+00> : vector<2x2x8xf32>
    %166 = tpu.matmul %165, %118, %cst_58 {dimension_numbers = #tpu.dot_dimension_numbers<[2], [1], [1], [2], [0, 0, 0, 1, 1, 2], [0], [0]>} : vector<2x2x16xf32>, vector<2x16x8xf32>, vector<2x2x8xf32> -> vector<2x2x8xf32>
    "tpu.trace_stop"() : () -> ()
    %167 = vector.extract_strided_slice %166 {offsets = [0, 0, 0], sizes = [2, 1, 8], strides = [1, 1, 1]} : vector<2x2x8xf32> to vector<2x1x8xf32>
    %168 = vector.shape_cast %167 : vector<2x1x8xf32> to vector<2x8xf32>
    %169 = vector.extract_strided_slice %166 {offsets = [0, 1, 0], sizes = [2, 1, 8], strides = [1, 1, 1]} : vector<2x2x8xf32> to vector<2x1x8xf32>
    %170 = vector.shape_cast %169 : vector<2x1x8xf32> to vector<2x8xf32>
    %171 = tpu.concatenate %168, %170 in 1 : vector<2x8xf32>, vector<2x8xf32> -> vector<2x16xf32>
    %cst_59 = arith.constant dense<0.000000e+00> : vector<2x8xf32>
    %172 = tpu.matmul %46, %8, %cst_59 {dimension_numbers = #tpu.dot_dimension_numbers<[1], [0], [0], [1], [0, 0, 1, 1], [], []>} : vector<2x32xf32>, vector<32x8xf32>, vector<2x8xf32> -> vector<2x8xf32>
    %cst_60 = arith.constant dense<0.000000e+00> : vector<2x8xf32>
    %173 = tpu.matmul %171, %9, %cst_60 {dimension_numbers = #tpu.dot_dimension_numbers<[1], [0], [0], [1], [0, 0, 1, 1], [], []>} : vector<2x16xf32>, vector<16x8xf32>, vector<2x8xf32> -> vector<2x8xf32>
    %174 = arith.addf %172, %173 : vector<2x8xf32>
    %175 = vector.broadcast %10 : vector<1x8xf32> to vector<2x8xf32>
    %176 = arith.addf %174, %175 : vector<2x8xf32>
    %c0_61 = arith.constant 0 : index
    %c0_62 = arith.constant 0 : index
    %c0_63 = arith.constant 0 : index
    %177 = vector.load %arg14[%c0_61, %c0_62, %c0_63] : memref<4x2x8xf32, #tpu.memory_space<vmem>>, vector<1x2x8xf32>
    %178 = vector.shape_cast %177 : vector<1x2x8xf32> to vector<2x8xf32>
    %179 = vector.shape_cast %176 : vector<2x8xf32> to vector<1x2x8xf32>
    tpu.vector_store %arg14[%c0_61, %c0_62, %c0_63], %179 {strides = array<i32>} : memref<4x2x8xf32, #tpu.memory_space<vmem>>, vector<1x2x8xf32>,
    %180 = vector.extract_strided_slice %2 {offsets = [2, 0], sizes = [2, 128], strides = [1, 1]} : vector<8x128xf32> to vector<2x128xf32>
    %cst_64 = arith.constant dense<0.000000e+00> : vector<2x128xf32>
    %181 = tpu.matmul %171, %3, %cst_64 {dimension_numbers = #tpu.dot_dimension_numbers<[1], [0], [0], [1], [0, 0, 1, 1], [], []>} : vector<2x16xf32>, vector<16x128xf32>, vector<2x128xf32> -> vector<2x128xf32>
    %182 = arith.addf %180, %181 : vector<2x128xf32>
    %cst_65 = arith.constant dense<0.000000e+00> : vector<2x128xf32>
    %183 = tpu.matmul %46, %4, %cst_65 {dimension_numbers = #tpu.dot_dimension_numbers<[1], [0], [0], [1], [0, 0, 1, 1], [], []>} : vector<2x32xf32>, vector<32x128xf32>, vector<2x128xf32> -> vector<2x128xf32>
    %184 = arith.addf %182, %183 : vector<2x128xf32>
    %185 = vector.broadcast %5 : vector<1x128xf32> to vector<2x128xf32>
    %186 = arith.addf %184, %185 : vector<2x128xf32>
    %187 = vector.extract_strided_slice %186 {offsets = [0, 0], sizes = [2, 32], strides = [1, 1]} : vector<2x128xf32> to vector<2x32xf32>
    %188 = arith.negf %187 : vector<2x32xf32>
    %189 = math.exp %188 : vector<2x32xf32>
    %cst_66 = arith.constant 1.000000e+00 : f32
    %190 = vector.broadcast %cst_66 : f32 to vector<2x32xf32>
    %191 = arith.addf %190, %189 : vector<2x32xf32>
    %192 = arith.divf %190, %191 : vector<2x32xf32>
    %193 = vector.extract_strided_slice %186 {offsets = [0, 32], sizes = [2, 32], strides = [1, 1]} : vector<2x128xf32> to vector<2x32xf32>
    %194 = arith.negf %193 : vector<2x32xf32>
    %195 = math.exp %194 : vector<2x32xf32>
    %cst_67 = arith.constant 1.000000e+00 : f32
    %196 = vector.broadcast %cst_67 : f32 to vector<2x32xf32>
    %197 = arith.addf %196, %195 : vector<2x32xf32>
    %198 = arith.divf %196, %197 : vector<2x32xf32>
    %199 = vector.extract_strided_slice %186 {offsets = [0, 64], sizes = [2, 32], strides = [1, 1]} : vector<2x128xf32> to vector<2x32xf32>
    %200 = math.tanh %199 : vector<2x32xf32>
    %201 = vector.extract_strided_slice %186 {offsets = [0, 96], sizes = [2, 32], strides = [1, 1]} : vector<2x128xf32> to vector<2x32xf32>
    %202 = arith.negf %201 : vector<2x32xf32>
    %203 = math.exp %202 : vector<2x32xf32>
    %cst_68 = arith.constant 1.000000e+00 : f32
    %204 = vector.broadcast %cst_68 : f32 to vector<2x32xf32>
    %205 = arith.addf %204, %203 : vector<2x32xf32>
    %206 = arith.divf %204, %205 : vector<2x32xf32>
    %207 = arith.mulf %198, %44 : vector<2x32xf32>
    %208 = arith.mulf %192, %200 : vector<2x32xf32>
    %209 = arith.addf %207, %208 : vector<2x32xf32>
    %210 = math.tanh %209 : vector<2x32xf32>
    %211 = arith.mulf %206, %210 : vector<2x32xf32>
    %cst_69 = arith.constant dense<0.000000e+00> : vector<2x53xf32>
    %212 = tpu.matmul %211, %6, %cst_69 {dimension_numbers = #tpu.dot_dimension_numbers<[1], [0], [0], [1], [0, 0, 1, 1], [], []>} : vector<2x32xf32>, vector<32x53xf32>, vector<2x53xf32> -> vector<2x53xf32>
    %213 = vector.broadcast %7 : vector<1x53xf32> to vector<2x53xf32>
    %214 = arith.addf %212, %213 : vector<2x53xf32>
    %215 = vector.extract_strided_slice %214 {offsets = [0, 27], sizes = [2, 17], strides = [1, 1]} : vector<2x53xf32> to vector<2x17xf32>
    %216 = arith.negf %215 : vector<2x17xf32>
    %217 = math.exp %216 : vector<2x17xf32>
    %cst_70 = arith.constant 1.000000e+00 : f32
    %218 = vector.broadcast %cst_70 : f32 to vector<2x17xf32>
    %219 = arith.addf %218, %217 : vector<2x17xf32>
    %220 = arith.divf %218, %219 : vector<2x17xf32>
    %221 = vector.extract_strided_slice %220 {offsets = [0, 0], sizes = [2, 8], strides = [1, 1]} : vector<2x17xf32> to vector<2x8xf32>
    %222 = vector.extract_strided_slice %220 {offsets = [0, 8], sizes = [2, 8], strides = [1, 1]} : vector<2x17xf32> to vector<2x8xf32>
    %223 = vector.extract_strided_slice %220 {offsets = [0, 16], sizes = [2, 1], strides = [1, 1]} : vector<2x17xf32> to vector<2x1xf32>
    %224 = arith.mulf %118, %118 : vector<2x16x8xf32>
    %cst_71 = arith.constant dense<0.000000e+00> : vector<2x16xf32>
    %225 = vector.multi_reduction <add>, %224, %cst_71 [2] : vector<2x16x8xf32> to vector<2x16xf32>
    %226 = vector.shape_cast %225 : vector<2x16xf32> to vector<2x16x1xf32>
    %cst_72 = arith.constant 9.99999997E-7 : f32
    %227 = vector.broadcast %cst_72 : f32 to vector<2x16x1xf32>
    %228 = arith.addf %226, %227 : vector<2x16x1xf32>
    %229 = math.rsqrt %228 : vector<2x16x1xf32>
    %230 = vector.broadcast %229 : vector<2x16x1xf32> to vector<2x16x8xf32>
    %231 = arith.mulf %118, %230 : vector<2x16x8xf32>
    %232 = vector.extract_strided_slice %214 {offsets = [0, 18], sizes = [2, 8], strides = [1, 1]} : vector<2x53xf32> to vector<2x8xf32>
    %233 = arith.mulf %232, %232 : vector<2x8xf32>
    %cst_73 = arith.constant dense<0.000000e+00> : vector<2xf32>
    %234 = vector.multi_reduction <add>, %233, %cst_73 [1] : vector<2x8xf32> to vector<2xf32>
    %235 = vector.shape_cast %234 : vector<2xf32> to vector<2x1xf32>
    %cst_74 = arith.constant 9.99999997E-7 : f32
    %236 = vector.broadcast %cst_74 : f32 to vector<2x1xf32>
    %237 = arith.addf %235, %236 : vector<2x1xf32>
    %238 = math.rsqrt %237 : vector<2x1xf32>
    %239 = vector.broadcast %238 : vector<2x1xf32> to vector<2x8xf32>
    %240 = arith.mulf %232, %239 : vector<2x8xf32>
    %241 = vector.shape_cast %240 : vector<2x8xf32> to vector<2x1x8xf32>
    "tpu.trace_start"() <{level = 10 : i32, message = "bqw,bnw->bqn"}> : () -> ()
    %cst_75 = arith.constant dense<0.000000e+00> : vector<2x1x16xf32>
    %242 = tpu.matmul %241, %231, %cst_75 {dimension_numbers = #tpu.dot_dimension_numbers<[2], [2], [1], [1], [0, 0, 0, 1, 1, 1], [0], [0]>} : vector<2x1x8xf32>, vector<2x16x8xf32>, vector<2x1x16xf32> -> vector<2x1x16xf32>
    "tpu.trace_stop"() : () -> ()
    %243 = vector.shape_cast %242 : vector<2x1x16xf32> to vector<2x16xf32>
    %244 = vector.extract_strided_slice %214 {offsets = [0, 26], sizes = [2, 1], strides = [1, 1]} : vector<2x53xf32> to vector<2x1xf32>
    %cst_76 = arith.constant 0.000000e+00 : f32
    %245 = vector.broadcast %cst_76 : f32 to vector<2x1xf32>
    %246 = arith.maximumf %244, %245 : vector<2x1xf32>
    %247 = math.absf %244 : vector<2x1xf32>
    %cst_77 = arith.constant 0.000000e+00 : f32
    %248 = vector.broadcast %cst_77 : f32 to vector<2x1xf32>
    %249 = arith.subf %248, %247 : vector<2x1xf32>
    %250 = math.exp %249 : vector<2x1xf32>
    %cst_78 = arith.constant 1.000000e+00 : f32
    %251 = vector.broadcast %cst_78 : f32 to vector<2x1xf32>
    %252 = arith.addf %251, %250 : vector<2x1xf32>
    %253 = math.log %252 : vector<2x1xf32>
    %254 = arith.addf %246, %253 : vector<2x1xf32>
    %cst_79 = arith.constant 1.000000e+00 : f32
    %255 = vector.broadcast %cst_79 : f32 to vector<2x1xf32>
    %256 = arith.addf %255, %254 : vector<2x1xf32>
    %257 = vector.broadcast %256 : vector<2x1xf32> to vector<2x16xf32>
    %258 = arith.mulf %257, %243 : vector<2x16xf32>
    %cst_80 = arith.constant dense<0xFF800000> : vector<2xf32>
    %259 = vector.multi_reduction <maximumf>, %258, %cst_80 [1] : vector<2x16xf32> to vector<2xf32>
    %260 = vector.shape_cast %259 : vector<2xf32> to vector<2x1xf32>
    %261 = vector.broadcast %260 : vector<2x1xf32> to vector<2x16xf32>
    %262 = arith.subf %258, %261 : vector<2x16xf32>
    %263 = math.exp %262 : vector<2x16xf32>
    %cst_81 = arith.constant dense<0.000000e+00> : vector<2xf32>
    %264 = vector.multi_reduction <add>, %263, %cst_81 [1] : vector<2x16xf32> to vector<2xf32>
    %265 = vector.shape_cast %264 : vector<2xf32> to vector<2x1xf32>
    %266 = vector.broadcast %265 : vector<2x1xf32> to vector<2x16xf32>
    %267 = arith.divf %263, %266 : vector<2x16xf32>
    %268 = vector.broadcast %223 : vector<2x1xf32> to vector<2x16xf32>
    %269 = arith.mulf %268, %267 : vector<2x16xf32>
    %270 = vector.shape_cast %269 : vector<2x16xf32> to vector<2x16x1xf32>
    %271 = vector.shape_cast %221 : vector<2x8xf32> to vector<2x1x8xf32>
    %272 = vector.broadcast %270 : vector<2x16x1xf32> to vector<2x16x8xf32>
    %273 = vector.broadcast %271 : vector<2x1x8xf32> to vector<2x16x8xf32>
    %274 = arith.mulf %272, %273 : vector<2x16x8xf32>
    %cst_82 = arith.constant 1.000000e+00 : f32
    %275 = vector.broadcast %cst_82 : f32 to vector<2x16x8xf32>
    %276 = arith.subf %275, %274 : vector<2x16x8xf32>
    %277 = arith.mulf %118, %276 : vector<2x16x8xf32>
    %278 = vector.shape_cast %269 : vector<2x16xf32> to vector<2x16x1xf32>
    %279 = vector.shape_cast %222 : vector<2x8xf32> to vector<2x1x8xf32>
    %280 = vector.broadcast %278 : vector<2x16x1xf32> to vector<2x16x8xf32>
    %281 = vector.broadcast %279 : vector<2x1x8xf32> to vector<2x16x8xf32>
    %282 = arith.mulf %280, %281 : vector<2x16x8xf32>
    %283 = arith.addf %277, %282 : vector<2x16x8xf32>
    %284 = arith.mulf %283, %283 : vector<2x16x8xf32>
    %cst_83 = arith.constant dense<0.000000e+00> : vector<2x16xf32>
    %285 = vector.multi_reduction <add>, %284, %cst_83 [2] : vector<2x16x8xf32> to vector<2x16xf32>
    %286 = vector.shape_cast %285 : vector<2x16xf32> to vector<2x16x1xf32>
    %cst_84 = arith.constant 9.99999997E-7 : f32
    %287 = vector.broadcast %cst_84 : f32 to vector<2x16x1xf32>
    %288 = arith.addf %286, %287 : vector<2x16x1xf32>
    %289 = math.rsqrt %288 : vector<2x16x1xf32>
    %290 = vector.broadcast %289 : vector<2x16x1xf32> to vector<2x16x8xf32>
    %291 = arith.mulf %283, %290 : vector<2x16x8xf32>
    %292 = vector.extract_strided_slice %214 {offsets = [0, 0], sizes = [2, 8], strides = [1, 1]} : vector<2x53xf32> to vector<2x8xf32>
    %293 = vector.shape_cast %292 : vector<2x8xf32> to vector<2x1x8xf32>
    %294 = vector.extract_strided_slice %214 {offsets = [0, 8], sizes = [2, 8], strides = [1, 1]} : vector<2x53xf32> to vector<2x8xf32>
    %295 = vector.shape_cast %294 : vector<2x8xf32> to vector<2x1x8xf32>
    %296 = tpu.concatenate %293, %295 in 1 : vector<2x1x8xf32>, vector<2x1x8xf32> -> vector<2x2x8xf32>
    %297 = arith.mulf %296, %296 : vector<2x2x8xf32>
    %cst_85 = arith.constant dense<0.000000e+00> : vector<2x2xf32>
    %298 = vector.multi_reduction <add>, %297, %cst_85 [2] : vector<2x2x8xf32> to vector<2x2xf32>
    %299 = vector.shape_cast %298 : vector<2x2xf32> to vector<2x2x1xf32>
    %cst_86 = arith.constant 9.99999997E-7 : f32
    %300 = vector.broadcast %cst_86 : f32 to vector<2x2x1xf32>
    %301 = arith.addf %299, %300 : vector<2x2x1xf32>
    %302 = math.rsqrt %301 : vector<2x2x1xf32>
    %303 = vector.broadcast %302 : vector<2x2x1xf32> to vector<2x2x8xf32>
    %304 = arith.mulf %296, %303 : vector<2x2x8xf32>
    "tpu.trace_start"() <{level = 10 : i32, message = "brw,bnw->brn"}> : () -> ()
    %cst_87 = arith.constant dense<0.000000e+00> : vector<2x2x16xf32>
    %305 = tpu.matmul %304, %291, %cst_87 {dimension_numbers = #tpu.dot_dimension_numbers<[2], [2], [1], [1], [0, 0, 0, 1, 1, 1], [0], [0]>} : vector<2x2x8xf32>, vector<2x16x8xf32>, vector<2x2x16xf32> -> vector<2x2x16xf32>
    "tpu.trace_stop"() : () -> ()
    %306 = vector.extract_strided_slice %214 {offsets = [0, 16], sizes = [2, 2], strides = [1, 1]} : vector<2x53xf32> to vector<2x2xf32>
    %cst_88 = arith.constant 0.000000e+00 : f32
    %307 = vector.broadcast %cst_88 : f32 to vector<2x2xf32>
    %308 = arith.maximumf %306, %307 : vector<2x2xf32>
    %309 = math.absf %306 : vector<2x2xf32>
    %cst_89 = arith.constant 0.000000e+00 : f32
    %310 = vector.broadcast %cst_89 : f32 to vector<2x2xf32>
    %311 = arith.subf %310, %309 : vector<2x2xf32>
    %312 = math.exp %311 : vector<2x2xf32>
    %cst_90 = arith.constant 1.000000e+00 : f32
    %313 = vector.broadcast %cst_90 : f32 to vector<2x2xf32>
    %314 = arith.addf %313, %312 : vector<2x2xf32>
    %315 = math.log %314 : vector<2x2xf32>
    %316 = arith.addf %308, %315 : vector<2x2xf32>
    %cst_91 = arith.constant 1.000000e+00 : f32
    %317 = vector.broadcast %cst_91 : f32 to vector<2x2xf32>
    %318 = arith.addf %317, %316 : vector<2x2xf32>
    %319 = vector.shape_cast %318 : vector<2x2xf32> to vector<2x2x1xf32>
    %320 = vector.broadcast %319 : vector<2x2x1xf32> to vector<2x2x16xf32>
    %321 = arith.mulf %320, %305 : vector<2x2x16xf32>
    %cst_92 = arith.constant dense<0xFF800000> : vector<2x2xf32>
    %322 = vector.multi_reduction <maximumf>, %321, %cst_92 [2] : vector<2x2x16xf32> to vector<2x2xf32>
    %323 = vector.shape_cast %322 : vector<2x2xf32> to vector<2x2x1xf32>
    %324 = vector.broadcast %323 : vector<2x2x1xf32> to vector<2x2x16xf32>
    %325 = arith.subf %321, %324 : vector<2x2x16xf32>
    %326 = math.exp %325 : vector<2x2x16xf32>
    %cst_93 = arith.constant dense<0.000000e+00> : vector<2x2xf32>
    %327 = vector.multi_reduction <add>, %326, %cst_93 [2] : vector<2x2x16xf32> to vector<2x2xf32>
    %328 = vector.shape_cast %327 : vector<2x2xf32> to vector<2x2x1xf32>
    %329 = vector.broadcast %328 : vector<2x2x1xf32> to vector<2x2x16xf32>
    %330 = arith.divf %326, %329 : vector<2x2x16xf32>
    "tpu.trace_start"() <{level = 10 : i32, message = "brn,bnw->brw"}> : () -> ()
    %cst_94 = arith.constant dense<0.000000e+00> : vector<2x2x8xf32>
    %331 = tpu.matmul %330, %283, %cst_94 {dimension_numbers = #tpu.dot_dimension_numbers<[2], [1], [1], [2], [0, 0, 0, 1, 1, 2], [0], [0]>} : vector<2x2x16xf32>, vector<2x16x8xf32>, vector<2x2x8xf32> -> vector<2x2x8xf32>
    "tpu.trace_stop"() : () -> ()
    %332 = vector.extract_strided_slice %331 {offsets = [0, 0, 0], sizes = [2, 1, 8], strides = [1, 1, 1]} : vector<2x2x8xf32> to vector<2x1x8xf32>
    %333 = vector.shape_cast %332 : vector<2x1x8xf32> to vector<2x8xf32>
    %334 = vector.extract_strided_slice %331 {offsets = [0, 1, 0], sizes = [2, 1, 8], strides = [1, 1, 1]} : vector<2x2x8xf32> to vector<2x1x8xf32>
    %335 = vector.shape_cast %334 : vector<2x1x8xf32> to vector<2x8xf32>
    %336 = tpu.concatenate %333, %335 in 1 : vector<2x8xf32>, vector<2x8xf32> -> vector<2x16xf32>
    %cst_95 = arith.constant dense<0.000000e+00> : vector<2x8xf32>
    %337 = tpu.matmul %211, %8, %cst_95 {dimension_numbers = #tpu.dot_dimension_numbers<[1], [0], [0], [1], [0, 0, 1, 1], [], []>} : vector<2x32xf32>, vector<32x8xf32>, vector<2x8xf32> -> vector<2x8xf32>
    %cst_96 = arith.constant dense<0.000000e+00> : vector<2x8xf32>
    %338 = tpu.matmul %336, %9, %cst_96 {dimension_numbers = #tpu.dot_dimension_numbers<[1], [0], [0], [1], [0, 0, 1, 1], [], []>} : vector<2x16xf32>, vector<16x8xf32>, vector<2x8xf32> -> vector<2x8xf32>
    %339 = arith.addf %337, %338 : vector<2x8xf32>
    %340 = vector.broadcast %10 : vector<1x8xf32> to vector<2x8xf32>
    %341 = arith.addf %339, %340 : vector<2x8xf32>
    %c1 = arith.constant 1 : index
    %c0_97 = arith.constant 0 : index
    %c0_98 = arith.constant 0 : index
    %342 = vector.load %arg14[%c1, %c0_97, %c0_98] : memref<4x2x8xf32, #tpu.memory_space<vmem>>, vector<1x2x8xf32>
    %343 = vector.shape_cast %342 : vector<1x2x8xf32> to vector<2x8xf32>
    %344 = vector.shape_cast %341 : vector<2x8xf32> to vector<1x2x8xf32>
    tpu.vector_store %arg14[%c1, %c0_97, %c0_98], %344 {strides = array<i32>} : memref<4x2x8xf32, #tpu.memory_space<vmem>>, vector<1x2x8xf32>,
    %345 = vector.extract_strided_slice %2 {offsets = [4, 0], sizes = [2, 128], strides = [1, 1]} : vector<8x128xf32> to vector<2x128xf32>
    %cst_99 = arith.constant dense<0.000000e+00> : vector<2x128xf32>
    %346 = tpu.matmul %336, %3, %cst_99 {dimension_numbers = #tpu.dot_dimension_numbers<[1], [0], [0], [1], [0, 0, 1, 1], [], []>} : vector<2x16xf32>, vector<16x128xf32>, vector<2x128xf32> -> vector<2x128xf32>
    %347 = arith.addf %345, %346 : vector<2x128xf32>
    %cst_100 = arith.constant dense<0.000000e+00> : vector<2x128xf32>
    %348 = tpu.matmul %211, %4, %cst_100 {dimension_numbers = #tpu.dot_dimension_numbers<[1], [0], [0], [1], [0, 0, 1, 1], [], []>} : vector<2x32xf32>, vector<32x128xf32>, vector<2x128xf32> -> vector<2x128xf32>
    %349 = arith.addf %347, %348 : vector<2x128xf32>
    %350 = vector.broadcast %5 : vector<1x128xf32> to vector<2x128xf32>
    %351 = arith.addf %349, %350 : vector<2x128xf32>
    %352 = vector.extract_strided_slice %351 {offsets = [0, 0], sizes = [2, 32], strides = [1, 1]} : vector<2x128xf32> to vector<2x32xf32>
    %353 = arith.negf %352 : vector<2x32xf32>
    %354 = math.exp %353 : vector<2x32xf32>
    %cst_101 = arith.constant 1.000000e+00 : f32
    %355 = vector.broadcast %cst_101 : f32 to vector<2x32xf32>
    %356 = arith.addf %355, %354 : vector<2x32xf32>
    %357 = arith.divf %355, %356 : vector<2x32xf32>
    %358 = vector.extract_strided_slice %351 {offsets = [0, 32], sizes = [2, 32], strides = [1, 1]} : vector<2x128xf32> to vector<2x32xf32>
    %359 = arith.negf %358 : vector<2x32xf32>
    %360 = math.exp %359 : vector<2x32xf32>
    %cst_102 = arith.constant 1.000000e+00 : f32
    %361 = vector.broadcast %cst_102 : f32 to vector<2x32xf32>
    %362 = arith.addf %361, %360 : vector<2x32xf32>
    %363 = arith.divf %361, %362 : vector<2x32xf32>
    %364 = vector.extract_strided_slice %351 {offsets = [0, 64], sizes = [2, 32], strides = [1, 1]} : vector<2x128xf32> to vector<2x32xf32>
    %365 = math.tanh %364 : vector<2x32xf32>
    %366 = vector.extract_strided_slice %351 {offsets = [0, 96], sizes = [2, 32], strides = [1, 1]} : vector<2x128xf32> to vector<2x32xf32>
    %367 = arith.negf %366 : vector<2x32xf32>
    %368 = math.exp %367 : vector<2x32xf32>
    %cst_103 = arith.constant 1.000000e+00 : f32
    %369 = vector.broadcast %cst_103 : f32 to vector<2x32xf32>
    %370 = arith.addf %369, %368 : vector<2x32xf32>
    %371 = arith.divf %369, %370 : vector<2x32xf32>
    %372 = arith.mulf %363, %209 : vector<2x32xf32>
    %373 = arith.mulf %357, %365 : vector<2x32xf32>
    %374 = arith.addf %372, %373 : vector<2x32xf32>
    %375 = math.tanh %374 : vector<2x32xf32>
    %376 = arith.mulf %371, %375 : vector<2x32xf32>
    %cst_104 = arith.constant dense<0.000000e+00> : vector<2x53xf32>
    %377 = tpu.matmul %376, %6, %cst_104 {dimension_numbers = #tpu.dot_dimension_numbers<[1], [0], [0], [1], [0, 0, 1, 1], [], []>} : vector<2x32xf32>, vector<32x53xf32>, vector<2x53xf32> -> vector<2x53xf32>
    %378 = vector.broadcast %7 : vector<1x53xf32> to vector<2x53xf32>
    %379 = arith.addf %377, %378 : vector<2x53xf32>
    %380 = vector.extract_strided_slice %379 {offsets = [0, 27], sizes = [2, 17], strides = [1, 1]} : vector<2x53xf32> to vector<2x17xf32>
    %381 = arith.negf %380 : vector<2x17xf32>
    %382 = math.exp %381 : vector<2x17xf32>
    %cst_105 = arith.constant 1.000000e+00 : f32
    %383 = vector.broadcast %cst_105 : f32 to vector<2x17xf32>
    %384 = arith.addf %383, %382 : vector<2x17xf32>
    %385 = arith.divf %383, %384 : vector<2x17xf32>
    %386 = vector.extract_strided_slice %385 {offsets = [0, 0], sizes = [2, 8], strides = [1, 1]} : vector<2x17xf32> to vector<2x8xf32>
    %387 = vector.extract_strided_slice %385 {offsets = [0, 8], sizes = [2, 8], strides = [1, 1]} : vector<2x17xf32> to vector<2x8xf32>
    %388 = vector.extract_strided_slice %385 {offsets = [0, 16], sizes = [2, 1], strides = [1, 1]} : vector<2x17xf32> to vector<2x1xf32>
    %389 = arith.mulf %283, %283 : vector<2x16x8xf32>
    %cst_106 = arith.constant dense<0.000000e+00> : vector<2x16xf32>
    %390 = vector.multi_reduction <add>, %389, %cst_106 [2] : vector<2x16x8xf32> to vector<2x16xf32>
    %391 = vector.shape_cast %390 : vector<2x16xf32> to vector<2x16x1xf32>
    %cst_107 = arith.constant 9.99999997E-7 : f32
    %392 = vector.broadcast %cst_107 : f32 to vector<2x16x1xf32>
    %393 = arith.addf %391, %392 : vector<2x16x1xf32>
    %394 = math.rsqrt %393 : vector<2x16x1xf32>
    %395 = vector.broadcast %394 : vector<2x16x1xf32> to vector<2x16x8xf32>
    %396 = arith.mulf %283, %395 : vector<2x16x8xf32>
    %397 = vector.extract_strided_slice %379 {offsets = [0, 18], sizes = [2, 8], strides = [1, 1]} : vector<2x53xf32> to vector<2x8xf32>
    %398 = arith.mulf %397, %397 : vector<2x8xf32>
    %cst_108 = arith.constant dense<0.000000e+00> : vector<2xf32>
    %399 = vector.multi_reduction <add>, %398, %cst_108 [1] : vector<2x8xf32> to vector<2xf32>
    %400 = vector.shape_cast %399 : vector<2xf32> to vector<2x1xf32>
    %cst_109 = arith.constant 9.99999997E-7 : f32
    %401 = vector.broadcast %cst_109 : f32 to vector<2x1xf32>
    %402 = arith.addf %400, %401 : vector<2x1xf32>
    %403 = math.rsqrt %402 : vector<2x1xf32>
    %404 = vector.broadcast %403 : vector<2x1xf32> to vector<2x8xf32>
    %405 = arith.mulf %397, %404 : vector<2x8xf32>
    %406 = vector.shape_cast %405 : vector<2x8xf32> to vector<2x1x8xf32>
    "tpu.trace_start"() <{level = 10 : i32, message = "bqw,bnw->bqn"}> : () -> ()
    %cst_110 = arith.constant dense<0.000000e+00> : vector<2x1x16xf32>
    %407 = tpu.matmul %406, %396, %cst_110 {dimension_numbers = #tpu.dot_dimension_numbers<[2], [2], [1], [1], [0, 0, 0, 1, 1, 1], [0], [0]>} : vector<2x1x8xf32>, vector<2x16x8xf32>, vector<2x1x16xf32> -> vector<2x1x16xf32>
    "tpu.trace_stop"() : () -> ()
    %408 = vector.shape_cast %407 : vector<2x1x16xf32> to vector<2x16xf32>
    %409 = vector.extract_strided_slice %379 {offsets = [0, 26], sizes = [2, 1], strides = [1, 1]} : vector<2x53xf32> to vector<2x1xf32>
    %cst_111 = arith.constant 0.000000e+00 : f32
    %410 = vector.broadcast %cst_111 : f32 to vector<2x1xf32>
    %411 = arith.maximumf %409, %410 : vector<2x1xf32>
    %412 = math.absf %409 : vector<2x1xf32>
    %cst_112 = arith.constant 0.000000e+00 : f32
    %413 = vector.broadcast %cst_112 : f32 to vector<2x1xf32>
    %414 = arith.subf %413, %412 : vector<2x1xf32>
    %415 = math.exp %414 : vector<2x1xf32>
    %cst_113 = arith.constant 1.000000e+00 : f32
    %416 = vector.broadcast %cst_113 : f32 to vector<2x1xf32>
    %417 = arith.addf %416, %415 : vector<2x1xf32>
    %418 = math.log %417 : vector<2x1xf32>
    %419 = arith.addf %411, %418 : vector<2x1xf32>
    %cst_114 = arith.constant 1.000000e+00 : f32
    %420 = vector.broadcast %cst_114 : f32 to vector<2x1xf32>
    %421 = arith.addf %420, %419 : vector<2x1xf32>
    %422 = vector.broadcast %421 : vector<2x1xf32> to vector<2x16xf32>
    %423 = arith.mulf %422, %408 : vector<2x16xf32>
    %cst_115 = arith.constant dense<0xFF800000> : vector<2xf32>
    %424 = vector.multi_reduction <maximumf>, %423, %cst_115 [1] : vector<2x16xf32> to vector<2xf32>
    %425 = vector.shape_cast %424 : vector<2xf32> to vector<2x1xf32>
    %426 = vector.broadcast %425 : vector<2x1xf32> to vector<2x16xf32>
    %427 = arith.subf %423, %426 : vector<2x16xf32>
    %428 = math.exp %427 : vector<2x16xf32>
    %cst_116 = arith.constant dense<0.000000e+00> : vector<2xf32>
    %429 = vector.multi_reduction <add>, %428, %cst_116 [1] : vector<2x16xf32> to vector<2xf32>
    %430 = vector.shape_cast %429 : vector<2xf32> to vector<2x1xf32>
    %431 = vector.broadcast %430 : vector<2x1xf32> to vector<2x16xf32>
    %432 = arith.divf %428, %431 : vector<2x16xf32>
    %433 = vector.broadcast %388 : vector<2x1xf32> to vector<2x16xf32>
    %434 = arith.mulf %433, %432 : vector<2x16xf32>
    %435 = vector.shape_cast %434 : vector<2x16xf32> to vector<2x16x1xf32>
    %436 = vector.shape_cast %386 : vector<2x8xf32> to vector<2x1x8xf32>
    %437 = vector.broadcast %435 : vector<2x16x1xf32> to vector<2x16x8xf32>
    %438 = vector.broadcast %436 : vector<2x1x8xf32> to vector<2x16x8xf32>
    %439 = arith.mulf %437, %438 : vector<2x16x8xf32>
    %cst_117 = arith.constant 1.000000e+00 : f32
    %440 = vector.broadcast %cst_117 : f32 to vector<2x16x8xf32>
    %441 = arith.subf %440, %439 : vector<2x16x8xf32>
    %442 = arith.mulf %283, %441 : vector<2x16x8xf32>
    %443 = vector.shape_cast %434 : vector<2x16xf32> to vector<2x16x1xf32>
    %444 = vector.shape_cast %387 : vector<2x8xf32> to vector<2x1x8xf32>
    %445 = vector.broadcast %443 : vector<2x16x1xf32> to vector<2x16x8xf32>
    %446 = vector.broadcast %444 : vector<2x1x8xf32> to vector<2x16x8xf32>
    %447 = arith.mulf %445, %446 : vector<2x16x8xf32>
    %448 = arith.addf %442, %447 : vector<2x16x8xf32>
    %449 = arith.mulf %448, %448 : vector<2x16x8xf32>
    %cst_118 = arith.constant dense<0.000000e+00> : vector<2x16xf32>
    %450 = vector.multi_reduction <add>, %449, %cst_118 [2] : vector<2x16x8xf32> to vector<2x16xf32>
    %451 = vector.shape_cast %450 : vector<2x16xf32> to vector<2x16x1xf32>
    %cst_119 = arith.constant 9.99999997E-7 : f32
    %452 = vector.broadcast %cst_119 : f32 to vector<2x16x1xf32>
    %453 = arith.addf %451, %452 : vector<2x16x1xf32>
    %454 = math.rsqrt %453 : vector<2x16x1xf32>
    %455 = vector.broadcast %454 : vector<2x16x1xf32> to vector<2x16x8xf32>
    %456 = arith.mulf %448, %455 : vector<2x16x8xf32>
    %457 = vector.extract_strided_slice %379 {offsets = [0, 0], sizes = [2, 8], strides = [1, 1]} : vector<2x53xf32> to vector<2x8xf32>
    %458 = vector.shape_cast %457 : vector<2x8xf32> to vector<2x1x8xf32>
    %459 = vector.extract_strided_slice %379 {offsets = [0, 8], sizes = [2, 8], strides = [1, 1]} : vector<2x53xf32> to vector<2x8xf32>
    %460 = vector.shape_cast %459 : vector<2x8xf32> to vector<2x1x8xf32>
    %461 = tpu.concatenate %458, %460 in 1 : vector<2x1x8xf32>, vector<2x1x8xf32> -> vector<2x2x8xf32>
    %462 = arith.mulf %461, %461 : vector<2x2x8xf32>
    %cst_120 = arith.constant dense<0.000000e+00> : vector<2x2xf32>
    %463 = vector.multi_reduction <add>, %462, %cst_120 [2] : vector<2x2x8xf32> to vector<2x2xf32>
    %464 = vector.shape_cast %463 : vector<2x2xf32> to vector<2x2x1xf32>
    %cst_121 = arith.constant 9.99999997E-7 : f32
    %465 = vector.broadcast %cst_121 : f32 to vector<2x2x1xf32>
    %466 = arith.addf %464, %465 : vector<2x2x1xf32>
    %467 = math.rsqrt %466 : vector<2x2x1xf32>
    %468 = vector.broadcast %467 : vector<2x2x1xf32> to vector<2x2x8xf32>
    %469 = arith.mulf %461, %468 : vector<2x2x8xf32>
    "tpu.trace_start"() <{level = 10 : i32, message = "brw,bnw->brn"}> : () -> ()
    %cst_122 = arith.constant dense<0.000000e+00> : vector<2x2x16xf32>
    %470 = tpu.matmul %469, %456, %cst_122 {dimension_numbers = #tpu.dot_dimension_numbers<[2], [2], [1], [1], [0, 0, 0, 1, 1, 1], [0], [0]>} : vector<2x2x8xf32>, vector<2x16x8xf32>, vector<2x2x16xf32> -> vector<2x2x16xf32>
    "tpu.trace_stop"() : () -> ()
    %471 = vector.extract_strided_slice %379 {offsets = [0, 16], sizes = [2, 2], strides = [1, 1]} : vector<2x53xf32> to vector<2x2xf32>
    %cst_123 = arith.constant 0.000000e+00 : f32
    %472 = vector.broadcast %cst_123 : f32 to vector<2x2xf32>
    %473 = arith.maximumf %471, %472 : vector<2x2xf32>
    %474 = math.absf %471 : vector<2x2xf32>
    %cst_124 = arith.constant 0.000000e+00 : f32
    %475 = vector.broadcast %cst_124 : f32 to vector<2x2xf32>
    %476 = arith.subf %475, %474 : vector<2x2xf32>
    %477 = math.exp %476 : vector<2x2xf32>
    %cst_125 = arith.constant 1.000000e+00 : f32
    %478 = vector.broadcast %cst_125 : f32 to vector<2x2xf32>
    %479 = arith.addf %478, %477 : vector<2x2xf32>
    %480 = math.log %479 : vector<2x2xf32>
    %481 = arith.addf %473, %480 : vector<2x2xf32>
    %cst_126 = arith.constant 1.000000e+00 : f32
    %482 = vector.broadcast %cst_126 : f32 to vector<2x2xf32>
    %483 = arith.addf %482, %481 : vector<2x2xf32>
    %484 = vector.shape_cast %483 : vector<2x2xf32> to vector<2x2x1xf32>
    %485 = vector.broadcast %484 : vector<2x2x1xf32> to vector<2x2x16xf32>
    %486 = arith.mulf %485, %470 : vector<2x2x16xf32>
    %cst_127 = arith.constant dense<0xFF800000> : vector<2x2xf32>
    %487 = vector.multi_reduction <maximumf>, %486, %cst_127 [2] : vector<2x2x16xf32> to vector<2x2xf32>
    %488 = vector.shape_cast %487 : vector<2x2xf32> to vector<2x2x1xf32>
    %489 = vector.broadcast %488 : vector<2x2x1xf32> to vector<2x2x16xf32>
    %490 = arith.subf %486, %489 : vector<2x2x16xf32>
    %491 = math.exp %490 : vector<2x2x16xf32>
    %cst_128 = arith.constant dense<0.000000e+00> : vector<2x2xf32>
    %492 = vector.multi_reduction <add>, %491, %cst_128 [2] : vector<2x2x16xf32> to vector<2x2xf32>
    %493 = vector.shape_cast %492 : vector<2x2xf32> to vector<2x2x1xf32>
    %494 = vector.broadcast %493 : vector<2x2x1xf32> to vector<2x2x16xf32>
    %495 = arith.divf %491, %494 : vector<2x2x16xf32>
    "tpu.trace_start"() <{level = 10 : i32, message = "brn,bnw->brw"}> : () -> ()
    %cst_129 = arith.constant dense<0.000000e+00> : vector<2x2x8xf32>
    %496 = tpu.matmul %495, %448, %cst_129 {dimension_numbers = #tpu.dot_dimension_numbers<[2], [1], [1], [2], [0, 0, 0, 1, 1, 2], [0], [0]>} : vector<2x2x16xf32>, vector<2x16x8xf32>, vector<2x2x8xf32> -> vector<2x2x8xf32>
    "tpu.trace_stop"() : () -> ()
    %497 = vector.extract_strided_slice %496 {offsets = [0, 0, 0], sizes = [2, 1, 8], strides = [1, 1, 1]} : vector<2x2x8xf32> to vector<2x1x8xf32>
    %498 = vector.shape_cast %497 : vector<2x1x8xf32> to vector<2x8xf32>
    %499 = vector.extract_strided_slice %496 {offsets = [0, 1, 0], sizes = [2, 1, 8], strides = [1, 1, 1]} : vector<2x2x8xf32> to vector<2x1x8xf32>
    %500 = vector.shape_cast %499 : vector<2x1x8xf32> to vector<2x8xf32>
    %501 = tpu.concatenate %498, %500 in 1 : vector<2x8xf32>, vector<2x8xf32> -> vector<2x16xf32>
    %cst_130 = arith.constant dense<0.000000e+00> : vector<2x8xf32>
    %502 = tpu.matmul %376, %8, %cst_130 {dimension_numbers = #tpu.dot_dimension_numbers<[1], [0], [0], [1], [0, 0, 1, 1], [], []>} : vector<2x32xf32>, vector<32x8xf32>, vector<2x8xf32> -> vector<2x8xf32>
    %cst_131 = arith.constant dense<0.000000e+00> : vector<2x8xf32>
    %503 = tpu.matmul %501, %9, %cst_131 {dimension_numbers = #tpu.dot_dimension_numbers<[1], [0], [0], [1], [0, 0, 1, 1], [], []>} : vector<2x16xf32>, vector<16x8xf32>, vector<2x8xf32> -> vector<2x8xf32>
    %504 = arith.addf %502, %503 : vector<2x8xf32>
    %505 = vector.broadcast %10 : vector<1x8xf32> to vector<2x8xf32>
    %506 = arith.addf %504, %505 : vector<2x8xf32>
    %c2 = arith.constant 2 : index
    %c0_132 = arith.constant 0 : index
    %c0_133 = arith.constant 0 : index
    %507 = vector.load %arg14[%c2, %c0_132, %c0_133] : memref<4x2x8xf32, #tpu.memory_space<vmem>>, vector<1x2x8xf32>
    %508 = vector.shape_cast %507 : vector<1x2x8xf32> to vector<2x8xf32>
    %509 = vector.shape_cast %506 : vector<2x8xf32> to vector<1x2x8xf32>
    tpu.vector_store %arg14[%c2, %c0_132, %c0_133], %509 {strides = array<i32>} : memref<4x2x8xf32, #tpu.memory_space<vmem>>, vector<1x2x8xf32>,
    %510 = vector.extract_strided_slice %2 {offsets = [6, 0], sizes = [2, 128], strides = [1, 1]} : vector<8x128xf32> to vector<2x128xf32>
    %cst_134 = arith.constant dense<0.000000e+00> : vector<2x128xf32>
    %511 = tpu.matmul %501, %3, %cst_134 {dimension_numbers = #tpu.dot_dimension_numbers<[1], [0], [0], [1], [0, 0, 1, 1], [], []>} : vector<2x16xf32>, vector<16x128xf32>, vector<2x128xf32> -> vector<2x128xf32>
    %512 = arith.addf %510, %511 : vector<2x128xf32>
    %cst_135 = arith.constant dense<0.000000e+00> : vector<2x128xf32>
    %513 = tpu.matmul %376, %4, %cst_135 {dimension_numbers = #tpu.dot_dimension_numbers<[1], [0], [0], [1], [0, 0, 1, 1], [], []>} : vector<2x32xf32>, vector<32x128xf32>, vector<2x128xf32> -> vector<2x128xf32>
    %514 = arith.addf %512, %513 : vector<2x128xf32>
    %515 = vector.broadcast %5 : vector<1x128xf32> to vector<2x128xf32>
    %516 = arith.addf %514, %515 : vector<2x128xf32>
    %517 = vector.extract_strided_slice %516 {offsets = [0, 0], sizes = [2, 32], strides = [1, 1]} : vector<2x128xf32> to vector<2x32xf32>
    %518 = arith.negf %517 : vector<2x32xf32>
    %519 = math.exp %518 : vector<2x32xf32>
    %cst_136 = arith.constant 1.000000e+00 : f32
    %520 = vector.broadcast %cst_136 : f32 to vector<2x32xf32>
    %521 = arith.addf %520, %519 : vector<2x32xf32>
    %522 = arith.divf %520, %521 : vector<2x32xf32>
    %523 = vector.extract_strided_slice %516 {offsets = [0, 32], sizes = [2, 32], strides = [1, 1]} : vector<2x128xf32> to vector<2x32xf32>
    %524 = arith.negf %523 : vector<2x32xf32>
    %525 = math.exp %524 : vector<2x32xf32>
    %cst_137 = arith.constant 1.000000e+00 : f32
    %526 = vector.broadcast %cst_137 : f32 to vector<2x32xf32>
    %527 = arith.addf %526, %525 : vector<2x32xf32>
    %528 = arith.divf %526, %527 : vector<2x32xf32>
    %529 = vector.extract_strided_slice %516 {offsets = [0, 64], sizes = [2, 32], strides = [1, 1]} : vector<2x128xf32> to vector<2x32xf32>
    %530 = math.tanh %529 : vector<2x32xf32>
    %531 = vector.extract_strided_slice %516 {offsets = [0, 96], sizes = [2, 32], strides = [1, 1]} : vector<2x128xf32> to vector<2x32xf32>
    %532 = arith.negf %531 : vector<2x32xf32>
    %533 = math.exp %532 : vector<2x32xf32>
    %cst_138 = arith.constant 1.000000e+00 : f32
    %534 = vector.broadcast %cst_138 : f32 to vector<2x32xf32>
    %535 = arith.addf %534, %533 : vector<2x32xf32>
    %536 = arith.divf %534, %535 : vector<2x32xf32>
    %537 = arith.mulf %528, %374 : vector<2x32xf32>
    %538 = arith.mulf %522, %530 : vector<2x32xf32>
    %539 = arith.addf %537, %538 : vector<2x32xf32>
    %540 = math.tanh %539 : vector<2x32xf32>
    %541 = arith.mulf %536, %540 : vector<2x32xf32>
    %cst_139 = arith.constant dense<0.000000e+00> : vector<2x53xf32>
    %542 = tpu.matmul %541, %6, %cst_139 {dimension_numbers = #tpu.dot_dimension_numbers<[1], [0], [0], [1], [0, 0, 1, 1], [], []>} : vector<2x32xf32>, vector<32x53xf32>, vector<2x53xf32> -> vector<2x53xf32>
    %543 = vector.broadcast %7 : vector<1x53xf32> to vector<2x53xf32>
    %544 = arith.addf %542, %543 : vector<2x53xf32>
    %545 = vector.extract_strided_slice %544 {offsets = [0, 27], sizes = [2, 17], strides = [1, 1]} : vector<2x53xf32> to vector<2x17xf32>
    %546 = arith.negf %545 : vector<2x17xf32>
    %547 = math.exp %546 : vector<2x17xf32>
    %cst_140 = arith.constant 1.000000e+00 : f32
    %548 = vector.broadcast %cst_140 : f32 to vector<2x17xf32>
    %549 = arith.addf %548, %547 : vector<2x17xf32>
    %550 = arith.divf %548, %549 : vector<2x17xf32>
    %551 = vector.extract_strided_slice %550 {offsets = [0, 0], sizes = [2, 8], strides = [1, 1]} : vector<2x17xf32> to vector<2x8xf32>
    %552 = vector.extract_strided_slice %550 {offsets = [0, 8], sizes = [2, 8], strides = [1, 1]} : vector<2x17xf32> to vector<2x8xf32>
    %553 = vector.extract_strided_slice %550 {offsets = [0, 16], sizes = [2, 1], strides = [1, 1]} : vector<2x17xf32> to vector<2x1xf32>
    %554 = arith.mulf %448, %448 : vector<2x16x8xf32>
    %cst_141 = arith.constant dense<0.000000e+00> : vector<2x16xf32>
    %555 = vector.multi_reduction <add>, %554, %cst_141 [2] : vector<2x16x8xf32> to vector<2x16xf32>
    %556 = vector.shape_cast %555 : vector<2x16xf32> to vector<2x16x1xf32>
    %cst_142 = arith.constant 9.99999997E-7 : f32
    %557 = vector.broadcast %cst_142 : f32 to vector<2x16x1xf32>
    %558 = arith.addf %556, %557 : vector<2x16x1xf32>
    %559 = math.rsqrt %558 : vector<2x16x1xf32>
    %560 = vector.broadcast %559 : vector<2x16x1xf32> to vector<2x16x8xf32>
    %561 = arith.mulf %448, %560 : vector<2x16x8xf32>
    %562 = vector.extract_strided_slice %544 {offsets = [0, 18], sizes = [2, 8], strides = [1, 1]} : vector<2x53xf32> to vector<2x8xf32>
    %563 = arith.mulf %562, %562 : vector<2x8xf32>
    %cst_143 = arith.constant dense<0.000000e+00> : vector<2xf32>
    %564 = vector.multi_reduction <add>, %563, %cst_143 [1] : vector<2x8xf32> to vector<2xf32>
    %565 = vector.shape_cast %564 : vector<2xf32> to vector<2x1xf32>
    %cst_144 = arith.constant 9.99999997E-7 : f32
    %566 = vector.broadcast %cst_144 : f32 to vector<2x1xf32>
    %567 = arith.addf %565, %566 : vector<2x1xf32>
    %568 = math.rsqrt %567 : vector<2x1xf32>
    %569 = vector.broadcast %568 : vector<2x1xf32> to vector<2x8xf32>
    %570 = arith.mulf %562, %569 : vector<2x8xf32>
    %571 = vector.shape_cast %570 : vector<2x8xf32> to vector<2x1x8xf32>
    "tpu.trace_start"() <{level = 10 : i32, message = "bqw,bnw->bqn"}> : () -> ()
    %cst_145 = arith.constant dense<0.000000e+00> : vector<2x1x16xf32>
    %572 = tpu.matmul %571, %561, %cst_145 {dimension_numbers = #tpu.dot_dimension_numbers<[2], [2], [1], [1], [0, 0, 0, 1, 1, 1], [0], [0]>} : vector<2x1x8xf32>, vector<2x16x8xf32>, vector<2x1x16xf32> -> vector<2x1x16xf32>
    "tpu.trace_stop"() : () -> ()
    %573 = vector.shape_cast %572 : vector<2x1x16xf32> to vector<2x16xf32>
    %574 = vector.extract_strided_slice %544 {offsets = [0, 26], sizes = [2, 1], strides = [1, 1]} : vector<2x53xf32> to vector<2x1xf32>
    %cst_146 = arith.constant 0.000000e+00 : f32
    %575 = vector.broadcast %cst_146 : f32 to vector<2x1xf32>
    %576 = arith.maximumf %574, %575 : vector<2x1xf32>
    %577 = math.absf %574 : vector<2x1xf32>
    %cst_147 = arith.constant 0.000000e+00 : f32
    %578 = vector.broadcast %cst_147 : f32 to vector<2x1xf32>
    %579 = arith.subf %578, %577 : vector<2x1xf32>
    %580 = math.exp %579 : vector<2x1xf32>
    %cst_148 = arith.constant 1.000000e+00 : f32
    %581 = vector.broadcast %cst_148 : f32 to vector<2x1xf32>
    %582 = arith.addf %581, %580 : vector<2x1xf32>
    %583 = math.log %582 : vector<2x1xf32>
    %584 = arith.addf %576, %583 : vector<2x1xf32>
    %cst_149 = arith.constant 1.000000e+00 : f32
    %585 = vector.broadcast %cst_149 : f32 to vector<2x1xf32>
    %586 = arith.addf %585, %584 : vector<2x1xf32>
    %587 = vector.broadcast %586 : vector<2x1xf32> to vector<2x16xf32>
    %588 = arith.mulf %587, %573 : vector<2x16xf32>
    %cst_150 = arith.constant dense<0xFF800000> : vector<2xf32>
    %589 = vector.multi_reduction <maximumf>, %588, %cst_150 [1] : vector<2x16xf32> to vector<2xf32>
    %590 = vector.shape_cast %589 : vector<2xf32> to vector<2x1xf32>
    %591 = vector.broadcast %590 : vector<2x1xf32> to vector<2x16xf32>
    %592 = arith.subf %588, %591 : vector<2x16xf32>
    %593 = math.exp %592 : vector<2x16xf32>
    %cst_151 = arith.constant dense<0.000000e+00> : vector<2xf32>
    %594 = vector.multi_reduction <add>, %593, %cst_151 [1] : vector<2x16xf32> to vector<2xf32>
    %595 = vector.shape_cast %594 : vector<2xf32> to vector<2x1xf32>
    %596 = vector.broadcast %595 : vector<2x1xf32> to vector<2x16xf32>
    %597 = arith.divf %593, %596 : vector<2x16xf32>
    %598 = vector.broadcast %553 : vector<2x1xf32> to vector<2x16xf32>
    %599 = arith.mulf %598, %597 : vector<2x16xf32>
    %600 = vector.shape_cast %599 : vector<2x16xf32> to vector<2x16x1xf32>
    %601 = vector.shape_cast %551 : vector<2x8xf32> to vector<2x1x8xf32>
    %602 = vector.broadcast %600 : vector<2x16x1xf32> to vector<2x16x8xf32>
    %603 = vector.broadcast %601 : vector<2x1x8xf32> to vector<2x16x8xf32>
    %604 = arith.mulf %602, %603 : vector<2x16x8xf32>
    %cst_152 = arith.constant 1.000000e+00 : f32
    %605 = vector.broadcast %cst_152 : f32 to vector<2x16x8xf32>
    %606 = arith.subf %605, %604 : vector<2x16x8xf32>
    %607 = arith.mulf %448, %606 : vector<2x16x8xf32>
    %608 = vector.shape_cast %599 : vector<2x16xf32> to vector<2x16x1xf32>
    %609 = vector.shape_cast %552 : vector<2x8xf32> to vector<2x1x8xf32>
    %610 = vector.broadcast %608 : vector<2x16x1xf32> to vector<2x16x8xf32>
    %611 = vector.broadcast %609 : vector<2x1x8xf32> to vector<2x16x8xf32>
    %612 = arith.mulf %610, %611 : vector<2x16x8xf32>
    %613 = arith.addf %607, %612 : vector<2x16x8xf32>
    %614 = arith.mulf %613, %613 : vector<2x16x8xf32>
    %cst_153 = arith.constant dense<0.000000e+00> : vector<2x16xf32>
    %615 = vector.multi_reduction <add>, %614, %cst_153 [2] : vector<2x16x8xf32> to vector<2x16xf32>
    %616 = vector.shape_cast %615 : vector<2x16xf32> to vector<2x16x1xf32>
    %cst_154 = arith.constant 9.99999997E-7 : f32
    %617 = vector.broadcast %cst_154 : f32 to vector<2x16x1xf32>
    %618 = arith.addf %616, %617 : vector<2x16x1xf32>
    %619 = math.rsqrt %618 : vector<2x16x1xf32>
    %620 = vector.broadcast %619 : vector<2x16x1xf32> to vector<2x16x8xf32>
    %621 = arith.mulf %613, %620 : vector<2x16x8xf32>
    %622 = vector.extract_strided_slice %544 {offsets = [0, 0], sizes = [2, 8], strides = [1, 1]} : vector<2x53xf32> to vector<2x8xf32>
    %623 = vector.shape_cast %622 : vector<2x8xf32> to vector<2x1x8xf32>
    %624 = vector.extract_strided_slice %544 {offsets = [0, 8], sizes = [2, 8], strides = [1, 1]} : vector<2x53xf32> to vector<2x8xf32>
    %625 = vector.shape_cast %624 : vector<2x8xf32> to vector<2x1x8xf32>
    %626 = tpu.concatenate %623, %625 in 1 : vector<2x1x8xf32>, vector<2x1x8xf32> -> vector<2x2x8xf32>
    %627 = arith.mulf %626, %626 : vector<2x2x8xf32>
    %cst_155 = arith.constant dense<0.000000e+00> : vector<2x2xf32>
    %628 = vector.multi_reduction <add>, %627, %cst_155 [2] : vector<2x2x8xf32> to vector<2x2xf32>
    %629 = vector.shape_cast %628 : vector<2x2xf32> to vector<2x2x1xf32>
    %cst_156 = arith.constant 9.99999997E-7 : f32
    %630 = vector.broadcast %cst_156 : f32 to vector<2x2x1xf32>
    %631 = arith.addf %629, %630 : vector<2x2x1xf32>
    %632 = math.rsqrt %631 : vector<2x2x1xf32>
    %633 = vector.broadcast %632 : vector<2x2x1xf32> to vector<2x2x8xf32>
    %634 = arith.mulf %626, %633 : vector<2x2x8xf32>
    "tpu.trace_start"() <{level = 10 : i32, message = "brw,bnw->brn"}> : () -> ()
    %cst_157 = arith.constant dense<0.000000e+00> : vector<2x2x16xf32>
    %635 = tpu.matmul %634, %621, %cst_157 {dimension_numbers = #tpu.dot_dimension_numbers<[2], [2], [1], [1], [0, 0, 0, 1, 1, 1], [0], [0]>} : vector<2x2x8xf32>, vector<2x16x8xf32>, vector<2x2x16xf32> -> vector<2x2x16xf32>
    "tpu.trace_stop"() : () -> ()
    %636 = vector.extract_strided_slice %544 {offsets = [0, 16], sizes = [2, 2], strides = [1, 1]} : vector<2x53xf32> to vector<2x2xf32>
    %cst_158 = arith.constant 0.000000e+00 : f32
    %637 = vector.broadcast %cst_158 : f32 to vector<2x2xf32>
    %638 = arith.maximumf %636, %637 : vector<2x2xf32>
    %639 = math.absf %636 : vector<2x2xf32>
    %cst_159 = arith.constant 0.000000e+00 : f32
    %640 = vector.broadcast %cst_159 : f32 to vector<2x2xf32>
    %641 = arith.subf %640, %639 : vector<2x2xf32>
    %642 = math.exp %641 : vector<2x2xf32>
    %cst_160 = arith.constant 1.000000e+00 : f32
    %643 = vector.broadcast %cst_160 : f32 to vector<2x2xf32>
    %644 = arith.addf %643, %642 : vector<2x2xf32>
    %645 = math.log %644 : vector<2x2xf32>
    %646 = arith.addf %638, %645 : vector<2x2xf32>
    %cst_161 = arith.constant 1.000000e+00 : f32
    %647 = vector.broadcast %cst_161 : f32 to vector<2x2xf32>
    %648 = arith.addf %647, %646 : vector<2x2xf32>
    %649 = vector.shape_cast %648 : vector<2x2xf32> to vector<2x2x1xf32>
    %650 = vector.broadcast %649 : vector<2x2x1xf32> to vector<2x2x16xf32>
    %651 = arith.mulf %650, %635 : vector<2x2x16xf32>
    %cst_162 = arith.constant dense<0xFF800000> : vector<2x2xf32>
    %652 = vector.multi_reduction <maximumf>, %651, %cst_162 [2] : vector<2x2x16xf32> to vector<2x2xf32>
    %653 = vector.shape_cast %652 : vector<2x2xf32> to vector<2x2x1xf32>
    %654 = vector.broadcast %653 : vector<2x2x1xf32> to vector<2x2x16xf32>
    %655 = arith.subf %651, %654 : vector<2x2x16xf32>
    %656 = math.exp %655 : vector<2x2x16xf32>
    %cst_163 = arith.constant dense<0.000000e+00> : vector<2x2xf32>
    %657 = vector.multi_reduction <add>, %656, %cst_163 [2] : vector<2x2x16xf32> to vector<2x2xf32>
    %658 = vector.shape_cast %657 : vector<2x2xf32> to vector<2x2x1xf32>
    %659 = vector.broadcast %658 : vector<2x2x1xf32> to vector<2x2x16xf32>
    %660 = arith.divf %656, %659 : vector<2x2x16xf32>
    "tpu.trace_start"() <{level = 10 : i32, message = "brn,bnw->brw"}> : () -> ()
    %cst_164 = arith.constant dense<0.000000e+00> : vector<2x2x8xf32>
    %661 = tpu.matmul %660, %613, %cst_164 {dimension_numbers = #tpu.dot_dimension_numbers<[2], [1], [1], [2], [0, 0, 0, 1, 1, 2], [0], [0]>} : vector<2x2x16xf32>, vector<2x16x8xf32>, vector<2x2x8xf32> -> vector<2x2x8xf32>
    "tpu.trace_stop"() : () -> ()
    %662 = vector.extract_strided_slice %661 {offsets = [0, 0, 0], sizes = [2, 1, 8], strides = [1, 1, 1]} : vector<2x2x8xf32> to vector<2x1x8xf32>
    %663 = vector.shape_cast %662 : vector<2x1x8xf32> to vector<2x8xf32>
    %664 = vector.extract_strided_slice %661 {offsets = [0, 1, 0], sizes = [2, 1, 8], strides = [1, 1, 1]} : vector<2x2x8xf32> to vector<2x1x8xf32>
    %665 = vector.shape_cast %664 : vector<2x1x8xf32> to vector<2x8xf32>
    %666 = tpu.concatenate %663, %665 in 1 : vector<2x8xf32>, vector<2x8xf32> -> vector<2x16xf32>
    %cst_165 = arith.constant dense<0.000000e+00> : vector<2x8xf32>
    %667 = tpu.matmul %541, %8, %cst_165 {dimension_numbers = #tpu.dot_dimension_numbers<[1], [0], [0], [1], [0, 0, 1, 1], [], []>} : vector<2x32xf32>, vector<32x8xf32>, vector<2x8xf32> -> vector<2x8xf32>
    %cst_166 = arith.constant dense<0.000000e+00> : vector<2x8xf32>
    %668 = tpu.matmul %666, %9, %cst_166 {dimension_numbers = #tpu.dot_dimension_numbers<[1], [0], [0], [1], [0, 0, 1, 1], [], []>} : vector<2x16xf32>, vector<16x8xf32>, vector<2x8xf32> -> vector<2x8xf32>
    %669 = arith.addf %667, %668 : vector<2x8xf32>
    %670 = vector.broadcast %10 : vector<1x8xf32> to vector<2x8xf32>
    %671 = arith.addf %669, %670 : vector<2x8xf32>
    %c3 = arith.constant 3 : index
    %c0_167 = arith.constant 0 : index
    %c0_168 = arith.constant 0 : index
    %672 = vector.load %arg14[%c3, %c0_167, %c0_168] : memref<4x2x8xf32, #tpu.memory_space<vmem>>, vector<1x2x8xf32>
    %673 = vector.shape_cast %672 : vector<1x2x8xf32> to vector<2x8xf32>
    %674 = vector.shape_cast %671 : vector<2x8xf32> to vector<1x2x8xf32>
    tpu.vector_store %arg14[%c3, %c0_167, %c0_168], %674 {strides = array<i32>} : memref<4x2x8xf32, #tpu.memory_space<vmem>>, vector<1x2x8xf32>,
    %c0_169 = arith.constant 0 : index
    %c0_170 = arith.constant 0 : index
    %675 = vector.load %arg15[%c0_169, %c0_170] : memref<2x32xf32, #tpu.memory_space<vmem>>, vector<2x32xf32>
    tpu.vector_store %arg15[%c0_169, %c0_170], %541 {strides = array<i32>} : memref<2x32xf32, #tpu.memory_space<vmem>>, vector<2x32xf32>,
    %c0_171 = arith.constant 0 : index
    %c0_172 = arith.constant 0 : index
    %676 = vector.load %arg16[%c0_171, %c0_172] : memref<2x32xf32, #tpu.memory_space<vmem>>, vector<2x32xf32>
    tpu.vector_store %arg16[%c0_171, %c0_172], %539 {strides = array<i32>} : memref<2x32xf32, #tpu.memory_space<vmem>>, vector<2x32xf32>,
    %c0_173 = arith.constant 0 : index
    %c0_174 = arith.constant 0 : index
    %677 = vector.load %arg17[%c0_173, %c0_174] : memref<2x16xf32, #tpu.memory_space<vmem>>, vector<2x16xf32>
    tpu.vector_store %arg17[%c0_173, %c0_174], %666 {strides = array<i32>} : memref<2x16xf32, #tpu.memory_space<vmem>>, vector<2x16xf32>,
    %c0_175 = arith.constant 0 : index
    %c0_176 = arith.constant 0 : index
    %c0_177 = arith.constant 0 : index
    %678 = vector.load %arg18[%c0_175, %c0_176, %c0_177] : memref<2x16x8xf32, #tpu.memory_space<vmem>>, vector<2x16x8xf32>
    tpu.vector_store %arg18[%c0_175, %c0_176, %c0_177], %613 {strides = array<i32>} : memref<2x16x8xf32, #tpu.memory_space<vmem>>, vector<2x16x8xf32>,
    return
  }
}

</mosaic_0001>

<llo_original>
// kernel: dnc_forward.1
$region0: #{dnc_forward.1}
  #allocation0 [shape = 'u32[]', space=smem, size = 0x4, offset = 0x4, fixed_abs, tag = 'smem constant byte address 0x4 - core index']
  #allocation1 [shape = 'u32[144,128]{1,0:T(1,128)}', space=vmem, size = 0x12000, scoped, tag = 'internal scratch']
  %s0 = inlined_call_operand.hbm [shape: f32[8,16], index: 0, kind: input, shape index: {}]
  %s1 = inlined_call_operand.vmem [shape: f32[2,32], index: 1, kind: input, shape index: {}]
  %s2 = inlined_call_operand.vmem [shape: f32[2,32], index: 2, kind: input, shape index: {}]
  %s3 = inlined_call_operand.vmem [shape: f32[2,16], index: 3, kind: input, shape index: {}]
  %s4 = inlined_call_operand.vmem [shape: f32[2,16,8], index: 4, kind: input, shape index: {}]
  %s5 = inlined_call_operand.vmem [shape: f32[16,128], index: 5, kind: input, shape index: {}]
  %s6 = inlined_call_operand.vmem [shape: f32[16,128], index: 6, kind: input, shape index: {}]
  %s7 = inlined_call_operand.vmem [shape: f32[32,128], index: 7, kind: input, shape index: {}]
  %s8 = inlined_call_operand.hbm [shape: f32[1,128], index: 8, kind: input, shape index: {}]
  %s9 = inlined_call_operand.vmem [shape: f32[32,53], index: 9, kind: input, shape index: {}]
  %s10 = inlined_call_operand.hbm [shape: f32[1,53], index: 10, kind: input, shape index: {}]
  %s11 = inlined_call_operand.vmem [shape: f32[32,8], index: 11, kind: input, shape index: {}]
  %s12 = inlined_call_operand.vmem [shape: f32[16,8], index: 12, kind: input, shape index: {}]
  %s13 = inlined_call_operand.hbm [shape: f32[1,8], index: 13, kind: input, shape index: {}]
  %s14 = inlined_call_operand.hbm [shape: f32[4,2,8], index: 14, kind: output, shape index: {0}]
  %s15 = inlined_call_operand.hbm [shape: f32[2,32], index: 15, kind: output, shape index: {1}]
  %s16 = inlined_call_operand.hbm [shape: f32[2,32], index: 16, kind: output, shape index: {2}]
  %s17 = inlined_call_operand.vmem [shape: f32[2,16], index: 17, kind: output, shape index: {3}]
  %s18 = inlined_call_operand.vmem [shape: f32[2,16,8], index: 18, kind: output, shape index: {4}]
  %19 = xla_tuple %s14, %s15, %s16, %s17, %s18
  %s20 = sld [smem:[#allocation0]]
  $region114: #{dnc_forward.1} parent=0
    _
  %s22 = ssub.s32 1, %s20
  %s23 = scalar_select 0, %s22, %s20
  $region1: #{dnc_forward.1} parent=0
    #allocation2 [shape = 'u8[4096]{0}', space=vmem, size = 0x1000, scoped, tag = 'input window, operand 0, single buffered']
    #allocation3 [shape = 's32[1]{0}', space=sflag, size = 0x4, scoped, tag = 'scoped memory for dnc_forward.1']
    #allocation4 [shape = 's32[1]{0}', space=sflag, size = 0x4, scoped, tag = 'scoped memory for dnc_forward.1']
    #allocation5 [shape = 'u8[512]{0}', space=vmem, size = 0x400, scoped, tag = 'input window, operand 8, single buffered']
    #allocation6 [shape = 's32[1]{0}', space=sflag, size = 0x4, scoped, tag = 'scoped memory for dnc_forward.1']
    #allocation7 [shape = 'u8[512]{0}', space=vmem, size = 0x400, scoped, tag = 'input window, operand 10, single buffered']
    #allocation8 [shape = 'u8[512]{0}', space=vmem, size = 0x400, scoped, tag = 'input window, operand 13, single buffered']
    #allocation9 [shape = 's32[1]{0}', space=sflag, size = 0x4, scoped, tag = 'scoped memory for dnc_forward.1']
    #allocation10 [shape = 'u8[4096]{0}', space=vmem, size = 0x1000, scoped, tag = 'output window, operand 0, single buffered']
    #allocation11 [shape = 'u8[1024]{0}', space=vmem, size = 0x400, scoped, tag = 'output window, operand 1, single buffered']
    #allocation12 [shape = 's32[1]{0}', space=sflag, size = 0x4, scoped, tag = 'scoped memory for dnc_forward.1']
    #allocation13 [shape = 'u8[1024]{0}', space=vmem, size = 0x400, scoped, tag = 'output window, operand 2, single buffered']
    %24 = vsyncpa [#allocation3], 0
    %25 = vsyncpa [#allocation6], 0
    %26 = vsyncpa [#allocation9], 0
    %27 = vsyncpa [#allocation4], 0
    %28 = vsyncpa [#allocation12], 0
    // Predicated region
    $region2: #{dnc_forward.1} parent=1 // pred_check
      _
    $region3: #{dnc_forward.1} parent=1 // pred_check_branch
      %30 = sbr.rel (0) target = $region5
    $region4: #{dnc_forward.1} parent=1 // pred_region
      %s32 = ssub.s32 128, 128
      %33 = vsyncadd [#allocation3], %s32
      %s35 = sshll.u32 [#allocation2], 4
      %s36 = int_to_ptr.vmem [resolvable:$true] %s35
      %38 = dma.hbm_to_vmem [thread:$0]  %s0, 128, %s36, [#allocation3]
    $region5: #{dnc_forward.1} parent=1 // pred_fallthru
      _
    // Predicated region
    $region6: #{dnc_forward.1} parent=1 // pred_check
      _
    $region7: #{dnc_forward.1} parent=1 // pred_check_branch
      %40 = sbr.rel (0) target = $region9
    $region8: #{dnc_forward.1} parent=1 // pred_region
      _
    $region9: #{dnc_forward.1} parent=1 // pred_fallthru
      _
    // Predicated region
    $region10: #{dnc_forward.1} parent=1 // pred_check
      _
    $region11: #{dnc_forward.1} parent=1 // pred_check_branch
      %42 = sbr.rel (0) target = $region13
    $region12: #{dnc_forward.1} parent=1 // pred_region
      _
    $region13: #{dnc_forward.1} parent=1 // pred_fallthru
      _
    // Predicated region
    $region14: #{dnc_forward.1} parent=1 // pred_check
      _
    $region15: #{dnc_forward.1} parent=1 // pred_check_branch
      %44 = sbr.rel (0) target = $region17
    $region16: #{dnc_forward.1} parent=1 // pred_region
      _
    $region17: #{dnc_forward.1} parent=1 // pred_fallthru
      _
    // Predicated region
    $region18: #{dnc_forward.1} parent=1 // pred_check
      _
    $region19: #{dnc_forward.1} parent=1 // pred_check_branch
      %46 = sbr.rel (0) target = $region21
    $region20: #{dnc_forward.1} parent=1 // pred_region
      _
    $region21: #{dnc_forward.1} parent=1 // pred_fallthru
      _
    // Predicated region
    $region22: #{dnc_forward.1} parent=1 // pred_check
      _
    $region23: #{dnc_forward.1} parent=1 // pred_check_branch
      %48 = sbr.rel (0) target = $region25
    $region24: #{dnc_forward.1} parent=1 // pred_region
      _
    $region25: #{dnc_forward.1} parent=1 // pred_fallthru
      _
    // Predicated region
    $region26: #{dnc_forward.1} parent=1 // pred_check
      _
    $region27: #{dnc_forward.1} parent=1 // pred_check_branch
      %50 = sbr.rel (0) target = $region29
    $region28: #{dnc_forward.1} parent=1 // pred_region
      _
    $region29: #{dnc_forward.1} parent=1 // pred_fallthru
      _
    // Predicated region
    $region30: #{dnc_forward.1} parent=1 // pred_check
      _
    $region31: #{dnc_forward.1} parent=1 // pred_check_branch
      %52 = sbr.rel (0) target = $region33
    $region32: #{dnc_forward.1} parent=1 // pred_region
      _
    $region33: #{dnc_forward.1} parent=1 // pred_fallthru
      _
    // Predicated region
    $region34: #{dnc_forward.1} parent=1 // pred_check
      _
    $region35: #{dnc_forward.1} parent=1 // pred_check_branch
      %54 = sbr.rel (0) target = $region37
    $region36: #{dnc_forward.1} parent=1 // pred_region
      %s56 = ssub.s32 16, 16
      %57 = vsyncadd [#allocation6], %s56
      %s59 = sshll.u32 [#allocation5], 4
      %s60 = int_to_ptr.vmem [resolvable:$true] %s59
      %62 = dma.hbm_to_vmem [thread:$0]  %s8, 16, %s60, [#allocation6]
    $region37: #{dnc_forward.1} parent=1 // pred_fallthru
      _
    // Predicated region
    $region38: #{dnc_forward.1} parent=1 // pred_check
      _
    $region39: #{dnc_forward.1} parent=1 // pred_check_branch
      %64 = sbr.rel (0) target = $region41
    $region40: #{dnc_forward.1} parent=1 // pred_region
      _
    $region41: #{dnc_forward.1} parent=1 // pred_fallthru
      _
    // Predicated region
    $region42: #{dnc_forward.1} parent=1 // pred_check
      _
    $region43: #{dnc_forward.1} parent=1 // pred_check_branch
      %66 = sbr.rel (0) target = $region45
    $region44: #{dnc_forward.1} parent=1 // pred_region
      %s68 = ssub.s32 16, 16
      %69 = vsyncadd [#allocation6], %s68
      %s71 = sshll.u32 [#allocation7], 4
      %s72 = int_to_ptr.vmem [resolvable:$true] %s71
      %74 = dma.hbm_to_vmem [thread:$0]  %s10, 16, %s72, [#allocation6]
    $region45: #{dnc_forward.1} parent=1 // pred_fallthru
      _
    // Predicated region
    $region46: #{dnc_forward.1} parent=1 // pred_check
      _
    $region47: #{dnc_forward.1} parent=1 // pred_check_branch
      %76 = sbr.rel (0) target = $region49
    $region48: #{dnc_forward.1} parent=1 // pred_region
      _
    $region49: #{dnc_forward.1} parent=1 // pred_fallthru
      _
    // Predicated region
    $region50: #{dnc_forward.1} parent=1 // pred_check
      _
    $region51: #{dnc_forward.1} parent=1 // pred_check_branch
      %78 = sbr.rel (0) target = $region53
    $region52: #{dnc_forward.1} parent=1 // pred_region
      _
    $region53: #{dnc_forward.1} parent=1 // pred_fallthru
      _
    // Predicated region
    $region54: #{dnc_forward.1} parent=1 // pred_check
      _
    $region55: #{dnc_forward.1} parent=1 // pred_check_branch
      %80 = sbr.rel (0) target = $region57
    $region56: #{dnc_forward.1} parent=1 // pred_region
      %s82 = ssub.s32 16, 16
      %83 = vsyncadd [#allocation9], %s82
      %s85 = sshll.u32 [#allocation8], 4
      %s86 = int_to_ptr.vmem [resolvable:$true] %s85
      %88 = dma.hbm_to_vmem [thread:$0]  %s13, 16, %s86, [#allocation9]
    $region57: #{dnc_forward.1} parent=1 // pred_fallthru
      _
    // Predicated region
    $region58: #{dnc_forward.1} parent=1 // pred_check
      _
    $region59: #{dnc_forward.1} parent=1 // pred_check_branch
      %90 = sbr.rel (0) target = $region61
    $region60: #{dnc_forward.1} parent=1 // pred_region
      %91 = dma.done [#allocation3], 128
    $region61: #{dnc_forward.1} parent=1 // pred_fallthru
      _
    // Predicated region
    $region62: #{dnc_forward.1} parent=1 // pred_check
      _
    $region63: #{dnc_forward.1} parent=1 // pred_check_branch
      %93 = sbr.rel (0) target = $region65
    $region64: #{dnc_forward.1} parent=1 // pred_region
      %94 = dma.done [#allocation6], 16
    $region65: #{dnc_forward.1} parent=1 // pred_fallthru
      _
    // Predicated region
    $region66: #{dnc_forward.1} parent=1 // pred_check
      _
    $region67: #{dnc_forward.1} parent=1 // pred_check_branch
      %96 = sbr.rel (0) target = $region69
    $region68: #{dnc_forward.1} parent=1 // pred_region
      %97 = dma.done [#allocation6], 16
    $region69: #{dnc_forward.1} parent=1 // pred_fallthru
      _
    // Predicated region
    $region70: #{dnc_forward.1} parent=1 // pred_check
      _
    $region71: #{dnc_forward.1} parent=1 // pred_check_branch
      %99 = sbr.rel (0) target = $region73
    $region72: #{dnc_forward.1} parent=1 // pred_region
      %100 = dma.done [#allocation9], 16
    $region73: #{dnc_forward.1} parent=1 // pred_fallthru
      _
    %v101 = vld [vmem:[#allocation2] sm:$0xff]
    %v102 = vld [vmem:[%s5] sm:$0xff]
    %v103 = vld [vmem:[%s5 + $0x8] sm:$0xff]
    %vm104 = vcmask 130048
    %v106 = vsel %vm104, %v101, 0
    %108 = vmatprep.subr.mxu0 0.0
    %109 = vmatpush1.msra.mxu0 %v102
    %110 = vmatprep.subr.mxu0 0.0
    %111 = vmatpush1.msra.mxu0 %v103
    %112 = vmatprep.subr.mxu0 0.0
    %113 = vmatpush1.msra.mxu0 0.0
    %114 = vmatprep.subr.mxu0 0.0
    %115 = vmatpush1.msra.mxu0 0.0
    %116 = vmatprep.subr.mxu0 0.0
    %117 = vmatpush1.msra.mxu0 0.0
    %118 = vmatprep.subr.mxu0 0.0
    %119 = vmatpush1.msra.mxu0 0.0
    %120 = vmatprep.subr.mxu0 0.0
    %121 = vmatpush1.msra.mxu0 0.0
    %122 = vmatprep.subr.mxu0 0.0
    %123 = vmatpush1.msra.mxu0 0.0
    %124 = vmatprep.subr.mxu0 0.0
    %125 = vmatpush1.msra.mxu0 0.0
    %126 = vmatprep.subr.mxu0 0.0
    %127 = vmatpush1.msra.mxu0 0.0
    %128 = vmatprep.subr.mxu0 0.0
    %129 = vmatpush1.msra.mxu0 0.0
    %130 = vmatprep.subr.mxu0 0.0
    %131 = vmatpush1.msra.mxu0 0.0
    %132 = vmatprep.subr.mxu0 0.0
    %133 = vmatpush1.msra.mxu0 0.0
    %134 = vmatprep.subr.mxu0 0.0
    %135 = vmatpush1.msra.mxu0 0.0
    %136 = vmatprep.subr.mxu0 0.0
    %137 = vmatpush1.msra.mxu0 0.0
    %138 = vmatprep.subr.mxu0 0.0
    %139 = vmatpush1.msra.mxu0 0.0
    %140 = vmatprep.subr.mxu0 0.0
    %141 = vmatpush1.msra.mxu0 0.0
    %142 = vmatprep.subr.mxu0 0.0
    %143 = vmatpush1.msra.mxu0 0.0
    %144 = vmatprep.subr.mxu0 0.0
    %145 = vmatpush1.msra.mxu0 0.0
    %146 = vmatprep.subr.mxu0 0.0
    %147 = vmatpush1.msra.mxu0 0.0
    %148 = vmatprep.subr.mxu0 0.0
    %149 = vmatpush1.msra.mxu0 0.0
    %150 = vmatprep.subr.mxu0 0.0
    %151 = vmatpush1.msra.mxu0 0.0
    %152 = vmatprep.subr.mxu0 0.0
    %153 = vmatpush1.msra.mxu0 0.0
    %154 = vmatprep.subr.mxu0 0.0
    %155 = vmatpush1.msra.mxu0 0.0
    %156 = vmatprep.subr.mxu0 0.0
    %157 = vmatpush1.msra.mxu0 0.0
    %158 = vmatprep.subr.mxu0 0.0
    %159 = vmatpush1.msra.mxu0 0.0
    %160 = vmatprep.subr.mxu0 0.0
    %161 = vmatpush1.msra.mxu0 0.0
    %162 = vmatprep.subr.mxu0 0.0
    %163 = vmatpush1.msra.mxu0 0.0
    %164 = vmatprep.subr.mxu0 0.0
    %165 = vmatpush1.msra.mxu0 0.0
    %166 = vmatprep.subr.mxu0 0.0
    %167 = vmatpush1.msra.mxu0 0.0
    %168 = vmatprep.subr.mxu0 0.0
    %169 = vmatpush1.msra.mxu0 0.0
    %170 = vmatprep.subr.mxu0 0.0
    %171 = vmatpush1.msra.mxu0 0.0
    %172 = vmatprep.mubr.f32.mxu0 0.0
    %173 = vmatmul.mubr.f32.gmra.mrb[0].mxu0 %v106
    %v174 = vpop.f32.mrb[0].mxu0
    %v175 = vadd.f32 0.0, %v174
    %v176 = vpop.f32.mrb[0].mxu0
    %177 = vdwg.mxu0
    %v178 = vld [vmem:[%s6] sm:$0xff]
    %v179 = vld [vmem:[%s6 + $0x8] sm:$0xff]
    %v180 = vld [vmem:[%s7] sm:$0xff]
    %v181 = vld [vmem:[%s7 + $0x8] sm:$0xff]
    %v182 = vld [vmem:[%s7 + $0x10] sm:$0xff]
    %v183 = vld [vmem:[%s7 + $0x18] sm:$0xff]
    %v184 = vld [vmem:[#allocation5] sm:$0x1]
    %v185 = vld [vmem:[%s9] sm:$0xff]
    %v186 = vld [vmem:[%s9 + $0x8] sm:$0xff]
    %v187 = vld [vmem:[%s9 + $0x10] sm:$0xff]
    %v188 = vld [vmem:[%s9 + $0x18] sm:$0xff]
    %v189 = vld [vmem:[#allocation7] sm:$0x1]
    %v190 = vld [vmem:[%s11] sm:$0xff]
    %v191 = vld [vmem:[%s11 + $0x8] sm:$0xff]
    %v192 = vld [vmem:[%s11 + $0x10] sm:$0xff]
    %v193 = vld [vmem:[%s11 + $0x18] sm:$0xff]
    %v194 = vld [vmem:[%s12] sm:$0xff]
    %v195 = vld [vmem:[%s12 + $0x8] sm:$0xff]
    %v196 = vld [vmem:[#allocation8] sm:$0x1]
    %v197 = vld [vmem:[%s1] sm:$0x3]
    %v198 = vld [vmem:[%s2] sm:$0x3]
    %v199 = vld [vmem:[%s3] sm:$0x3]
    %v200 = vld [vmem:[%s4] sm:$0xff]
    %v201 = vld [vmem:[%s4 + $0x8] sm:$0xff]
    %v202 = vld [vmem:[%s4 + $0x10] sm:$0xff]
    %v203 = vld [vmem:[%s4 + $0x18] sm:$0xff]
    %v205 = vsel %vm104, %v199, 0
    %207 = vmatprep.subr.mxu0 0.0
    %208 = vmatpush1.msra.mxu0 %v178
    %209 = vmatprep.subr.mxu0 0.0
    %210 = vmatpush1.msra.mxu0 %v179
    %211 = vmatprep.subr.mxu0 0.0
    %212 = vmatpush1.msra.mxu0 0.0
    %213 = vmatprep.subr.mxu0 0.0
    %214 = vmatpush1.msra.mxu0 0.0
    %215 = vmatprep.subr.mxu0 0.0
    %216 = vmatpush1.msra.mxu0 0.0
    %217 = vmatprep.subr.mxu0 0.0
    %218 = vmatpush1.msra.mxu0 0.0
    %219 = vmatprep.subr.mxu0 0.0
    %220 = vmatpush1.msra.mxu0 0.0
    %221 = vmatprep.subr.mxu0 0.0
    %222 = vmatpush1.msra.mxu0 0.0
    %223 = vmatprep.subr.mxu0 0.0
    %224 = vmatpush1.msra.mxu0 0.0
    %225 = vmatprep.subr.mxu0 0.0
    %226 = vmatpush1.msra.mxu0 0.0
    %227 = vmatprep.subr.mxu0 0.0
    %228 = vmatpush1.msra.mxu0 0.0
    %229 = vmatprep.subr.mxu0 0.0
    %230 = vmatpush1.msra.mxu0 0.0
    %231 = vmatprep.subr.mxu0 0.0
    %232 = vmatpush1.msra.mxu0 0.0
    %233 = vmatprep.subr.mxu0 0.0
    %234 = vmatpush1.msra.mxu0 0.0
    %235 = vmatprep.subr.mxu0 0.0
    %236 = vmatpush1.msra.mxu0 0.0
    %237 = vmatprep.subr.mxu0 0.0
    %238 = vmatpush1.msra.mxu0 0.0
    %239 = vmatprep.subr.mxu0 0.0
    %240 = vmatpush1.msra.mxu0 0.0
    %241 = vmatprep.subr.mxu0 0.0
    %242 = vmatpush1.msra.mxu0 0.0
    %243 = vmatprep.subr.mxu0 0.0
    %244 = vmatpush1.msra.mxu0 0.0
    %245 = vmatprep.subr.mxu0 0.0
    %246 = vmatpush1.msra.mxu0 0.0
    %247 = vmatprep.subr.mxu0 0.0
    %248 = vmatpush1.msra.mxu0 0.0
    %249 = vmatprep.subr.mxu0 0.0
    %250 = vmatpush1.msra.mxu0 0.0
    %251 = vmatprep.subr.mxu0 0.0
    %252 = vmatpush1.msra.mxu0 0.0
    %253 = vmatprep.subr.mxu0 0.0
    %254 = vmatpush1.msra.mxu0 0.0
    %255 = vmatprep.subr.mxu0 0.0
    %256 = vmatpush1.msra.mxu0 0.0
    %257 = vmatprep.subr.mxu0 0.0
    %258 = vmatpush1.msra.mxu0 0.0
    %259 = vmatprep.subr.mxu0 0.0
    %260 = vmatpush1.msra.mxu0 0.0
    %261 = vmatprep.subr.mxu0 0.0
    %262 = vmatpush1.msra.mxu0 0.0
    %263 = vmatprep.subr.mxu0 0.0
    %264 = vmatpush1.msra.mxu0 0.0
    %265 = vmatprep.subr.mxu0 0.0
    %266 = vmatpush1.msra.mxu0 0.0
    %267 = vmatprep.subr.mxu0 0.0
    %268 = vmatpush1.msra.mxu0 0.0
    %269 = vmatprep.subr.mxu0 0.0
    %270 = vmatpush1.msra.mxu0 0.0
    %271 = vmatprep.mubr.f32.mxu0 0.0
    %272 = vmatmul.mubr.f32.gmra.mrb[0].mxu0 %v205
    %v273 = vpop.f32.mrb[0].mxu0
    %v274 = vadd.f32 0.0, %v273
    %v275 = vpop.f32.mrb[0].mxu0
    %276 = vdwg.mxu0
    %v277 = vadd.f32 %v175, %v274
    %vm278 = vcmask 261120
    %v280 = vsel %vm278, %v197, 0
    %282 = vmatprep.subr.mxu0 0.0
    %283 = vmatpush1.msra.mxu0 %v180
    %284 = vmatprep.subr.mxu0 0.0
    %285 = vmatpush1.msra.mxu0 %v181
    %286 = vmatprep.subr.mxu0 0.0
    %287 = vmatpush1.msra.mxu0 %v182
    %288 = vmatprep.subr.mxu0 0.0
    %289 = vmatpush1.msra.mxu0 %v183
    %290 = vmatprep.subr.mxu0 0.0
    %291 = vmatpush1.msra.mxu0 0.0
    %292 = vmatprep.subr.mxu0 0.0
    %293 = vmatpush1.msra.mxu0 0.0
    %294 = vmatprep.subr.mxu0 0.0
    %295 = vmatpush1.msra.mxu0 0.0
    %296 = vmatprep.subr.mxu0 0.0
    %297 = vmatpush1.msra.mxu0 0.0
    %298 = vmatprep.subr.mxu0 0.0
    %299 = vmatpush1.msra.mxu0 0.0
    %300 = vmatprep.subr.mxu0 0.0
    %301 = vmatpush1.msra.mxu0 0.0
    %302 = vmatprep.subr.mxu0 0.0
    %303 = vmatpush1.msra.mxu0 0.0
    %304 = vmatprep.subr.mxu0 0.0
    %305 = vmatpush1.msra.mxu0 0.0
    %306 = vmatprep.subr.mxu0 0.0
    %307 = vmatpush1.msra.mxu0 0.0
    %308 = vmatprep.subr.mxu0 0.0
    %309 = vmatpush1.msra.mxu0 0.0
    %310 = vmatprep.subr.mxu0 0.0
    %311 = vmatpush1.msra.mxu0 0.0
    %312 = vmatprep.subr.mxu0 0.0
    %313 = vmatpush1.msra.mxu0 0.0
    %314 = vmatprep.subr.mxu0 0.0
    %315 = vmatpush1.msra.mxu0 0.0
    %316 = vmatprep.subr.mxu0 0.0
    %317 = vmatpush1.msra.mxu0 0.0
    %318 = vmatprep.subr.mxu0 0.0
    %319 = vmatpush1.msra.mxu0 0.0
    %320 = vmatprep.subr.mxu0 0.0
    %321 = vmatpush1.msra.mxu0 0.0
    %322 = vmatprep.subr.mxu0 0.0
    %323 = vmatpush1.msra.mxu0 0.0
    %324 = vmatprep.subr.mxu0 0.0
    %325 = vmatpush1.msra.mxu0 0.0
    %326 = vmatprep.subr.mxu0 0.0
    %327 = vmatpush1.msra.mxu0 0.0
    %328 = vmatprep.subr.mxu0 0.0
    %329 = vmatpush1.msra.mxu0 0.0
    %330 = vmatprep.subr.mxu0 0.0
    %331 = vmatpush1.msra.mxu0 0.0
    %332 = vmatprep.subr.mxu0 0.0
    %333 = vmatpush1.msra.mxu0 0.0
    %334 = vmatprep.subr.mxu0 0.0
    %335 = vmatpush1.msra.mxu0 0.0
    %336 = vmatprep.subr.mxu0 0.0
    %337 = vmatpush1.msra.mxu0 0.0
    %338 = vmatprep.subr.mxu0 0.0
    %339 = vmatpush1.msra.mxu0 0.0
    %340 = vmatprep.subr.mxu0 0.0
    %341 = vmatpush1.msra.mxu0 0.0
    %342 = vmatprep.subr.mxu0 0.0
    %343 = vmatpush1.msra.mxu0 0.0
    %344 = vmatprep.subr.mxu0 0.0
    %345 = vmatpush1.msra.mxu0 0.0
    %346 = vmatprep.mubr.f32.mxu0 0.0
    %347 = vmatmul.mubr.f32.gmra.mrb[0].mxu0 %v280
    %v348 = vpop.f32.mrb[0].mxu0
    %v349 = vadd.f32 0.0, %v348
    %v350 = vpop.f32.mrb[0].mxu0
    %351 = vdwg.mxu0
    %v352 = vadd.f32 %v277, %v349
    %v354 = vlaneseq
    %v355 = vshrl.u32 %v354, 7
    %v356 = vsub.s32 0, %v355
    %v357 = vrot.slane %v184, %v356
    %v359 = vadd.f32 %v352, %v357
    %v360 = vxor.u32 %v359, 2147483648
    %v361 = vmul.f32 %v360, 1.442695
    %v362 = vpow.pop %v361
    %v363 = vadd.f32 %v362, 1.0
    %v364 = vrcp.pop %v363
    %v365 = vmul.f32 1.0, %v364
    %v366 = vtanh.pop %v359
    %368 = vrot.lane.b32.xlu0 %v198, 32
    %v369 = vpop.permute.xlu0 %368
    %v371 = vmul.f32 %v365, %v369
    %373 = vrot.lane.b32.xlu0 %v366, 64
    %v374 = vpop.permute.xlu0 %373
    %v376 = vmul.f32 %v365, %v374
    %378 = vrot.lane.b32.xlu0 %v376, 32
    %v379 = vpop.permute.xlu0 %378
    %v381 = vadd.f32 %v371, %v379
    %v382 = vtanh.pop %v381
    %384 = vrot.lane.b32.xlu0 %v382, 64
    %v385 = vpop.permute.xlu0 %384
    %v387 = vmul.f32 %v365, %v385
    %v389 = vlaneseq
    %v390 = vshrl.u32 %v389, 7
    %v391 = vsub.s32 0, %v390
    %v392 = vrot.slane %v189, %v391
    %395 = vrot.lane.b32.xlu0 %v387, 32
    %v396 = vpop.permute.xlu0 %395
    %v397 = vsel %vm278, %v396, 0
    %399 = vmatprep.subr.mxu0 0.0
    %400 = vmatpush1.msra.mxu0 %v185
    %401 = vmatprep.subr.mxu0 0.0
    %402 = vmatpush1.msra.mxu0 %v186
    %403 = vmatprep.subr.mxu0 0.0
    %404 = vmatpush1.msra.mxu0 %v187
    %405 = vmatprep.subr.mxu0 0.0
    %406 = vmatpush1.msra.mxu0 %v188
    %407 = vmatprep.subr.mxu0 0.0
    %408 = vmatpush1.msra.mxu0 0.0
    %409 = vmatprep.subr.mxu0 0.0
    %410 = vmatpush1.msra.mxu0 0.0
    %411 = vmatprep.subr.mxu0 0.0
    %412 = vmatpush1.msra.mxu0 0.0
    %413 = vmatprep.subr.mxu0 0.0
    %414 = vmatpush1.msra.mxu0 0.0
    %415 = vmatprep.subr.mxu0 0.0
    %416 = vmatpush1.msra.mxu0 0.0
    %417 = vmatprep.subr.mxu0 0.0
    %418 = vmatpush1.msra.mxu0 0.0
    %419 = vmatprep.subr.mxu0 0.0
    %420 = vmatpush1.msra.mxu0 0.0
    %421 = vmatprep.subr.mxu0 0.0
    %422 = vmatpush1.msra.mxu0 0.0
    %423 = vmatprep.subr.mxu0 0.0
    %424 = vmatpush1.msra.mxu0 0.0
    %425 = vmatprep.subr.mxu0 0.0
    %426 = vmatpush1.msra.mxu0 0.0
    %427 = vmatprep.subr.mxu0 0.0
    %428 = vmatpush1.msra.mxu0 0.0
    %429 = vmatprep.subr.mxu0 0.0
    %430 = vmatpush1.msra.mxu0 0.0
    %431 = vmatprep.subr.mxu0 0.0
    %432 = vmatpush1.msra.mxu0 0.0
    %433 = vmatprep.subr.mxu0 0.0
    %434 = vmatpush1.msra.mxu0 0.0
    %435 = vmatprep.subr.mxu0 0.0
    %436 = vmatpush1.msra.mxu0 0.0
    %437 = vmatprep.subr.mxu0 0.0
    %438 = vmatpush1.msra.mxu0 0.0
    %439 = vmatprep.subr.mxu0 0.0
    %440 = vmatpush1.msra.mxu0 0.0
    %441 = vmatprep.subr.mxu0 0.0
    %442 = vmatpush1.msra.mxu0 0.0
    %443 = vmatprep.subr.mxu0 0.0
    %444 = vmatpush1.msra.mxu0 0.0
    %445 = vmatprep.subr.mxu0 0.0
    %446 = vmatpush1.msra.mxu0 0.0
    %447 = vmatprep.subr.mxu0 0.0
    %448 = vmatpush1.msra.mxu0 0.0
    %449 = vmatprep.subr.mxu0 0.0
    %450 = vmatpush1.msra.mxu0 0.0
    %451 = vmatprep.subr.mxu0 0.0
    %452 = vmatpush1.msra.mxu0 0.0
    %453 = vmatprep.subr.mxu0 0.0
    %454 = vmatpush1.msra.mxu0 0.0
    %455 = vmatprep.subr.mxu0 0.0
    %456 = vmatpush1.msra.mxu0 0.0
    %457 = vmatprep.subr.mxu0 0.0
    %458 = vmatpush1.msra.mxu0 0.0
    %459 = vmatprep.subr.mxu0 0.0
    %460 = vmatpush1.msra.mxu0 0.0
    %461 = vmatprep.subr.mxu0 0.0
    %462 = vmatpush1.msra.mxu0 0.0
    %463 = vmatprep.mubr.f32.mxu0 0.0
    %464 = vmatmul.mubr.f32.gmra.mrb[0].mxu0 %v397
    %v465 = vpop.f32.mrb[0].mxu0
    %v466 = vadd.f32 %v392, %v465
    %v467 = vpop.f32.mrb[0].mxu0
    %468 = vdwg.mxu0
    %v469 = vxor.u32 %v466, 2147483648
    %v470 = vmul.f32 %v469, 1.442695
    %v471 = vpow.pop %v470
    %v472 = vadd.f32 %v471, 1.0
    %v473 = vrcp.pop %v472
    %v474 = vmul.f32 1.0, %v473
    %v475 = vmul.f32 %v200, %v200
    %v476 = vmul.f32 %v201, %v201
    %v477 = vmul.f32 %v202, %v202
    %v478 = vmul.f32 %v203, %v203
    %vm479 = vcmask 64512
    %v480 = vsel %vm479, %v475, 0.0
    %481 = vadd.xlane.f32.xlu0 %v480
    %v482 = vpop.xlane.xlu0 %481
    %v483 = vsel %vm479, %v476, 0.0
    %484 = vadd.xlane.f32.xlu0 %v483
    %v485 = vpop.xlane.xlu0 %484
    %v486 = vsel %vm479, %v477, 0.0
    %487 = vadd.xlane.f32.xlu0 %v486
    %v488 = vpop.xlane.xlu0 %487
    %v489 = vsel %vm479, %v478, 0.0
    %490 = vadd.xlane.f32.xlu0 %v489
    %v491 = vpop.xlane.xlu0 %490
    %v492 = vadd.f32 %v482, 1e-06
    %v493 = vadd.f32 %v485, 1e-06
    %v494 = vadd.f32 %v488, 1e-06
    %v495 = vadd.f32 %v491, 1e-06
    %v496 = vrsqrt.pop %v492
    %v497 = vrsqrt.pop %v493
    %v498 = vrsqrt.pop %v494
    %v499 = vrsqrt.pop %v495
    %v500 = vmul.f32 %v200, %v496
    %v501 = vmul.f32 %v201, %v497
    %v502 = vmul.f32 %v202, %v498
    %v503 = vmul.f32 %v203, %v499
    %v504 = vmul.f32 %v466, %v466
    %506 = vrot.lane.b32.xlu0 %v504, 110
    %v507 = vpop.permute.xlu0 %506
    %vm509 = vcmask 58368
    %v510 = vsel %vm509, %v507, 0.0
    %511 = vadd.xlane.f32.xlu0 %v510
    %v512 = vpop.xlane.xlu0 %511
    %v513 = vadd.f32 %v512, 1e-06
    %v514 = vrsqrt.pop %v513
    %v515 = vmul.f32 %v466, %v514
    %v518 = vunpack.c.l.s4 1966171168
    %v519 = vunpack.c.0.s8 %v518
    %v520 = vlaneseq
    %v521 = vshrl.u32 %v520, 7
    %v522 = vsub.s32 %v519, %v521
    %v523 = vrot.slane %v515, %v522
    %v524 = vcombine.high %v523, %v523
    %v526 = vunpack.c.l.s4 1966171168
    %v527 = vunpack.c.0.s8 %v526
    %v528 = vlaneseq
    %v529 = vshrl.u32 %v528, 7
    %v530 = vsub.s32 %v527, %v529
    %v531 = vrot.slane %v523, %v530
    %v533 = vunpack.c.l.s4 1966171168
    %v534 = vunpack.c.0.s8 %v533
    %v535 = vlaneseq
    %v536 = vshrl.u32 %v535, 7
    %v537 = vsub.s32 %v534, %v536
    %v538 = vrot.slane %v524, %v537
    %v539 = vlaneseq
    %v540 = vshrl.u32 %v539, 7
    %v541 = vsub.s32 0, %v540
    %v542 = vrot.slane %v531, %v541
    %543 = vrot.lane.b32.xlu0 %v542, 110
    %v544 = vpop.permute.xlu0 %543
    %v545 = vsel %vm479, %v544, 0
    %v548 = vsel %vm479, %v500, 0
    %v551 = vsel %vm479, %v501, 0
    %553 = vmatprep.subr.mxu0 0.0
    %554 = vmatpush1.xpose.msra.mxu0 %v548
    %555 = vmatprep.subr.mxu0 0.0
    %556 = vmatpush1.xpose.msra.mxu0 %v551
    %557 = vmatprep.subr.mxu0 0.0
    %558 = vmatpush1.xpose.msra.mxu0 0.0
    %559 = vmatprep.subr.mxu0 0.0
    %560 = vmatpush1.xpose.msra.mxu0 0.0
    %561 = vmatprep.subr.mxu0 0.0
    %562 = vmatpush1.xpose.msra.mxu0 0.0
    %563 = vmatprep.subr.mxu0 0.0
    %564 = vmatpush1.xpose.msra.mxu0 0.0
    %565 = vmatprep.subr.mxu0 0.0
    %566 = vmatpush1.xpose.msra.mxu0 0.0
    %567 = vmatprep.subr.mxu0 0.0
    %568 = vmatpush1.xpose.msra.mxu0 0.0
    %569 = vmatprep.subr.mxu0 0.0
    %570 = vmatpush1.xpose.msra.mxu0 0.0
    %571 = vmatprep.subr.mxu0 0.0
    %572 = vmatpush1.xpose.msra.mxu0 0.0
    %573 = vmatprep.subr.mxu0 0.0
    %574 = vmatpush1.xpose.msra.mxu0 0.0
    %575 = vmatprep.subr.mxu0 0.0
    %576 = vmatpush1.xpose.msra.mxu0 0.0
    %577 = vmatprep.subr.mxu0 0.0
    %578 = vmatpush1.xpose.msra.mxu0 0.0
    %579 = vmatprep.subr.mxu0 0.0
    %580 = vmatpush1.xpose.msra.mxu0 0.0
    %581 = vmatprep.subr.mxu0 0.0
    %582 = vmatpush1.xpose.msra.mxu0 0.0
    %583 = vmatprep.subr.mxu0 0.0
    %584 = vmatpush1.xpose.msra.mxu0 0.0
    %585 = vmatprep.subr.mxu0 0.0
    %586 = vmatpush1.xpose.msra.mxu0 0.0
    %587 = vmatprep.subr.mxu0 0.0
    %588 = vmatpush1.xpose.msra.mxu0 0.0
    %589 = vmatprep.subr.mxu0 0.0
    %590 = vmatpush1.xpose.msra.mxu0 0.0
    %591 = vmatprep.subr.mxu0 0.0
    %592 = vmatpush1.xpose.msra.mxu0 0.0
    %593 = vmatprep.subr.mxu0 0.0
    %594 = vmatpush1.xpose.msra.mxu0 0.0
    %595 = vmatprep.subr.mxu0 0.0
    %596 = vmatpush1.xpose.msra.mxu0 0.0
    %597 = vmatprep.subr.mxu0 0.0
    %598 = vmatpush1.xpose.msra.mxu0 0.0
    %599 = vmatprep.subr.mxu0 0.0
    %600 = vmatpush1.xpose.msra.mxu0 0.0
    %601 = vmatprep.subr.mxu0 0.0
    %602 = vmatpush1.xpose.msra.mxu0 0.0
    %603 = vmatprep.subr.mxu0 0.0
    %604 = vmatpush1.xpose.msra.mxu0 0.0
    %605 = vmatprep.subr.mxu0 0.0
    %606 = vmatpush1.xpose.msra.mxu0 0.0
    %607 = vmatprep.subr.mxu0 0.0
    %608 = vmatpush1.xpose.msra.mxu0 0.0
    %609 = vmatprep.subr.mxu0 0.0
    %610 = vmatpush1.xpose.msra.mxu0 0.0
    %611 = vmatprep.subr.mxu0 0.0
    %612 = vmatpush1.xpose.msra.mxu0 0.0
    %613 = vmatprep.subr.mxu0 0.0
    %614 = vmatpush1.xpose.msra.mxu0 0.0
    %615 = vmatprep.subr.mxu0 0.0
    %616 = vmatpush1.xpose.msra.mxu0 0.0
    %617 = vmatprep.mubr.f32.mxu0 0.0
    %618 = vmatmul.mubr.f32.gmra.mrb[0].mxu0 %v545
    %v619 = vpop.f32.mrb[0].mxu0
    %v620 = vadd.f32 0.0, %v619
    %v621 = vpop.f32.mrb[0].mxu0
    %622 = vdwg.mxu0
    %v623 = vlaneseq
    %v624 = vshrl.u32 %v623, 7
    %v625 = vsub.s32 0, %v624
    %v626 = vrot.slane %v538, %v625
    %627 = vrot.lane.b32.xlu0 %v626, 110
    %v628 = vpop.permute.xlu0 %627
    %v629 = vsel %vm479, %v628, 0
    %v632 = vsel %vm479, %v502, 0
    %v635 = vsel %vm479, %v503, 0
    %637 = vmatprep.subr.mxu0 0.0
    %638 = vmatpush1.xpose.msra.mxu0 %v632
    %639 = vmatprep.subr.mxu0 0.0
    %640 = vmatpush1.xpose.msra.mxu0 %v635
    %641 = vmatprep.subr.mxu0 0.0
    %642 = vmatpush1.xpose.msra.mxu0 0.0
    %643 = vmatprep.subr.mxu0 0.0
    %644 = vmatpush1.xpose.msra.mxu0 0.0
    %645 = vmatprep.subr.mxu0 0.0
    %646 = vmatpush1.xpose.msra.mxu0 0.0
    %647 = vmatprep.subr.mxu0 0.0
    %648 = vmatpush1.xpose.msra.mxu0 0.0
    %649 = vmatprep.subr.mxu0 0.0
    %650 = vmatpush1.xpose.msra.mxu0 0.0
    %651 = vmatprep.subr.mxu0 0.0
    %652 = vmatpush1.xpose.msra.mxu0 0.0
    %653 = vmatprep.subr.mxu0 0.0
    %654 = vmatpush1.xpose.msra.mxu0 0.0
    %655 = vmatprep.subr.mxu0 0.0
    %656 = vmatpush1.xpose.msra.mxu0 0.0
    %657 = vmatprep.subr.mxu0 0.0
    %658 = vmatpush1.xpose.msra.mxu0 0.0
    %659 = vmatprep.subr.mxu0 0.0
    %660 = vmatpush1.xpose.msra.mxu0 0.0
    %661 = vmatprep.subr.mxu0 0.0
    %662 = vmatpush1.xpose.msra.mxu0 0.0
    %663 = vmatprep.subr.mxu0 0.0
    %664 = vmatpush1.xpose.msra.mxu0 0.0
    %665 = vmatprep.subr.mxu0 0.0
    %666 = vmatpush1.xpose.msra.mxu0 0.0
    %667 = vmatprep.subr.mxu0 0.0
    %668 = vmatpush1.xpose.msra.mxu0 0.0
    %669 = vmatprep.subr.mxu0 0.0
    %670 = vmatpush1.xpose.msra.mxu0 0.0
    %671 = vmatprep.subr.mxu0 0.0
    %672 = vmatpush1.xpose.msra.mxu0 0.0
    %673 = vmatprep.subr.mxu0 0.0
    %674 = vmatpush1.xpose.msra.mxu0 0.0
    %675 = vmatprep.subr.mxu0 0.0
    %676 = vmatpush1.xpose.msra.mxu0 0.0
    %677 = vmatprep.subr.mxu0 0.0
    %678 = vmatpush1.xpose.msra.mxu0 0.0
    %679 = vmatprep.subr.mxu0 0.0
    %680 = vmatpush1.xpose.msra.mxu0 0.0
    %681 = vmatprep.subr.mxu0 0.0
    %682 = vmatpush1.xpose.msra.mxu0 0.0
    %683 = vmatprep.subr.mxu0 0.0
    %684 = vmatpush1.xpose.msra.mxu0 0.0
    %685 = vmatprep.subr.mxu0 0.0
    %686 = vmatpush1.xpose.msra.mxu0 0.0
    %687 = vmatprep.subr.mxu0 0.0
    %688 = vmatpush1.xpose.msra.mxu0 0.0
    %689 = vmatprep.subr.mxu0 0.0
    %690 = vmatpush1.xpose.msra.mxu0 0.0
    %691 = vmatprep.subr.mxu0 0.0
    %692 = vmatpush1.xpose.msra.mxu0 0.0
    %693 = vmatprep.subr.mxu0 0.0
    %694 = vmatpush1.xpose.msra.mxu0 0.0
    %695 = vmatprep.subr.mxu0 0.0
    %696 = vmatpush1.xpose.msra.mxu0 0.0
    %697 = vmatprep.subr.mxu0 0.0
    %698 = vmatpush1.xpose.msra.mxu0 0.0
    %699 = vmatprep.subr.mxu0 0.0
    %700 = vmatpush1.xpose.msra.mxu0 0.0
    %701 = vmatprep.mubr.f32.mxu0 0.0
    %702 = vmatmul.mubr.f32.gmra.mrb[0].mxu0 %v629
    %v703 = vpop.f32.mrb[0].mxu0
    %v704 = vadd.f32 0.0, %v703
    %v705 = vpop.f32.mrb[0].mxu0
    %706 = vdwg.mxu0
    %v707 = vmax.f32 %v466, 0.0
    %v708 = vand.u32 2147483647, %v466
    %v709 = vsub.f32 0.0, %v708
    %v710 = vmul.f32 %v709, 1.442695
    %v711 = vpow.pop %v710
    %v712 = vadd.f32 %v711, 1.0
    %v713 = vlog2.pop %v712
    %v714 = vmul.f32 %v713, 0.6931472
    %v715 = vadd.f32 %v707, %v714
    %v716 = vadd.f32 %v715, 1.0
    %718 = vset.pattern.permute.xlu0 26
    %719 = vperm.xlu0 %718, %v716
    %v720 = vpop.permute.xlu0 %719
    %v724 = vrot.slane %v704, 7
    %vm725 = vcmask 1041409
    %v726 = vsel %vm725, %v724, %v620
    %v728 = vmul.f32 %v720, %v726
    %vm729 = vcmask 123904
    %v730 = vsel %vm729, %v728, -inf
    %731 = vmax.xlane.f32.xlu0 %v730
    %v732 = vpop.xlane.xlu0 %731
    %v733 = vsub.f32 %v728, %v732
    %v734 = vmul.f32 %v733, 1.442695
    %v735 = vpow.pop %v734
    %v736 = vsel %vm729, %v735, 0.0
    %737 = vadd.xlane.f32.xlu0 %v736
    %v738 = vpop.xlane.xlu0 %737
    %v739 = vrcp.pop %v738
    %v740 = vmul.f32 %v735, %v739
    %742 = vset.pattern.permute.xlu0 43
    %743 = vperm.xlu0 %742, %v474
    %v744 = vpop.permute.xlu0 %743
    %v746 = vmul.f32 %v744, %v740
    %v747 = vlaneseq
    %v748 = vshrl.u32 %v747, 7
    %v749 = vsub.s32 0, %v748
    %v750 = vrot.slane %v746, %v749
    %752 = vbcast.lane.b32.xlu0 %v750, 256
    %v753 = vpop.permute.xlu0 %752
    %s755 = sor.u32 256, 8
    %756 = vbcast.lane.b32.xlu0 %v750, %s755
    %v757 = vpop.permute.xlu0 %756
    %v758 = vlaneseq
    %v759 = vshrl.u32 %v758, 7
    %v760 = vsub.s32 1, %v759
    %v761 = vrot.slane %v746, %v760
    %763 = vbcast.lane.b32.xlu0 %v761, 256
    %v764 = vpop.permute.xlu0 %763
    %s766 = sor.u32 256, 8
    %767 = vbcast.lane.b32.xlu0 %v761, %s766
    %v768 = vpop.permute.xlu0 %767
    %v770 = vunpack.c.l.s4 1966171168
    %v771 = vunpack.c.0.s8 %v770
    %v772 = vlaneseq
    %v773 = vshrl.u32 %v772, 7
    %v774 = vsub.s32 %v771, %v773
    %v775 = vrot.slane %v474, %v774
    %v776 = vcombine.high %v775, %v775
    %v778 = vunpack.c.l.s4 1966171168
    %v779 = vunpack.c.0.s8 %v778
    %v780 = vlaneseq
    %v781 = vshrl.u32 %v780, 7
    %v782 = vsub.s32 %v779, %v781
    %v783 = vrot.slane %v775, %v782
    %v785 = vunpack.c.l.s4 1966171168
    %v786 = vunpack.c.0.s8 %v785
    %v787 = vlaneseq
    %v788 = vshrl.u32 %v787, 7
    %v789 = vsub.s32 %v786, %v788
    %v790 = vrot.slane %v776, %v789
    %v791 = vlaneseq
    %v792 = vshrl.u32 %v791, 7
    %v793 = vsub.s32 0, %v792
    %v794 = vrot.slane %v783, %v793
    %v795 = vlaneseq
    %v796 = vshrl.u32 %v795, 7
    %v797 = vsub.s32 0, %v796
    %v798 = vrot.slane %v790, %v797
    %v801 = vmul.f32 %v753, %v794
    %v802 = vmul.f32 %v757, %v794
    %v803 = vmul.f32 %v764, %v798
    %v804 = vmul.f32 %v768, %v798
    %v805 = vsub.f32 1.0, %v801
    %v806 = vsub.f32 1.0, %v802
    %v807 = vsub.f32 1.0, %v803
    %v808 = vsub.f32 1.0, %v804
    %813 = vrot.lane.b32.xlu0 %v805, 101
    %v814 = vpop.permute.xlu0 %813
    %815 = vrot.lane.b32.xlu0 %v806, 101
    %v816 = vpop.permute.xlu0 %815
    %817 = vrot.lane.b32.xlu0 %v807, 101
    %v818 = vpop.permute.xlu0 %817
    %819 = vrot.lane.b32.xlu0 %v808, 101
    %v820 = vpop.permute.xlu0 %819
    %v825 = vmul.f32 %v200, %v814
    %v826 = vmul.f32 %v201, %v816
    %v827 = vmul.f32 %v202, %v818
    %v828 = vmul.f32 %v203, %v820
    %833 = vrot.lane.b32.xlu0 %v801, 93
    %v834 = vpop.permute.xlu0 %833
    %835 = vrot.lane.b32.xlu0 %v802, 93
    %v836 = vpop.permute.xlu0 %835
    %837 = vrot.lane.b32.xlu0 %v803, 93
    %v838 = vpop.permute.xlu0 %837
    %839 = vrot.lane.b32.xlu0 %v804, 93
    %v840 = vpop.permute.xlu0 %839
    %v845 = vadd.f32 %v825, %v834
    %v846 = vadd.f32 %v826, %v836
    %v847 = vadd.f32 %v827, %v838
    %v848 = vadd.f32 %v828, %v840
    %v849 = vmul.f32 %v845, %v845
    %v850 = vmul.f32 %v846, %v846
    %v851 = vmul.f32 %v847, %v847
    %v852 = vmul.f32 %v848, %v848
    %v853 = vsel %vm479, %v849, 0.0
    %854 = vadd.xlane.f32.xlu0 %v853
    %v855 = vpop.xlane.xlu0 %854
    %v856 = vsel %vm479, %v850, 0.0
    %857 = vadd.xlane.f32.xlu0 %v856
    %v858 = vpop.xlane.xlu0 %857
    %v859 = vsel %vm479, %v851, 0.0
    %860 = vadd.xlane.f32.xlu0 %v859
    %v861 = vpop.xlane.xlu0 %860
    %v862 = vsel %vm479, %v852, 0.0
    %863 = vadd.xlane.f32.xlu0 %v862
    %v864 = vpop.xlane.xlu0 %863
    %v865 = vadd.f32 %v855, 1e-06
    %v866 = vadd.f32 %v858, 1e-06
    %v867 = vadd.f32 %v861, 1e-06
    %v868 = vadd.f32 %v864, 1e-06
    %v869 = vrsqrt.pop %v865
    %v870 = vrsqrt.pop %v866
    %v871 = vrsqrt.pop %v867
    %v872 = vrsqrt.pop %v868
    %v873 = vmul.f32 %v845, %v869
    %v874 = vmul.f32 %v846, %v870
    %v875 = vmul.f32 %v847, %v871
    %v876 = vmul.f32 %v848, %v872
    %v879 = vunpack.c.l.s4 1966171168
    %v880 = vunpack.c.0.s8 %v879
    %v881 = vlaneseq
    %v882 = vshrl.u32 %v881, 7
    %v883 = vsub.s32 %v880, %v882
    %v884 = vrot.slane %v466, %v883
    %v885 = vcombine.high %v884, %v884
    %v887 = vunpack.c.l.s4 1966171168
    %v888 = vunpack.c.0.s8 %v887
    %v889 = vlaneseq
    %v890 = vshrl.u32 %v889, 7
    %v891 = vsub.s32 %v888, %v890
    %v892 = vrot.slane %v884, %v891
    %v894 = vunpack.c.l.s4 1966171168
    %v895 = vunpack.c.0.s8 %v894
    %v896 = vlaneseq
    %v897 = vshrl.u32 %v896, 7
    %v898 = vsub.s32 %v895, %v897
    %v899 = vrot.slane %v885, %v898
    %v902 = vlaneseq
    %v903 = vshrl.u32 %v902, 7
    %v904 = vsub.s32 0, %v903
    %v905 = vrot.slane %v892, %v904
    %v906 = vlaneseq
    %v907 = vshrl.u32 %v906, 7
    %v908 = vsub.s32 0, %v907
    %v909 = vrot.slane %v899, %v908
    %910 = vrot.lane.b32.xlu0 %v905, 120
    %v911 = vpop.permute.xlu0 %910
    %912 = vrot.lane.b32.xlu0 %v909, 120
    %v913 = vpop.permute.xlu0 %912
    %vm916 = vcmask 1040384
    %v917 = vsel %vm916, %v892, %v911
    %v918 = vsel %vm916, %v899, %v913
    %v919 = vmul.f32 %v917, %v917
    %v920 = vmul.f32 %v918, %v918
    %v921 = vsel %vm509, %v919, 0.0
    %922 = vadd.xlane.f32.xlu0 %v921
    %v923 = vpop.xlane.xlu0 %922
    %v924 = vsel %vm509, %v920, 0.0
    %925 = vadd.xlane.f32.xlu0 %v924
    %v926 = vpop.xlane.xlu0 %925
    %v927 = vadd.f32 %v923, 1e-06
    %v928 = vadd.f32 %v926, 1e-06
    %v929 = vrsqrt.pop %v927
    %v930 = vrsqrt.pop %v928
    %v931 = vmul.f32 %v917, %v929
    %v932 = vmul.f32 %v918, %v930
    %v934 = vsel %vm479, %v931, 0
    %v937 = vsel %vm479, %v873, 0
    %v940 = vsel %vm479, %v874, 0
    %942 = vmatprep.subr.mxu0 0.0
    %943 = vmatpush1.xpose.msra.mxu0 %v937
    %944 = vmatprep.subr.mxu0 0.0
    %945 = vmatpush1.xpose.msra.mxu0 %v940
    %946 = vmatprep.subr.mxu0 0.0
    %947 = vmatpush1.xpose.msra.mxu0 0.0
    %948 = vmatprep.subr.mxu0 0.0
    %949 = vmatpush1.xpose.msra.mxu0 0.0
    %950 = vmatprep.subr.mxu0 0.0
    %951 = vmatpush1.xpose.msra.mxu0 0.0
    %952 = vmatprep.subr.mxu0 0.0
    %953 = vmatpush1.xpose.msra.mxu0 0.0
    %954 = vmatprep.subr.mxu0 0.0
    %955 = vmatpush1.xpose.msra.mxu0 0.0
    %956 = vmatprep.subr.mxu0 0.0
    %957 = vmatpush1.xpose.msra.mxu0 0.0
    %958 = vmatprep.subr.mxu0 0.0
    %959 = vmatpush1.xpose.msra.mxu0 0.0
    %960 = vmatprep.subr.mxu0 0.0
    %961 = vmatpush1.xpose.msra.mxu0 0.0
    %962 = vmatprep.subr.mxu0 0.0
    %963 = vmatpush1.xpose.msra.mxu0 0.0
    %964 = vmatprep.subr.mxu0 0.0
    %965 = vmatpush1.xpose.msra.mxu0 0.0
    %966 = vmatprep.subr.mxu0 0.0
    %967 = vmatpush1.xpose.msra.mxu0 0.0
    %968 = vmatprep.subr.mxu0 0.0
    %969 = vmatpush1.xpose.msra.mxu0 0.0
    %970 = vmatprep.subr.mxu0 0.0
    %971 = vmatpush1.xpose.msra.mxu0 0.0
    %972 = vmatprep.subr.mxu0 0.0
    %973 = vmatpush1.xpose.msra.mxu0 0.0
    %974 = vmatprep.subr.mxu0 0.0
    %975 = vmatpush1.xpose.msra.mxu0 0.0
    %976 = vmatprep.subr.mxu0 0.0
    %977 = vmatpush1.xpose.msra.mxu0 0.0
    %978 = vmatprep.subr.mxu0 0.0
    %979 = vmatpush1.xpose.msra.mxu0 0.0
    %980 = vmatprep.subr.mxu0 0.0
    %981 = vmatpush1.xpose.msra.mxu0 0.0
    %982 = vmatprep.subr.mxu0 0.0
    %983 = vmatpush1.xpose.msra.mxu0 0.0
    %984 = vmatprep.subr.mxu0 0.0
    %985 = vmatpush1.xpose.msra.mxu0 0.0
    %986 = vmatprep.subr.mxu0 0.0
    %987 = vmatpush1.xpose.msra.mxu0 0.0
    %988 = vmatprep.subr.mxu0 0.0
    %989 = vmatpush1.xpose.msra.mxu0 0.0
    %990 = vmatprep.subr.mxu0 0.0
    %991 = vmatpush1.xpose.msra.mxu0 0.0
    %992 = vmatprep.subr.mxu0 0.0
    %993 = vmatpush1.xpose.msra.mxu0 0.0
    %994 = vmatprep.subr.mxu0 0.0
    %995 = vmatpush1.xpose.msra.mxu0 0.0
    %996 = vmatprep.subr.mxu0 0.0
    %997 = vmatpush1.xpose.msra.mxu0 0.0
    %998 = vmatprep.subr.mxu0 0.0
    %999 = vmatpush1.xpose.msra.mxu0 0.0
    %1000 = vmatprep.subr.mxu0 0.0
    %1001 = vmatpush1.xpose.msra.mxu0 0.0
    %1002 = vmatprep.subr.mxu0 0.0
    %1003 = vmatpush1.xpose.msra.mxu0 0.0
    %1004 = vmatprep.subr.mxu0 0.0
    %1005 = vmatpush1.xpose.msra.mxu0 0.0
    %1006 = vmatprep.mubr.f32.mxu0 0.0
    %1007 = vmatmul.mubr.f32.gmra.mrb[0].mxu0 %v934
    %v1008 = vpop.f32.mrb[0].mxu0
    %v1009 = vadd.f32 0.0, %v1008
    %v1010 = vpop.f32.mrb[0].mxu0
    %1011 = vdwg.mxu0
    %v1013 = vsel %vm479, %v932, 0
    %v1016 = vsel %vm479, %v875, 0
    %v1019 = vsel %vm479, %v876, 0
    %1021 = vmatprep.subr.mxu0 0.0
    %1022 = vmatpush1.xpose.msra.mxu0 %v1016
    %1023 = vmatprep.subr.mxu0 0.0
    %1024 = vmatpush1.xpose.msra.mxu0 %v1019
    %1025 = vmatprep.subr.mxu0 0.0
    %1026 = vmatpush1.xpose.msra.mxu0 0.0
    %1027 = vmatprep.subr.mxu0 0.0
    %1028 = vmatpush1.xpose.msra.mxu0 0.0
    %1029 = vmatprep.subr.mxu0 0.0
    %1030 = vmatpush1.xpose.msra.mxu0 0.0
    %1031 = vmatprep.subr.mxu0 0.0
    %1032 = vmatpush1.xpose.msra.mxu0 0.0
    %1033 = vmatprep.subr.mxu0 0.0
    %1034 = vmatpush1.xpose.msra.mxu0 0.0
    %1035 = vmatprep.subr.mxu0 0.0
    %1036 = vmatpush1.xpose.msra.mxu0 0.0
    %1037 = vmatprep.subr.mxu0 0.0
    %1038 = vmatpush1.xpose.msra.mxu0 0.0
    %1039 = vmatprep.subr.mxu0 0.0
    %1040 = vmatpush1.xpose.msra.mxu0 0.0
    %1041 = vmatprep.subr.mxu0 0.0
    %1042 = vmatpush1.xpose.msra.mxu0 0.0
    %1043 = vmatprep.subr.mxu0 0.0
    %1044 = vmatpush1.xpose.msra.mxu0 0.0
    %1045 = vmatprep.subr.mxu0 0.0
    %1046 = vmatpush1.xpose.msra.mxu0 0.0
    %1047 = vmatprep.subr.mxu0 0.0
    %1048 = vmatpush1.xpose.msra.mxu0 0.0
    %1049 = vmatprep.subr.mxu0 0.0
    %1050 = vmatpush1.xpose.msra.mxu0 0.0
    %1051 = vmatprep.subr.mxu0 0.0
    %1052 = vmatpush1.xpose.msra.mxu0 0.0
    %1053 = vmatprep.subr.mxu0 0.0
    %1054 = vmatpush1.xpose.msra.mxu0 0.0
    %1055 = vmatprep.subr.mxu0 0.0
    %1056 = vmatpush1.xpose.msra.mxu0 0.0
    %1057 = vmatprep.subr.mxu0 0.0
    %1058 = vmatpush1.xpose.msra.mxu0 0.0
    %1059 = vmatprep.subr.mxu0 0.0
    %1060 = vmatpush1.xpose.msra.mxu0 0.0
    %1061 = vmatprep.subr.mxu0 0.0
    %1062 = vmatpush1.xpose.msra.mxu0 0.0
    %1063 = vmatprep.subr.mxu0 0.0
    %1064 = vmatpush1.xpose.msra.mxu0 0.0
    %1065 = vmatprep.subr.mxu0 0.0
    %1066 = vmatpush1.xpose.msra.mxu0 0.0
    %1067 = vmatprep.subr.mxu0 0.0
    %1068 = vmatpush1.xpose.msra.mxu0 0.0
    %1069 = vmatprep.subr.mxu0 0.0
    %1070 = vmatpush1.xpose.msra.mxu0 0.0
    %1071 = vmatprep.subr.mxu0 0.0
    %1072 = vmatpush1.xpose.msra.mxu0 0.0
    %1073 = vmatprep.subr.mxu0 0.0
    %1074 = vmatpush1.xpose.msra.mxu0 0.0
    %1075 = vmatprep.subr.mxu0 0.0
    %1076 = vmatpush1.xpose.msra.mxu0 0.0
    %1077 = vmatprep.subr.mxu0 0.0
    %1078 = vmatpush1.xpose.msra.mxu0 0.0
    %1079 = vmatprep.subr.mxu0 0.0
    %1080 = vmatpush1.xpose.msra.mxu0 0.0
    %1081 = vmatprep.subr.mxu0 0.0
    %1082 = vmatpush1.xpose.msra.mxu0 0.0
    %1083 = vmatprep.subr.mxu0 0.0
    %1084 = vmatpush1.xpose.msra.mxu0 0.0
    %1085 = vmatprep.mubr.f32.mxu0 0.0
    %1086 = vmatmul.mubr.f32.gmra.mrb[0].mxu0 %v1013
    %v1087 = vpop.f32.mrb[0].mxu0
    %v1088 = vadd.f32 0.0, %v1087
    %v1089 = vpop.f32.mrb[0].mxu0
    %1090 = vdwg.mxu0
    %v1091 = vlaneseq
    %v1092 = vshrl.u32 %v1091, 7
    %v1093 = vsub.s32 0, %v1092
    %v1094 = vrot.slane %v716, %v1093
    %s1096 = sor.u32 256, 16
    %1097 = vbcast.lane.b32.xlu0 %v1094, %s1096
    %v1098 = vpop.permute.xlu0 %1097
    %v1099 = vlaneseq
    %v1100 = vshrl.u32 %v1099, 7
    %v1101 = vsub.s32 1, %v1100
    %v1102 = vrot.slane %v716, %v1101
    %s1104 = sor.u32 256, 16
    %1105 = vbcast.lane.b32.xlu0 %v1102, %s1104
    %v1106 = vpop.permute.xlu0 %1105
    %v1107 = vmul.f32 %v1098, %v1009
    %v1108 = vmul.f32 %v1106, %v1088
    %v1109 = vsel %vm729, %v1107, -inf
    %1110 = vmax.xlane.f32.xlu0 %v1109
    %v1111 = vpop.xlane.xlu0 %1110
    %v1112 = vsel %vm729, %v1108, -inf
    %1113 = vmax.xlane.f32.xlu0 %v1112
    %v1114 = vpop.xlane.xlu0 %1113
    %v1115 = vsub.f32 %v1107, %v1111
    %v1116 = vsub.f32 %v1108, %v1114
    %v1117 = vmul.f32 %v1115, 1.442695
    %v1118 = vpow.pop %v1117
    %v1119 = vmul.f32 %v1116, 1.442695
    %v1120 = vpow.pop %v1119
    %v1121 = vsel %vm729, %v1118, 0.0
    %1122 = vadd.xlane.f32.xlu0 %v1121
    %v1123 = vpop.xlane.xlu0 %1122
    %v1124 = vsel %vm729, %v1120, 0.0
    %1125 = vadd.xlane.f32.xlu0 %v1124
    %v1126 = vpop.xlane.xlu0 %1125
    %v1127 = vrcp.pop %v1123
    %v1128 = vmul.f32 %v1118, %v1127
    %v1129 = vrcp.pop %v1126
    %v1130 = vmul.f32 %v1120, %v1129
    %v1132 = vsel %vm104, %v1128, 0
    %1134 = vmatprep.subr.mxu0 0.0
    %1135 = vmatpush1.msra.mxu0 %v845
    %1136 = vmatprep.subr.mxu0 0.0
    %1137 = vmatpush1.msra.mxu0 %v846
    %1138 = vmatprep.subr.mxu0 0.0
    %1139 = vmatpush1.msra.mxu0 0.0
    %1140 = vmatprep.subr.mxu0 0.0
    %1141 = vmatpush1.msra.mxu0 0.0
    %1142 = vmatprep.subr.mxu0 0.0
    %1143 = vmatpush1.msra.mxu0 0.0
    %1144 = vmatprep.subr.mxu0 0.0
    %1145 = vmatpush1.msra.mxu0 0.0
    %1146 = vmatprep.subr.mxu0 0.0
    %1147 = vmatpush1.msra.mxu0 0.0
    %1148 = vmatprep.subr.mxu0 0.0
    %1149 = vmatpush1.msra.mxu0 0.0
    %1150 = vmatprep.subr.mxu0 0.0
    %1151 = vmatpush1.msra.mxu0 0.0
    %1152 = vmatprep.subr.mxu0 0.0
    %1153 = vmatpush1.msra.mxu0 0.0
    %1154 = vmatprep.subr.mxu0 0.0
    %1155 = vmatpush1.msra.mxu0 0.0
    %1156 = vmatprep.subr.mxu0 0.0
    %1157 = vmatpush1.msra.mxu0 0.0
    %1158 = vmatprep.subr.mxu0 0.0
    %1159 = vmatpush1.msra.mxu0 0.0
    %1160 = vmatprep.subr.mxu0 0.0
    %1161 = vmatpush1.msra.mxu0 0.0
    %1162 = vmatprep.subr.mxu0 0.0
    %1163 = vmatpush1.msra.mxu0 0.0
    %1164 = vmatprep.subr.mxu0 0.0
    %1165 = vmatpush1.msra.mxu0 0.0
    %1166 = vmatprep.subr.mxu0 0.0
    %1167 = vmatpush1.msra.mxu0 0.0
    %1168 = vmatprep.subr.mxu0 0.0
    %1169 = vmatpush1.msra.mxu0 0.0
    %1170 = vmatprep.subr.mxu0 0.0
    %1171 = vmatpush1.msra.mxu0 0.0
    %1172 = vmatprep.subr.mxu0 0.0
    %1173 = vmatpush1.msra.mxu0 0.0
    %1174 = vmatprep.subr.mxu0 0.0
    %1175 = vmatpush1.msra.mxu0 0.0
    %1176 = vmatprep.subr.mxu0 0.0
    %1177 = vmatpush1.msra.mxu0 0.0
    %1178 = vmatprep.subr.mxu0 0.0
    %1179 = vmatpush1.msra.mxu0 0.0
    %1180 = vmatprep.subr.mxu0 0.0
    %1181 = vmatpush1.msra.mxu0 0.0
    %1182 = vmatprep.subr.mxu0 0.0
    %1183 = vmatpush1.msra.mxu0 0.0
    %1184 = vmatprep.subr.mxu0 0.0
    %1185 = vmatpush1.msra.mxu0 0.0
    %1186 = vmatprep.subr.mxu0 0.0
    %1187 = vmatpush1.msra.mxu0 0.0
    %1188 = vmatprep.subr.mxu0 0.0
    %1189 = vmatpush1.msra.mxu0 0.0
    %1190 = vmatprep.subr.mxu0 0.0
    %1191 = vmatpush1.msra.mxu0 0.0
    %1192 = vmatprep.subr.mxu0 0.0
    %1193 = vmatpush1.msra.mxu0 0.0
    %1194 = vmatprep.subr.mxu0 0.0
    %1195 = vmatpush1.msra.mxu0 0.0
    %1196 = vmatprep.subr.mxu0 0.0
    %1197 = vmatpush1.msra.mxu0 0.0
    %1198 = vmatprep.mubr.f32.mxu0 0.0
    %1199 = vmatmul.mubr.f32.gmra.mrb[0].mxu0 %v1132
    %v1200 = vpop.f32.mrb[0].mxu0
    %v1201 = vadd.f32 0.0, %v1200
    %v1202 = vpop.f32.mrb[0].mxu0
    %1203 = vdwg.mxu0
    %v1205 = vsel %vm104, %v1130, 0
    %1207 = vmatprep.subr.mxu0 0.0
    %1208 = vmatpush1.msra.mxu0 %v847
    %1209 = vmatprep.subr.mxu0 0.0
    %1210 = vmatpush1.msra.mxu0 %v848
    %1211 = vmatprep.subr.mxu0 0.0
    %1212 = vmatpush1.msra.mxu0 0.0
    %1213 = vmatprep.subr.mxu0 0.0
    %1214 = vmatpush1.msra.mxu0 0.0
    %1215 = vmatprep.subr.mxu0 0.0
    %1216 = vmatpush1.msra.mxu0 0.0
    %1217 = vmatprep.subr.mxu0 0.0
    %1218 = vmatpush1.msra.mxu0 0.0
    %1219 = vmatprep.subr.mxu0 0.0
    %1220 = vmatpush1.msra.mxu0 0.0
    %1221 = vmatprep.subr.mxu0 0.0
    %1222 = vmatpush1.msra.mxu0 0.0
    %1223 = vmatprep.subr.mxu0 0.0
    %1224 = vmatpush1.msra.mxu0 0.0
    %1225 = vmatprep.subr.mxu0 0.0
    %1226 = vmatpush1.msra.mxu0 0.0
    %1227 = vmatprep.subr.mxu0 0.0
    %1228 = vmatpush1.msra.mxu0 0.0
    %1229 = vmatprep.subr.mxu0 0.0
    %1230 = vmatpush1.msra.mxu0 0.0
    %1231 = vmatprep.subr.mxu0 0.0
    %1232 = vmatpush1.msra.mxu0 0.0
    %1233 = vmatprep.subr.mxu0 0.0
    %1234 = vmatpush1.msra.mxu0 0.0
    %1235 = vmatprep.subr.mxu0 0.0
    %1236 = vmatpush1.msra.mxu0 0.0
    %1237 = vmatprep.subr.mxu0 0.0
    %1238 = vmatpush1.msra.mxu0 0.0
    %1239 = vmatprep.subr.mxu0 0.0
    %1240 = vmatpush1.msra.mxu0 0.0
    %1241 = vmatprep.subr.mxu0 0.0
    %1242 = vmatpush1.msra.mxu0 0.0
    %1243 = vmatprep.subr.mxu0 0.0
    %1244 = vmatpush1.msra.mxu0 0.0
    %1245 = vmatprep.subr.mxu0 0.0
    %1246 = vmatpush1.msra.mxu0 0.0
    %1247 = vmatprep.subr.mxu0 0.0
    %1248 = vmatpush1.msra.mxu0 0.0
    %1249 = vmatprep.subr.mxu0 0.0
    %1250 = vmatpush1.msra.mxu0 0.0
    %1251 = vmatprep.subr.mxu0 0.0
    %1252 = vmatpush1.msra.mxu0 0.0
    %1253 = vmatprep.subr.mxu0 0.0
    %1254 = vmatpush1.msra.mxu0 0.0
    %1255 = vmatprep.subr.mxu0 0.0
    %1256 = vmatpush1.msra.mxu0 0.0
    %1257 = vmatprep.subr.mxu0 0.0
    %1258 = vmatpush1.msra.mxu0 0.0
    %1259 = vmatprep.subr.mxu0 0.0
    %1260 = vmatpush1.msra.mxu0 0.0
    %1261 = vmatprep.subr.mxu0 0.0
    %1262 = vmatpush1.msra.mxu0 0.0
    %1263 = vmatprep.subr.mxu0 0.0
    %1264 = vmatpush1.msra.mxu0 0.0
    %1265 = vmatprep.subr.mxu0 0.0
    %1266 = vmatpush1.msra.mxu0 0.0
    %1267 = vmatprep.subr.mxu0 0.0
    %1268 = vmatpush1.msra.mxu0 0.0
    %1269 = vmatprep.subr.mxu0 0.0
    %1270 = vmatpush1.msra.mxu0 0.0
    %1271 = vmatprep.mubr.f32.mxu0 0.0
    %1272 = vmatmul.mubr.f32.gmra.mrb[0].mxu0 %v1205
    %v1273 = vpop.f32.mrb[0].mxu0
    %v1274 = vadd.f32 0.0, %v1273
    %v1275 = vpop.f32.mrb[0].mxu0
    %1276 = vdwg.mxu0
    %v1279 = vrot.slane %v1274, 7
    %v1280 = vsel %vm725, %v1279, %v1201
    %v1282 = vrot.slane %v1201, 1
    %v1283 = vsel %vm725, %v1274, %v1282
    %1284 = vrot.lane.b32.xlu0 %v1283, 8
    %v1285 = vpop.permute.xlu0 %1284
    %v1287 = vsel %vm479, %v1280, %v1285
    %v1289 = vsel %vm104, %v1287, 0
    %1291 = vmatprep.subr.mxu0 0.0
    %1292 = vmatpush1.msra.mxu0 %v194
    %1293 = vmatprep.subr.mxu0 0.0
    %1294 = vmatpush1.msra.mxu0 %v195
    %1295 = vmatprep.subr.mxu0 0.0
    %1296 = vmatpush1.msra.mxu0 0.0
    %1297 = vmatprep.subr.mxu0 0.0
    %1298 = vmatpush1.msra.mxu0 0.0
    %1299 = vmatprep.subr.mxu0 0.0
    %1300 = vmatpush1.msra.mxu0 0.0
    %1301 = vmatprep.subr.mxu0 0.0
    %1302 = vmatpush1.msra.mxu0 0.0
    %1303 = vmatprep.subr.mxu0 0.0
    %1304 = vmatpush1.msra.mxu0 0.0
    %1305 = vmatprep.subr.mxu0 0.0
    %1306 = vmatpush1.msra.mxu0 0.0
    %1307 = vmatprep.subr.mxu0 0.0
    %1308 = vmatpush1.msra.mxu0 0.0
    %1309 = vmatprep.subr.mxu0 0.0
    %1310 = vmatpush1.msra.mxu0 0.0
    %1311 = vmatprep.subr.mxu0 0.0
    %1312 = vmatpush1.msra.mxu0 0.0
    %1313 = vmatprep.subr.mxu0 0.0
    %1314 = vmatpush1.msra.mxu0 0.0
    %1315 = vmatprep.subr.mxu0 0.0
    %1316 = vmatpush1.msra.mxu0 0.0
    %1317 = vmatprep.subr.mxu0 0.0
    %1318 = vmatpush1.msra.mxu0 0.0
    %1319 = vmatprep.subr.mxu0 0.0
    %1320 = vmatpush1.msra.mxu0 0.0
    %1321 = vmatprep.subr.mxu0 0.0
    %1322 = vmatpush1.msra.mxu0 0.0
    %1323 = vmatprep.subr.mxu0 0.0
    %1324 = vmatpush1.msra.mxu0 0.0
    %1325 = vmatprep.subr.mxu0 0.0
    %1326 = vmatpush1.msra.mxu0 0.0
    %1327 = vmatprep.subr.mxu0 0.0
    %1328 = vmatpush1.msra.mxu0 0.0
    %1329 = vmatprep.subr.mxu0 0.0
    %1330 = vmatpush1.msra.mxu0 0.0
    %1331 = vmatprep.subr.mxu0 0.0
    %1332 = vmatpush1.msra.mxu0 0.0
    %1333 = vmatprep.subr.mxu0 0.0
    %1334 = vmatpush1.msra.mxu0 0.0
    %1335 = vmatprep.subr.mxu0 0.0
    %1336 = vmatpush1.msra.mxu0 0.0
    %1337 = vmatprep.subr.mxu0 0.0
    %1338 = vmatpush1.msra.mxu0 0.0
    %1339 = vmatprep.subr.mxu0 0.0
    %1340 = vmatpush1.msra.mxu0 0.0
    %1341 = vmatprep.subr.mxu0 0.0
    %1342 = vmatpush1.msra.mxu0 0.0
    %1343 = vmatprep.subr.mxu0 0.0
    %1344 = vmatpush1.msra.mxu0 0.0
    %1345 = vmatprep.subr.mxu0 0.0
    %1346 = vmatpush1.msra.mxu0 0.0
    %1347 = vmatprep.subr.mxu0 0.0
    %1348 = vmatpush1.msra.mxu0 0.0
    %1349 = vmatprep.subr.mxu0 0.0
    %1350 = vmatpush1.msra.mxu0 0.0
    %1351 = vmatprep.subr.mxu0 0.0
    %1352 = vmatpush1.msra.mxu0 0.0
    %1353 = vmatprep.subr.mxu0 0.0
    %1354 = vmatpush1.msra.mxu0 0.0
    %1355 = vmatprep.mubr.f32.mxu0 0.0
    %1356 = vmatmul.mubr.f32.gmra.mrb[0].mxu0 %v1289
    %v1357 = vpop.f32.mrb[0].mxu0
    %v1358 = vadd.f32 0.0, %v1357
    %v1359 = vpop.f32.mrb[0].mxu0
    %1360 = vdwg.mxu0
    %1361 = vmatprep.subr.mxu0 0.0
    %1362 = vmatpush1.msra.mxu0 %v190
    %1363 = vmatprep.subr.mxu0 0.0
    %1364 = vmatpush1.msra.mxu0 %v191
    %1365 = vmatprep.subr.mxu0 0.0
    %1366 = vmatpush1.msra.mxu0 %v192
    %1367 = vmatprep.subr.mxu0 0.0
    %1368 = vmatpush1.msra.mxu0 %v193
    %1369 = vmatprep.subr.mxu0 0.0
    %1370 = vmatpush1.msra.mxu0 0.0
    %1371 = vmatprep.subr.mxu0 0.0
    %1372 = vmatpush1.msra.mxu0 0.0
    %1373 = vmatprep.subr.mxu0 0.0
    %1374 = vmatpush1.msra.mxu0 0.0
    %1375 = vmatprep.subr.mxu0 0.0
    %1376 = vmatpush1.msra.mxu0 0.0
    %1377 = vmatprep.subr.mxu0 0.0
    %1378 = vmatpush1.msra.mxu0 0.0
    %1379 = vmatprep.subr.mxu0 0.0
    %1380 = vmatpush1.msra.mxu0 0.0
    %1381 = vmatprep.subr.mxu0 0.0
    %1382 = vmatpush1.msra.mxu0 0.0
    %1383 = vmatprep.subr.mxu0 0.0
    %1384 = vmatpush1.msra.mxu0 0.0
    %1385 = vmatprep.subr.mxu0 0.0
    %1386 = vmatpush1.msra.mxu0 0.0
    %1387 = vmatprep.subr.mxu0 0.0
    %1388 = vmatpush1.msra.mxu0 0.0
    %1389 = vmatprep.subr.mxu0 0.0
    %1390 = vmatpush1.msra.mxu0 0.0
    %1391 = vmatprep.subr.mxu0 0.0
    %1392 = vmatpush1.msra.mxu0 0.0
    %1393 = vmatprep.subr.mxu0 0.0
    %1394 = vmatpush1.msra.mxu0 0.0
    %1395 = vmatprep.subr.mxu0 0.0
    %1396 = vmatpush1.msra.mxu0 0.0
    %1397 = vmatprep.subr.mxu0 0.0
    %1398 = vmatpush1.msra.mxu0 0.0
    %1399 = vmatprep.subr.mxu0 0.0
    %1400 = vmatpush1.msra.mxu0 0.0
    %1401 = vmatprep.subr.mxu0 0.0
    %1402 = vmatpush1.msra.mxu0 0.0
    %1403 = vmatprep.subr.mxu0 0.0
    %1404 = vmatpush1.msra.mxu0 0.0
    %1405 = vmatprep.subr.mxu0 0.0
    %1406 = vmatpush1.msra.mxu0 0.0
    %1407 = vmatprep.subr.mxu0 0.0
    %1408 = vmatpush1.msra.mxu0 0.0
    %1409 = vmatprep.subr.mxu0 0.0
    %1410 = vmatpush1.msra.mxu0 0.0
    %1411 = vmatprep.subr.mxu0 0.0
    %1412 = vmatpush1.msra.mxu0 0.0
    %1413 = vmatprep.subr.mxu0 0.0
    %1414 = vmatpush1.msra.mxu0 0.0
    %1415 = vmatprep.subr.mxu0 0.0
    %1416 = vmatpush1.msra.mxu0 0.0
    %1417 = vmatprep.subr.mxu0 0.0
    %1418 = vmatpush1.msra.mxu0 0.0
    %1419 = vmatprep.subr.mxu0 0.0
    %1420 = vmatpush1.msra.mxu0 0.0
    %1421 = vmatprep.subr.mxu0 0.0
    %1422 = vmatpush1.msra.mxu0 0.0
    %1423 = vmatprep.subr.mxu0 0.0
    %1424 = vmatpush1.msra.mxu0 0.0
    %1425 = vmatprep.mubr.f32.mxu0 0.0
    %1426 = vmatmul.mubr.f32.gmra.mrb[0].mxu0 %v397
    %v1427 = vpop.f32.mrb[0].mxu0
    %v1428 = vadd.f32 %v1358, %v1427
    %v1429 = vpop.f32.mrb[0].mxu0
    %1430 = vdwg.mxu0
    %v1432 = vlaneseq
    %v1433 = vshrl.u32 %v1432, 7
    %v1434 = vsub.s32 0, %v1433
    %v1435 = vrot.slane %v196, %v1434
    %v1437 = vadd.f32 %v1428, %v1435
    %1438 = vst.msk [vmem:[#allocation10] sm:$0x3] %vm509, %v1437
    %1439 = vmatprep.subr.mxu0 0.0
    %1440 = vmatpush1.msra.mxu0 %v178
    %1441 = vmatprep.subr.mxu0 0.0
    %1442 = vmatpush1.msra.mxu0 %v179
    %1443 = vmatprep.subr.mxu0 0.0
    %1444 = vmatpush1.msra.mxu0 0.0
    %1445 = vmatprep.subr.mxu0 0.0
    %1446 = vmatpush1.msra.mxu0 0.0
    %1447 = vmatprep.subr.mxu0 0.0
    %1448 = vmatpush1.msra.mxu0 0.0
    %1449 = vmatprep.subr.mxu0 0.0
    %1450 = vmatpush1.msra.mxu0 0.0
    %1451 = vmatprep.subr.mxu0 0.0
    %1452 = vmatpush1.msra.mxu0 0.0
    %1453 = vmatprep.subr.mxu0 0.0
    %1454 = vmatpush1.msra.mxu0 0.0
    %1455 = vmatprep.subr.mxu0 0.0
    %1456 = vmatpush1.msra.mxu0 0.0
    %1457 = vmatprep.subr.mxu0 0.0
    %1458 = vmatpush1.msra.mxu0 0.0
    %1459 = vmatprep.subr.mxu0 0.0
    %1460 = vmatpush1.msra.mxu0 0.0
    %1461 = vmatprep.subr.mxu0 0.0
    %1462 = vmatpush1.msra.mxu0 0.0
    %1463 = vmatprep.subr.mxu0 0.0
    %1464 = vmatpush1.msra.mxu0 0.0
    %1465 = vmatprep.subr.mxu0 0.0
    %1466 = vmatpush1.msra.mxu0 0.0
    %1467 = vmatprep.subr.mxu0 0.0
    %1468 = vmatpush1.msra.mxu0 0.0
    %1469 = vmatprep.subr.mxu0 0.0
    %1470 = vmatpush1.msra.mxu0 0.0
    %1471 = vmatprep.subr.mxu0 0.0
    %1472 = vmatpush1.msra.mxu0 0.0
    %1473 = vmatprep.subr.mxu0 0.0
    %1474 = vmatpush1.msra.mxu0 0.0
    %1475 = vmatprep.subr.mxu0 0.0
    %1476 = vmatpush1.msra.mxu0 0.0
    %1477 = vmatprep.subr.mxu0 0.0
    %1478 = vmatpush1.msra.mxu0 0.0
    %1479 = vmatprep.subr.mxu0 0.0
    %1480 = vmatpush1.msra.mxu0 0.0
    %1481 = vmatprep.subr.mxu0 0.0
    %1482 = vmatpush1.msra.mxu0 0.0
    %1483 = vmatprep.subr.mxu0 0.0
    %1484 = vmatpush1.msra.mxu0 0.0
    %1485 = vmatprep.subr.mxu0 0.0
    %1486 = vmatpush1.msra.mxu0 0.0
    %1487 = vmatprep.subr.mxu0 0.0
    %1488 = vmatpush1.msra.mxu0 0.0
    %1489 = vmatprep.subr.mxu0 0.0
    %1490 = vmatpush1.msra.mxu0 0.0
    %1491 = vmatprep.subr.mxu0 0.0
    %1492 = vmatpush1.msra.mxu0 0.0
    %1493 = vmatprep.subr.mxu0 0.0
    %1494 = vmatpush1.msra.mxu0 0.0
    %1495 = vmatprep.subr.mxu0 0.0
    %1496 = vmatpush1.msra.mxu0 0.0
    %1497 = vmatprep.subr.mxu0 0.0
    %1498 = vmatpush1.msra.mxu0 0.0
    %1499 = vmatprep.subr.mxu0 0.0
    %1500 = vmatpush1.msra.mxu0 0.0
    %1501 = vmatprep.subr.mxu0 0.0
    %1502 = vmatpush1.msra.mxu0 0.0
    %1503 = vmatprep.mubr.f32.mxu0 0.0
    %1504 = vmatmul.mubr.f32.gmra.mrb[0].mxu0 %v1289
    %v1505 = vpop.f32.mrb[0].mxu0
    %v1506 = vadd.f32 0.0, %v1505
    %v1507 = vpop.f32.mrb[0].mxu0
    %1508 = vdwg.mxu0
    %v1510 = vrot.slane %v1506, 6
    %v1512 = vadd.f32 %v175, %v1510
    %1513 = vmatprep.subr.mxu0 0.0
    %1514 = vmatpush1.msra.mxu0 %v180
    %1515 = vmatprep.subr.mxu0 0.0
    %1516 = vmatpush1.msra.mxu0 %v181
    %1517 = vmatprep.subr.mxu0 0.0
    %1518 = vmatpush1.msra.mxu0 %v182
    %1519 = vmatprep.subr.mxu0 0.0
    %1520 = vmatpush1.msra.mxu0 %v183
    %1521 = vmatprep.subr.mxu0 0.0
    %1522 = vmatpush1.msra.mxu0 0.0
    %1523 = vmatprep.subr.mxu0 0.0
    %1524 = vmatpush1.msra.mxu0 0.0
    %1525 = vmatprep.subr.mxu0 0.0
    %1526 = vmatpush1.msra.mxu0 0.0
    %1527 = vmatprep.subr.mxu0 0.0
    %1528 = vmatpush1.msra.mxu0 0.0
    %1529 = vmatprep.subr.mxu0 0.0
    %1530 = vmatpush1.msra.mxu0 0.0
    %1531 = vmatprep.subr.mxu0 0.0
    %1532 = vmatpush1.msra.mxu0 0.0
    %1533 = vmatprep.subr.mxu0 0.0
    %1534 = vmatpush1.msra.mxu0 0.0
    %1535 = vmatprep.subr.mxu0 0.0
    %1536 = vmatpush1.msra.mxu0 0.0
    %1537 = vmatprep.subr.mxu0 0.0
    %1538 = vmatpush1.msra.mxu0 0.0
    %1539 = vmatprep.subr.mxu0 0.0
    %1540 = vmatpush1.msra.mxu0 0.0
    %1541 = vmatprep.subr.mxu0 0.0
    %1542 = vmatpush1.msra.mxu0 0.0
    %1543 = vmatprep.subr.mxu0 0.0
    %1544 = vmatpush1.msra.mxu0 0.0
    %1545 = vmatprep.subr.mxu0 0.0
    %1546 = vmatpush1.msra.mxu0 0.0
    %1547 = vmatprep.subr.mxu0 0.0
    %1548 = vmatpush1.msra.mxu0 0.0
    %1549 = vmatprep.subr.mxu0 0.0
    %1550 = vmatpush1.msra.mxu0 0.0
    %1551 = vmatprep.subr.mxu0 0.0
    %1552 = vmatpush1.msra.mxu0 0.0
    %1553 = vmatprep.subr.mxu0 0.0
    %1554 = vmatpush1.msra.mxu0 0.0
    %1555 = vmatprep.subr.mxu0 0.0
    %1556 = vmatpush1.msra.mxu0 0.0
    %1557 = vmatprep.subr.mxu0 0.0
    %1558 = vmatpush1.msra.mxu0 0.0
    %1559 = vmatprep.subr.mxu0 0.0
    %1560 = vmatpush1.msra.mxu0 0.0
    %1561 = vmatprep.subr.mxu0 0.0
    %1562 = vmatpush1.msra.mxu0 0.0
    %1563 = vmatprep.subr.mxu0 0.0
    %1564 = vmatpush1.msra.mxu0 0.0
    %1565 = vmatprep.subr.mxu0 0.0
    %1566 = vmatpush1.msra.mxu0 0.0
    %1567 = vmatprep.subr.mxu0 0.0
    %1568 = vmatpush1.msra.mxu0 0.0
    %1569 = vmatprep.subr.mxu0 0.0
    %1570 = vmatpush1.msra.mxu0 0.0
    %1571 = vmatprep.subr.mxu0 0.0
    %1572 = vmatpush1.msra.mxu0 0.0
    %1573 = vmatprep.subr.mxu0 0.0
    %1574 = vmatpush1.msra.mxu0 0.0
    %1575 = vmatprep.subr.mxu0 0.0
    %1576 = vmatpush1.msra.mxu0 0.0
    %1577 = vmatprep.mubr.f32.mxu0 0.0
    %1578 = vmatmul.mubr.f32.gmra.mrb[0].mxu0 %v397
    %v1579 = vpop.f32.mrb[0].mxu0
    %v1580 = vadd.f32 0.0, %v1579
    %v1581 = vpop.f32.mrb[0].mxu0
    %1582 = vdwg.mxu0
    %v1584 = vrot.slane %v1580, 6
    %v1586 = vadd.f32 %v1512, %v1584
    %v1587 = vadd.f32 %v1586, %v357
    %v1588 = vxor.u32 %v1587, 2147483648
    %v1589 = vmul.f32 %v1588, 1.442695
    %v1590 = vpow.pop %v1589
    %v1591 = vadd.f32 %v1590, 1.0
    %v1592 = vrcp.pop %v1591
    %v1593 = vmul.f32 1.0, %v1592
    %v1594 = vtanh.pop %v1587
    %v1596 = vrot.slane %v381, 6
    %v1598 = vmul.f32 %v1593, %v1596
    %1600 = vrot.lane.b32.xlu0 %v1594, 64
    %v1601 = vpop.permute.xlu0 %1600
    %v1603 = vmul.f32 %v1593, %v1601
    %1605 = vrot.lane.b32.xlu0 %v1603, 32
    %v1606 = vpop.permute.xlu0 %1605
    %v1608 = vadd.f32 %v1598, %v1606
    %v1609 = vtanh.pop %v1608
    %1611 = vrot.lane.b32.xlu0 %v1609, 64
    %v1612 = vpop.permute.xlu0 %1611
    %v1614 = vmul.f32 %v1593, %v1612
    %v1616 = vrot.slane %v1614, 2
    %1617 = vrot.lane.b32.xlu0 %v1616, 32
    %v1618 = vpop.permute.xlu0 %1617
    %v1619 = vsel %vm278, %v1618, 0
    %1621 = vmatprep.subr.mxu0 0.0
    %1622 = vmatpush1.msra.mxu0 %v185
    %1623 = vmatprep.subr.mxu0 0.0
    %1624 = vmatpush1.msra.mxu0 %v186
    %1625 = vmatprep.subr.mxu0 0.0
    %1626 = vmatpush1.msra.mxu0 %v187
    %1627 = vmatprep.subr.mxu0 0.0
    %1628 = vmatpush1.msra.mxu0 %v188
    %1629 = vmatprep.subr.mxu0 0.0
    %1630 = vmatpush1.msra.mxu0 0.0
    %1631 = vmatprep.subr.mxu0 0.0
    %1632 = vmatpush1.msra.mxu0 0.0
    %1633 = vmatprep.subr.mxu0 0.0
    %1634 = vmatpush1.msra.mxu0 0.0
    %1635 = vmatprep.subr.mxu0 0.0
    %1636 = vmatpush1.msra.mxu0 0.0
    %1637 = vmatprep.subr.mxu0 0.0
    %1638 = vmatpush1.msra.mxu0 0.0
    %1639 = vmatprep.subr.mxu0 0.0
    %1640 = vmatpush1.msra.mxu0 0.0
    %1641 = vmatprep.subr.mxu0 0.0
    %1642 = vmatpush1.msra.mxu0 0.0
    %1643 = vmatprep.subr.mxu0 0.0
    %1644 = vmatpush1.msra.mxu0 0.0
    %1645 = vmatprep.subr.mxu0 0.0
    %1646 = vmatpush1.msra.mxu0 0.0
    %1647 = vmatprep.subr.mxu0 0.0
    %1648 = vmatpush1.msra.mxu0 0.0
    %1649 = vmatprep.subr.mxu0 0.0
    %1650 = vmatpush1.msra.mxu0 0.0
    %1651 = vmatprep.subr.mxu0 0.0
    %1652 = vmatpush1.msra.mxu0 0.0
    %1653 = vmatprep.subr.mxu0 0.0
    %1654 = vmatpush1.msra.mxu0 0.0
    %1655 = vmatprep.subr.mxu0 0.0
    %1656 = vmatpush1.msra.mxu0 0.0
    %1657 = vmatprep.subr.mxu0 0.0
    %1658 = vmatpush1.msra.mxu0 0.0
    %1659 = vmatprep.subr.mxu0 0.0
    %1660 = vmatpush1.msra.mxu0 0.0
    %1661 = vmatprep.subr.mxu0 0.0
    %1662 = vmatpush1.msra.mxu0 0.0
    %1663 = vmatprep.subr.mxu0 0.0
    %1664 = vmatpush1.msra.mxu0 0.0
    %1665 = vmatprep.subr.mxu0 0.0
    %1666 = vmatpush1.msra.mxu0 0.0
    %1667 = vmatprep.subr.mxu0 0.0
    %1668 = vmatpush1.msra.mxu0 0.0
    %1669 = vmatprep.subr.mxu0 0.0
    %1670 = vmatpush1.msra.mxu0 0.0
    %1671 = vmatprep.subr.mxu0 0.0
    %1672 = vmatpush1.msra.mxu0 0.0
    %1673 = vmatprep.subr.mxu0 0.0
    %1674 = vmatpush1.msra.mxu0 0.0
    %1675 = vmatprep.subr.mxu0 0.0
    %1676 = vmatpush1.msra.mxu0 0.0
    %1677 = vmatprep.subr.mxu0 0.0
    %1678 = vmatpush1.msra.mxu0 0.0
    %1679 = vmatprep.subr.mxu0 0.0
    %1680 = vmatpush1.msra.mxu0 0.0
    %1681 = vmatprep.subr.mxu0 0.0
    %1682 = vmatpush1.msra.mxu0 0.0
    %1683 = vmatprep.subr.mxu0 0.0
    %1684 = vmatpush1.msra.mxu0 0.0
    %1685 = vmatprep.mubr.f32.mxu0 0.0
    %1686 = vmatmul.mubr.f32.gmra.mrb[0].mxu0 %v1619
    %v1687 = vpop.f32.mrb[0].mxu0
    %v1688 = vadd.f32 %v392, %v1687
    %v1689 = vpop.f32.mrb[0].mxu0
    %1690 = vdwg.mxu0
    %v1691 = vxor.u32 %v1688, 2147483648
    %v1692 = vmul.f32 %v1691, 1.442695
    %v1693 = vpow.pop %v1692
    %v1694 = vadd.f32 %v1693, 1.0
    %v1695 = vrcp.pop %v1694
    %v1696 = vmul.f32 1.0, %v1695
    %v1697 = vmul.f32 %v1688, %v1688
    %1699 = vrot.lane.b32.xlu0 %v1697, 110
    %v1700 = vpop.permute.xlu0 %1699
    %v1702 = vsel %vm509, %v1700, 0.0
    %1703 = vadd.xlane.f32.xlu0 %v1702
    %v1704 = vpop.xlane.xlu0 %1703
    %v1705 = vadd.f32 %v1704, 1e-06
    %v1706 = vrsqrt.pop %v1705
    %v1707 = vmul.f32 %v1688, %v1706
    %v1710 = vunpack.c.l.s4 1966171168
    %v1711 = vunpack.c.0.s8 %v1710
    %v1712 = vlaneseq
    %v1713 = vshrl.u32 %v1712, 7
    %v1714 = vsub.s32 %v1711, %v1713
    %v1715 = vrot.slane %v1707, %v1714
    %v1716 = vcombine.high %v1715, %v1715
    %v1718 = vunpack.c.l.s4 1966171168
    %v1719 = vunpack.c.0.s8 %v1718
    %v1720 = vlaneseq
    %v1721 = vshrl.u32 %v1720, 7
    %v1722 = vsub.s32 %v1719, %v1721
    %v1723 = vrot.slane %v1715, %v1722
    %v1725 = vunpack.c.l.s4 1966171168
    %v1726 = vunpack.c.0.s8 %v1725
    %v1727 = vlaneseq
    %v1728 = vshrl.u32 %v1727, 7
    %v1729 = vsub.s32 %v1726, %v1728
    %v1730 = vrot.slane %v1716, %v1729
    %v1731 = vlaneseq
    %v1732 = vshrl.u32 %v1731, 7
    %v1733 = vsub.s32 0, %v1732
    %v1734 = vrot.slane %v1723, %v1733
    %1735 = vrot.lane.b32.xlu0 %v1734, 110
    %v1736 = vpop.permute.xlu0 %1735
    %v1737 = vsel %vm479, %v1736, 0
    %1739 = vmatprep.subr.mxu0 0.0
    %1740 = vmatpush1.xpose.msra.mxu0 %v937
    %1741 = vmatprep.subr.mxu0 0.0
    %1742 = vmatpush1.xpose.msra.mxu0 %v940
    %1743 = vmatprep.subr.mxu0 0.0
    %1744 = vmatpush1.xpose.msra.mxu0 0.0
    %1745 = vmatprep.subr.mxu0 0.0
    %1746 = vmatpush1.xpose.msra.mxu0 0.0
    %1747 = vmatprep.subr.mxu0 0.0
    %1748 = vmatpush1.xpose.msra.mxu0 0.0
    %1749 = vmatprep.subr.mxu0 0.0
    %1750 = vmatpush1.xpose.msra.mxu0 0.0
    %1751 = vmatprep.subr.mxu0 0.0
    %1752 = vmatpush1.xpose.msra.mxu0 0.0
    %1753 = vmatprep.subr.mxu0 0.0
    %1754 = vmatpush1.xpose.msra.mxu0 0.0
    %1755 = vmatprep.subr.mxu0 0.0
    %1756 = vmatpush1.xpose.msra.mxu0 0.0
    %1757 = vmatprep.subr.mxu0 0.0
    %1758 = vmatpush1.xpose.msra.mxu0 0.0
    %1759 = vmatprep.subr.mxu0 0.0
    %1760 = vmatpush1.xpose.msra.mxu0 0.0
    %1761 = vmatprep.subr.mxu0 0.0
    %1762 = vmatpush1.xpose.msra.mxu0 0.0
    %1763 = vmatprep.subr.mxu0 0.0
    %1764 = vmatpush1.xpose.msra.mxu0 0.0
    %1765 = vmatprep.subr.mxu0 0.0
    %1766 = vmatpush1.xpose.msra.mxu0 0.0
    %1767 = vmatprep.subr.mxu0 0.0
    %1768 = vmatpush1.xpose.msra.mxu0 0.0
    %1769 = vmatprep.subr.mxu0 0.0
    %1770 = vmatpush1.xpose.msra.mxu0 0.0
    %1771 = vmatprep.subr.mxu0 0.0
    %1772 = vmatpush1.xpose.msra.mxu0 0.0
    %1773 = vmatprep.subr.mxu0 0.0
    %1774 = vmatpush1.xpose.msra.mxu0 0.0
    %1775 = vmatprep.subr.mxu0 0.0
    %1776 = vmatpush1.xpose.msra.mxu0 0.0
    %1777 = vmatprep.subr.mxu0 0.0
    %1778 = vmatpush1.xpose.msra.mxu0 0.0
    %1779 = vmatprep.subr.mxu0 0.0
    %1780 = vmatpush1.xpose.msra.mxu0 0.0
    %1781 = vmatprep.subr.mxu0 0.0
    %1782 = vmatpush1.xpose.msra.mxu0 0.0
    %1783 = vmatprep.subr.mxu0 0.0
    %1784 = vmatpush1.xpose.msra.mxu0 0.0
    %1785 = vmatprep.subr.mxu0 0.0
    %1786 = vmatpush1.xpose.msra.mxu0 0.0
    %1787 = vmatprep.subr.mxu0 0.0
    %1788 = vmatpush1.xpose.msra.mxu0 0.0
    %1789 = vmatprep.subr.mxu0 0.0
    %1790 = vmatpush1.xpose.msra.mxu0 0.0
    %1791 = vmatprep.subr.mxu0 0.0
    %1792 = vmatpush1.xpose.msra.mxu0 0.0
    %1793 = vmatprep.subr.mxu0 0.0
    %1794 = vmatpush1.xpose.msra.mxu0 0.0
    %1795 = vmatprep.subr.mxu0 0.0
    %1796 = vmatpush1.xpose.msra.mxu0 0.0
    %1797 = vmatprep.subr.mxu0 0.0
    %1798 = vmatpush1.xpose.msra.mxu0 0.0
    %1799 = vmatprep.subr.mxu0 0.0
    %1800 = vmatpush1.xpose.msra.mxu0 0.0
    %1801 = vmatprep.subr.mxu0 0.0
    %1802 = vmatpush1.xpose.msra.mxu0 0.0
    %1803 = vmatprep.mubr.f32.mxu0 0.0
    %1804 = vmatmul.mubr.f32.gmra.mrb[0].mxu0 %v1737
    %v1805 = vpop.f32.mrb[0].mxu0
    %v1806 = vadd.f32 0.0, %v1805
    %v1807 = vpop.f32.mrb[0].mxu0
    %1808 = vdwg.mxu0
    %v1809 = vlaneseq
    %v1810 = vshrl.u32 %v1809, 7
    %v1811 = vsub.s32 0, %v1810
    %v1812 = vrot.slane %v1730, %v1811
    %1813 = vrot.lane.b32.xlu0 %v1812, 110
    %v1814 = vpop.permute.xlu0 %1813
    %v1815 = vsel %vm479, %v1814, 0
    %1817 = vmatprep.subr.mxu0 0.0
    %1818 = vmatpush1.xpose.msra.mxu0 %v1016
    %1819 = vmatprep.subr.mxu0 0.0
    %1820 = vmatpush1.xpose.msra.mxu0 %v1019
    %1821 = vmatprep.subr.mxu0 0.0
    %1822 = vmatpush1.xpose.msra.mxu0 0.0
    %1823 = vmatprep.subr.mxu0 0.0
    %1824 = vmatpush1.xpose.msra.mxu0 0.0
    %1825 = vmatprep.subr.mxu0 0.0
    %1826 = vmatpush1.xpose.msra.mxu0 0.0
    %1827 = vmatprep.subr.mxu0 0.0
    %1828 = vmatpush1.xpose.msra.mxu0 0.0
    %1829 = vmatprep.subr.mxu0 0.0
    %1830 = vmatpush1.xpose.msra.mxu0 0.0
    %1831 = vmatprep.subr.mxu0 0.0
    %1832 = vmatpush1.xpose.msra.mxu0 0.0
    %1833 = vmatprep.subr.mxu0 0.0
    %1834 = vmatpush1.xpose.msra.mxu0 0.0
    %1835 = vmatprep.subr.mxu0 0.0
    %1836 = vmatpush1.xpose.msra.mxu0 0.0
    %1837 = vmatprep.subr.mxu0 0.0
    %1838 = vmatpush1.xpose.msra.mxu0 0.0
    %1839 = vmatprep.subr.mxu0 0.0
    %1840 = vmatpush1.xpose.msra.mxu0 0.0
    %1841 = vmatprep.subr.mxu0 0.0
    %1842 = vmatpush1.xpose.msra.mxu0 0.0
    %1843 = vmatprep.subr.mxu0 0.0
    %1844 = vmatpush1.xpose.msra.mxu0 0.0
    %1845 = vmatprep.subr.mxu0 0.0
    %1846 = vmatpush1.xpose.msra.mxu0 0.0
    %1847 = vmatprep.subr.mxu0 0.0
    %1848 = vmatpush1.xpose.msra.mxu0 0.0
    %1849 = vmatprep.subr.mxu0 0.0
    %1850 = vmatpush1.xpose.msra.mxu0 0.0
    %1851 = vmatprep.subr.mxu0 0.0
    %1852 = vmatpush1.xpose.msra.mxu0 0.0
    %1853 = vmatprep.subr.mxu0 0.0
    %1854 = vmatpush1.xpose.msra.mxu0 0.0
    %1855 = vmatprep.subr.mxu0 0.0
    %1856 = vmatpush1.xpose.msra.mxu0 0.0
    %1857 = vmatprep.subr.mxu0 0.0
    %1858 = vmatpush1.xpose.msra.mxu0 0.0
    %1859 = vmatprep.subr.mxu0 0.0
    %1860 = vmatpush1.xpose.msra.mxu0 0.0
    %1861 = vmatprep.subr.mxu0 0.0
    %1862 = vmatpush1.xpose.msra.mxu0 0.0
    %1863 = vmatprep.subr.mxu0 0.0
    %1864 = vmatpush1.xpose.msra.mxu0 0.0
    %1865 = vmatprep.subr.mxu0 0.0
    %1866 = vmatpush1.xpose.msra.mxu0 0.0
    %1867 = vmatprep.subr.mxu0 0.0
    %1868 = vmatpush1.xpose.msra.mxu0 0.0
    %1869 = vmatprep.subr.mxu0 0.0
    %1870 = vmatpush1.xpose.msra.mxu0 0.0
    %1871 = vmatprep.subr.mxu0 0.0
    %1872 = vmatpush1.xpose.msra.mxu0 0.0
    %1873 = vmatprep.subr.mxu0 0.0
    %1874 = vmatpush1.xpose.msra.mxu0 0.0
    %1875 = vmatprep.subr.mxu0 0.0
    %1876 = vmatpush1.xpose.msra.mxu0 0.0
    %1877 = vmatprep.subr.mxu0 0.0
    %1878 = vmatpush1.xpose.msra.mxu0 0.0
    %1879 = vmatprep.subr.mxu0 0.0
    %1880 = vmatpush1.xpose.msra.mxu0 0.0
    %1881 = vmatprep.mubr.f32.mxu0 0.0
    %1882 = vmatmul.mubr.f32.gmra.mrb[0].mxu0 %v1815
    %v1883 = vpop.f32.mrb[0].mxu0
    %v1884 = vadd.f32 0.0, %v1883
    %v1885 = vpop.f32.mrb[0].mxu0
    %1886 = vdwg.mxu0
    %v1887 = vmax.f32 %v1688, 0.0
    %v1888 = vand.u32 2147483647, %v1688
    %v1889 = vsub.f32 0.0, %v1888
    %v1890 = vmul.f32 %v1889, 1.442695
    %v1891 = vpow.pop %v1890
    %v1892 = vadd.f32 %v1891, 1.0
    %v1893 = vlog2.pop %v1892
    %v1894 = vmul.f32 %v1893, 0.6931472
    %v1895 = vadd.f32 %v1887, %v1894
    %v1896 = vadd.f32 %v1895, 1.0
    %1898 = vset.pattern.permute.xlu0 26
    %1899 = vperm.xlu0 %1898, %v1896
    %v1900 = vpop.permute.xlu0 %1899
    %v1904 = vrot.slane %v1884, 7
    %v1905 = vsel %vm725, %v1904, %v1806
    %v1907 = vmul.f32 %v1900, %v1905
    %v1908 = vsel %vm729, %v1907, -inf
    %1909 = vmax.xlane.f32.xlu0 %v1908
    %v1910 = vpop.xlane.xlu0 %1909
    %v1911 = vsub.f32 %v1907, %v1910
    %v1912 = vmul.f32 %v1911, 1.442695
    %v1913 = vpow.pop %v1912
    %v1914 = vsel %vm729, %v1913, 0.0
    %1915 = vadd.xlane.f32.xlu0 %v1914
    %v1916 = vpop.xlane.xlu0 %1915
    %v1917 = vrcp.pop %v1916
    %v1918 = vmul.f32 %v1913, %v1917
    %1920 = vset.pattern.permute.xlu0 43
    %1921 = vperm.xlu0 %1920, %v1696
    %v1922 = vpop.permute.xlu0 %1921
    %v1924 = vmul.f32 %v1922, %v1918
    %v1925 = vlaneseq
    %v1926 = vshrl.u32 %v1925, 7
    %v1927 = vsub.s32 0, %v1926
    %v1928 = vrot.slane %v1924, %v1927
    %1930 = vbcast.lane.b32.xlu0 %v1928, 256
    %v1931 = vpop.permute.xlu0 %1930
    %s1933 = sor.u32 256, 8
    %1934 = vbcast.lane.b32.xlu0 %v1928, %s1933
    %v1935 = vpop.permute.xlu0 %1934
    %v1936 = vlaneseq
    %v1937 = vshrl.u32 %v1936, 7
    %v1938 = vsub.s32 1, %v1937
    %v1939 = vrot.slane %v1924, %v1938
    %1941 = vbcast.lane.b32.xlu0 %v1939, 256
    %v1942 = vpop.permute.xlu0 %1941
    %s1944 = sor.u32 256, 8
    %1945 = vbcast.lane.b32.xlu0 %v1939, %s1944
    %v1946 = vpop.permute.xlu0 %1945
    %v1948 = vunpack.c.l.s4 1966171168
    %v1949 = vunpack.c.0.s8 %v1948
    %v1950 = vlaneseq
    %v1951 = vshrl.u32 %v1950, 7
    %v1952 = vsub.s32 %v1949, %v1951
    %v1953 = vrot.slane %v1696, %v1952
    %v1954 = vcombine.high %v1953, %v1953
    %v1956 = vunpack.c.l.s4 1966171168
    %v1957 = vunpack.c.0.s8 %v1956
    %v1958 = vlaneseq
    %v1959 = vshrl.u32 %v1958, 7
    %v1960 = vsub.s32 %v1957, %v1959
    %v1961 = vrot.slane %v1953, %v1960
    %v1963 = vunpack.c.l.s4 1966171168
    %v1964 = vunpack.c.0.s8 %v1963
    %v1965 = vlaneseq
    %v1966 = vshrl.u32 %v1965, 7
    %v1967 = vsub.s32 %v1964, %v1966
    %v1968 = vrot.slane %v1954, %v1967
    %v1969 = vlaneseq
    %v1970 = vshrl.u32 %v1969, 7
    %v1971 = vsub.s32 0, %v1970
    %v1972 = vrot.slane %v1961, %v1971
    %v1973 = vlaneseq
    %v1974 = vshrl.u32 %v1973, 7
    %v1975 = vsub.s32 0, %v1974
    %v1976 = vrot.slane %v1968, %v1975
    %v1979 = vmul.f32 %v1931, %v1972
    %v1980 = vmul.f32 %v1935, %v1972
    %v1981 = vmul.f32 %v1942, %v1976
    %v1982 = vmul.f32 %v1946, %v1976
    %v1983 = vsub.f32 1.0, %v1979
    %v1984 = vsub.f32 1.0, %v1980
    %v1985 = vsub.f32 1.0, %v1981
    %v1986 = vsub.f32 1.0, %v1982
    %1991 = vrot.lane.b32.xlu0 %v1983, 101
    %v1992 = vpop.permute.xlu0 %1991
    %1993 = vrot.lane.b32.xlu0 %v1984, 101
    %v1994 = vpop.permute.xlu0 %1993
    %1995 = vrot.lane.b32.xlu0 %v1985, 101
    %v1996 = vpop.permute.xlu0 %1995
    %1997 = vrot.lane.b32.xlu0 %v1986, 101
    %v1998 = vpop.permute.xlu0 %1997
    %v2003 = vmul.f32 %v845, %v1992
    %v2004 = vmul.f32 %v846, %v1994
    %v2005 = vmul.f32 %v847, %v1996
    %v2006 = vmul.f32 %v848, %v1998
    %2011 = vrot.lane.b32.xlu0 %v1979, 93
    %v2012 = vpop.permute.xlu0 %2011
    %2013 = vrot.lane.b32.xlu0 %v1980, 93
    %v2014 = vpop.permute.xlu0 %2013
    %2015 = vrot.lane.b32.xlu0 %v1981, 93
    %v2016 = vpop.permute.xlu0 %2015
    %2017 = vrot.lane.b32.xlu0 %v1982, 93
    %v2018 = vpop.permute.xlu0 %2017
    %v2023 = vadd.f32 %v2003, %v2012
    %v2024 = vadd.f32 %v2004, %v2014
    %v2025 = vadd.f32 %v2005, %v2016
    %v2026 = vadd.f32 %v2006, %v2018
    %v2027 = vmul.f32 %v2023, %v2023
    %v2028 = vmul.f32 %v2024, %v2024
    %v2029 = vmul.f32 %v2025, %v2025
    %v2030 = vmul.f32 %v2026, %v2026
    %v2031 = vsel %vm479, %v2027, 0.0
    %2032 = vadd.xlane.f32.xlu0 %v2031
    %v2033 = vpop.xlane.xlu0 %2032
    %v2034 = vsel %vm479, %v2028, 0.0
    %2035 = vadd.xlane.f32.xlu0 %v2034
    %v2036 = vpop.xlane.xlu0 %2035
    %v2037 = vsel %vm479, %v2029, 0.0
    %2038 = vadd.xlane.f32.xlu0 %v2037
    %v2039 = vpop.xlane.xlu0 %2038
    %v2040 = vsel %vm479, %v2030, 0.0
    %2041 = vadd.xlane.f32.xlu0 %v2040
    %v2042 = vpop.xlane.xlu0 %2041
    %v2043 = vadd.f32 %v2033, 1e-06
    %v2044 = vadd.f32 %v2036, 1e-06
    %v2045 = vadd.f32 %v2039, 1e-06
    %v2046 = vadd.f32 %v2042, 1e-06
    %v2047 = vrsqrt.pop %v2043
    %v2048 = vrsqrt.pop %v2044
    %v2049 = vrsqrt.pop %v2045
    %v2050 = vrsqrt.pop %v2046
    %v2051 = vmul.f32 %v2023, %v2047
    %v2052 = vmul.f32 %v2024, %v2048
    %v2053 = vmul.f32 %v2025, %v2049
    %v2054 = vmul.f32 %v2026, %v2050
    %v2057 = vunpack.c.l.s4 1966171168
    %v2058 = vunpack.c.0.s8 %v2057
    %v2059 = vlaneseq
    %v2060 = vshrl.u32 %v2059, 7
    %v2061 = vsub.s32 %v2058, %v2060
    %v2062 = vrot.slane %v1688, %v2061
    %v2063 = vcombine.high %v2062, %v2062
    %v2065 = vunpack.c.l.s4 1966171168
    %v2066 = vunpack.c.0.s8 %v2065
    %v2067 = vlaneseq
    %v2068 = vshrl.u32 %v2067, 7
    %v2069 = vsub.s32 %v2066, %v2068
    %v2070 = vrot.slane %v2062, %v2069
    %v2072 = vunpack.c.l.s4 1966171168
    %v2073 = vunpack.c.0.s8 %v2072
    %v2074 = vlaneseq
    %v2075 = vshrl.u32 %v2074, 7
    %v2076 = vsub.s32 %v2073, %v2075
    %v2077 = vrot.slane %v2063, %v2076
    %v2080 = vlaneseq
    %v2081 = vshrl.u32 %v2080, 7
    %v2082 = vsub.s32 0, %v2081
    %v2083 = vrot.slane %v2070, %v2082
    %v2084 = vlaneseq
    %v2085 = vshrl.u32 %v2084, 7
    %v2086 = vsub.s32 0, %v2085
    %v2087 = vrot.slane %v2077, %v2086
    %2088 = vrot.lane.b32.xlu0 %v2083, 120
    %v2089 = vpop.permute.xlu0 %2088
    %2090 = vrot.lane.b32.xlu0 %v2087, 120
    %v2091 = vpop.permute.xlu0 %2090
    %v2094 = vsel %vm916, %v2070, %v2089
    %v2095 = vsel %vm916, %v2077, %v2091
    %v2096 = vmul.f32 %v2094, %v2094
    %v2097 = vmul.f32 %v2095, %v2095
    %v2098 = vsel %vm509, %v2096, 0.0
    %2099 = vadd.xlane.f32.xlu0 %v2098
    %v2100 = vpop.xlane.xlu0 %2099
    %v2101 = vsel %vm509, %v2097, 0.0
    %2102 = vadd.xlane.f32.xlu0 %v2101
    %v2103 = vpop.xlane.xlu0 %2102
    %v2104 = vadd.f32 %v2100, 1e-06
    %v2105 = vadd.f32 %v2103, 1e-06
    %v2106 = vrsqrt.pop %v2104
    %v2107 = vrsqrt.pop %v2105
    %v2108 = vmul.f32 %v2094, %v2106
    %v2109 = vmul.f32 %v2095, %v2107
    %v2111 = vsel %vm479, %v2108, 0
    %v2114 = vsel %vm479, %v2051, 0
    %v2117 = vsel %vm479, %v2052, 0
    %2119 = vmatprep.subr.mxu0 0.0
    %2120 = vmatpush1.xpose.msra.mxu0 %v2114
    %2121 = vmatprep.subr.mxu0 0.0
    %2122 = vmatpush1.xpose.msra.mxu0 %v2117
    %2123 = vmatprep.subr.mxu0 0.0
    %2124 = vmatpush1.xpose.msra.mxu0 0.0
    %2125 = vmatprep.subr.mxu0 0.0
    %2126 = vmatpush1.xpose.msra.mxu0 0.0
    %2127 = vmatprep.subr.mxu0 0.0
    %2128 = vmatpush1.xpose.msra.mxu0 0.0
    %2129 = vmatprep.subr.mxu0 0.0
    %2130 = vmatpush1.xpose.msra.mxu0 0.0
    %2131 = vmatprep.subr.mxu0 0.0
    %2132 = vmatpush1.xpose.msra.mxu0 0.0
    %2133 = vmatprep.subr.mxu0 0.0
    %2134 = vmatpush1.xpose.msra.mxu0 0.0
    %2135 = vmatprep.subr.mxu0 0.0
    %2136 = vmatpush1.xpose.msra.mxu0 0.0
    %2137 = vmatprep.subr.mxu0 0.0
    %2138 = vmatpush1.xpose.msra.mxu0 0.0
    %2139 = vmatprep.subr.mxu0 0.0
    %2140 = vmatpush1.xpose.msra.mxu0 0.0
    %2141 = vmatprep.subr.mxu0 0.0
    %2142 = vmatpush1.xpose.msra.mxu0 0.0
    %2143 = vmatprep.subr.mxu0 0.0
    %2144 = vmatpush1.xpose.msra.mxu0 0.0
    %2145 = vmatprep.subr.mxu0 0.0
    %2146 = vmatpush1.xpose.msra.mxu0 0.0
    %2147 = vmatprep.subr.mxu0 0.0
    %2148 = vmatpush1.xpose.msra.mxu0 0.0
    %2149 = vmatprep.subr.mxu0 0.0
    %2150 = vmatpush1.xpose.msra.mxu0 0.0
    %2151 = vmatprep.subr.mxu0 0.0
    %2152 = vmatpush1.xpose.msra.mxu0 0.0
    %2153 = vmatprep.subr.mxu0 0.0
    %2154 = vmatpush1.xpose.msra.mxu0 0.0
    %2155 = vmatprep.subr.mxu0 0.0
    %2156 = vmatpush1.xpose.msra.mxu0 0.0
    %2157 = vmatprep.subr.mxu0 0.0
    %2158 = vmatpush1.xpose.msra.mxu0 0.0
    %2159 = vmatprep.subr.mxu0 0.0
    %2160 = vmatpush1.xpose.msra.mxu0 0.0
    %2161 = vmatprep.subr.mxu0 0.0
    %2162 = vmatpush1.xpose.msra.mxu0 0.0
    %2163 = vmatprep.subr.mxu0 0.0
    %2164 = vmatpush1.xpose.msra.mxu0 0.0
    %2165 = vmatprep.subr.mxu0 0.0
    %2166 = vmatpush1.xpose.msra.mxu0 0.0
    %2167 = vmatprep.subr.mxu0 0.0
    %2168 = vmatpush1.xpose.msra.mxu0 0.0
    %2169 = vmatprep.subr.mxu0 0.0
    %2170 = vmatpush1.xpose.msra.mxu0 0.0
    %2171 = vmatprep.subr.mxu0 0.0
    %2172 = vmatpush1.xpose.msra.mxu0 0.0
    %2173 = vmatprep.subr.mxu0 0.0
    %2174 = vmatpush1.xpose.msra.mxu0 0.0
    %2175 = vmatprep.subr.mxu0 0.0
    %2176 = vmatpush1.xpose.msra.mxu0 0.0
    %2177 = vmatprep.subr.mxu0 0.0
    %2178 = vmatpush1.xpose.msra.mxu0 0.0
    %2179 = vmatprep.subr.mxu0 0.0
    %2180 = vmatpush1.xpose.msra.mxu0 0.0
    %2181 = vmatprep.subr.mxu0 0.0
    %2182 = vmatpush1.xpose.msra.mxu0 0.0
    %2183 = vmatprep.mubr.f32.mxu0 0.0
    %2184 = vmatmul.mubr.f32.gmra.mrb[0].mxu0 %v2111
    %v2185 = vpop.f32.mrb[0].mxu0
    %v2186 = vadd.f32 0.0, %v2185
    %v2187 = vpop.f32.mrb[0].mxu0
    %2188 = vdwg.mxu0
    %v2190 = vsel %vm479, %v2109, 0
    %v2193 = vsel %vm479, %v2053, 0
    %v2196 = vsel %vm479, %v2054, 0
    %2198 = vmatprep.subr.mxu0 0.0
    %2199 = vmatpush1.xpose.msra.mxu0 %v2193
    %2200 = vmatprep.subr.mxu0 0.0
    %2201 = vmatpush1.xpose.msra.mxu0 %v2196
    %2202 = vmatprep.subr.mxu0 0.0
    %2203 = vmatpush1.xpose.msra.mxu0 0.0
    %2204 = vmatprep.subr.mxu0 0.0
    %2205 = vmatpush1.xpose.msra.mxu0 0.0
    %2206 = vmatprep.subr.mxu0 0.0
    %2207 = vmatpush1.xpose.msra.mxu0 0.0
    %2208 = vmatprep.subr.mxu0 0.0
    %2209 = vmatpush1.xpose.msra.mxu0 0.0
    %2210 = vmatprep.subr.mxu0 0.0
    %2211 = vmatpush1.xpose.msra.mxu0 0.0
    %2212 = vmatprep.subr.mxu0 0.0
    %2213 = vmatpush1.xpose.msra.mxu0 0.0
    %2214 = vmatprep.subr.mxu0 0.0
    %2215 = vmatpush1.xpose.msra.mxu0 0.0
    %2216 = vmatprep.subr.mxu0 0.0
    %2217 = vmatpush1.xpose.msra.mxu0 0.0
    %2218 = vmatprep.subr.mxu0 0.0
    %2219 = vmatpush1.xpose.msra.mxu0 0.0
    %2220 = vmatprep.subr.mxu0 0.0
    %2221 = vmatpush1.xpose.msra.mxu0 0.0
    %2222 = vmatprep.subr.mxu0 0.0
    %2223 = vmatpush1.xpose.msra.mxu0 0.0
    %2224 = vmatprep.subr.mxu0 0.0
    %2225 = vmatpush1.xpose.msra.mxu0 0.0
    %2226 = vmatprep.subr.mxu0 0.0
    %2227 = vmatpush1.xpose.msra.mxu0 0.0
    %2228 = vmatprep.subr.mxu0 0.0
    %2229 = vmatpush1.xpose.msra.mxu0 0.0
    %2230 = vmatprep.subr.mxu0 0.0
    %2231 = vmatpush1.xpose.msra.mxu0 0.0
    %2232 = vmatprep.subr.mxu0 0.0
    %2233 = vmatpush1.xpose.msra.mxu0 0.0
    %2234 = vmatprep.subr.mxu0 0.0
    %2235 = vmatpush1.xpose.msra.mxu0 0.0
    %2236 = vmatprep.subr.mxu0 0.0
    %2237 = vmatpush1.xpose.msra.mxu0 0.0
    %2238 = vmatprep.subr.mxu0 0.0
    %2239 = vmatpush1.xpose.msra.mxu0 0.0
    %2240 = vmatprep.subr.mxu0 0.0
    %2241 = vmatpush1.xpose.msra.mxu0 0.0
    %2242 = vmatprep.subr.mxu0 0.0
    %2243 = vmatpush1.xpose.msra.mxu0 0.0
    %2244 = vmatprep.subr.mxu0 0.0
    %2245 = vmatpush1.xpose.msra.mxu0 0.0
    %2246 = vmatprep.subr.mxu0 0.0
    %2247 = vmatpush1.xpose.msra.mxu0 0.0
    %2248 = vmatprep.subr.mxu0 0.0
    %2249 = vmatpush1.xpose.msra.mxu0 0.0
    %2250 = vmatprep.subr.mxu0 0.0
    %2251 = vmatpush1.xpose.msra.mxu0 0.0
    %2252 = vmatprep.subr.mxu0 0.0
    %2253 = vmatpush1.xpose.msra.mxu0 0.0
    %2254 = vmatprep.subr.mxu0 0.0
    %2255 = vmatpush1.xpose.msra.mxu0 0.0
    %2256 = vmatprep.subr.mxu0 0.0
    %2257 = vmatpush1.xpose.msra.mxu0 0.0
    %2258 = vmatprep.subr.mxu0 0.0
    %2259 = vmatpush1.xpose.msra.mxu0 0.0
    %2260 = vmatprep.subr.mxu0 0.0
    %2261 = vmatpush1.xpose.msra.mxu0 0.0
    %2262 = vmatprep.mubr.f32.mxu0 0.0
    %2263 = vmatmul.mubr.f32.gmra.mrb[0].mxu0 %v2190
    %v2264 = vpop.f32.mrb[0].mxu0
    %v2265 = vadd.f32 0.0, %v2264
    %v2266 = vpop.f32.mrb[0].mxu0
    %2267 = vdwg.mxu0
    %v2268 = vlaneseq
    %v2269 = vshrl.u32 %v2268, 7
    %v2270 = vsub.s32 0, %v2269
    %v2271 = vrot.slane %v1896, %v2270
    %s2273 = sor.u32 256, 16
    %2274 = vbcast.lane.b32.xlu0 %v2271, %s2273
    %v2275 = vpop.permute.xlu0 %2274
    %v2276 = vlaneseq
    %v2277 = vshrl.u32 %v2276, 7
    %v2278 = vsub.s32 1, %v2277
    %v2279 = vrot.slane %v1896, %v2278
    %s2281 = sor.u32 256, 16
    %2282 = vbcast.lane.b32.xlu0 %v2279, %s2281
    %v2283 = vpop.permute.xlu0 %2282
    %v2284 = vmul.f32 %v2275, %v2186
    %v2285 = vmul.f32 %v2283, %v2265
    %v2286 = vsel %vm729, %v2284, -inf
    %2287 = vmax.xlane.f32.xlu0 %v2286
    %v2288 = vpop.xlane.xlu0 %2287
    %v2289 = vsel %vm729, %v2285, -inf
    %2290 = vmax.xlane.f32.xlu0 %v2289
    %v2291 = vpop.xlane.xlu0 %2290
    %v2292 = vsub.f32 %v2284, %v2288
    %v2293 = vsub.f32 %v2285, %v2291
    %v2294 = vmul.f32 %v2292, 1.442695
    %v2295 = vpow.pop %v2294
    %v2296 = vmul.f32 %v2293, 1.442695
    %v2297 = vpow.pop %v2296
    %v2298 = vsel %vm729, %v2295, 0.0
    %2299 = vadd.xlane.f32.xlu0 %v2298
    %v2300 = vpop.xlane.xlu0 %2299
    %v2301 = vsel %vm729, %v2297, 0.0
    %2302 = vadd.xlane.f32.xlu0 %v2301
    %v2303 = vpop.xlane.xlu0 %2302
    %v2304 = vrcp.pop %v2300
    %v2305 = vmul.f32 %v2295, %v2304
    %v2306 = vrcp.pop %v2303
    %v2307 = vmul.f32 %v2297, %v2306
    %v2309 = vsel %vm104, %v2305, 0
    %2311 = vmatprep.subr.mxu0 0.0
    %2312 = vmatpush1.msra.mxu0 %v2023
    %2313 = vmatprep.subr.mxu0 0.0
    %2314 = vmatpush1.msra.mxu0 %v2024
    %2315 = vmatprep.subr.mxu0 0.0
    %2316 = vmatpush1.msra.mxu0 0.0
    %2317 = vmatprep.subr.mxu0 0.0
    %2318 = vmatpush1.msra.mxu0 0.0
    %2319 = vmatprep.subr.mxu0 0.0
    %2320 = vmatpush1.msra.mxu0 0.0
    %2321 = vmatprep.subr.mxu0 0.0
    %2322 = vmatpush1.msra.mxu0 0.0
    %2323 = vmatprep.subr.mxu0 0.0
    %2324 = vmatpush1.msra.mxu0 0.0
    %2325 = vmatprep.subr.mxu0 0.0
    %2326 = vmatpush1.msra.mxu0 0.0
    %2327 = vmatprep.subr.mxu0 0.0
    %2328 = vmatpush1.msra.mxu0 0.0
    %2329 = vmatprep.subr.mxu0 0.0
    %2330 = vmatpush1.msra.mxu0 0.0
    %2331 = vmatprep.subr.mxu0 0.0
    %2332 = vmatpush1.msra.mxu0 0.0
    %2333 = vmatprep.subr.mxu0 0.0
    %2334 = vmatpush1.msra.mxu0 0.0
    %2335 = vmatprep.subr.mxu0 0.0
    %2336 = vmatpush1.msra.mxu0 0.0
    %2337 = vmatprep.subr.mxu0 0.0
    %2338 = vmatpush1.msra.mxu0 0.0
    %2339 = vmatprep.subr.mxu0 0.0
    %2340 = vmatpush1.msra.mxu0 0.0
    %2341 = vmatprep.subr.mxu0 0.0
    %2342 = vmatpush1.msra.mxu0 0.0
    %2343 = vmatprep.subr.mxu0 0.0
    %2344 = vmatpush1.msra.mxu0 0.0
    %2345 = vmatprep.subr.mxu0 0.0
    %2346 = vmatpush1.msra.mxu0 0.0
    %2347 = vmatprep.subr.mxu0 0.0
    %2348 = vmatpush1.msra.mxu0 0.0
    %2349 = vmatprep.subr.mxu0 0.0
    %2350 = vmatpush1.msra.mxu0 0.0
    %2351 = vmatprep.subr.mxu0 0.0
    %2352 = vmatpush1.msra.mxu0 0.0
    %2353 = vmatprep.subr.mxu0 0.0
    %2354 = vmatpush1.msra.mxu0 0.0
    %2355 = vmatprep.subr.mxu0 0.0
    %2356 = vmatpush1.msra.mxu0 0.0
    %2357 = vmatprep.subr.mxu0 0.0
    %2358 = vmatpush1.msra.mxu0 0.0
    %2359 = vmatprep.subr.mxu0 0.0
    %2360 = vmatpush1.msra.mxu0 0.0
    %2361 = vmatprep.subr.mxu0 0.0
    %2362 = vmatpush1.msra.mxu0 0.0
    %2363 = vmatprep.subr.mxu0 0.0
    %2364 = vmatpush1.msra.mxu0 0.0
    %2365 = vmatprep.subr.mxu0 0.0
    %2366 = vmatpush1.msra.mxu0 0.0
    %2367 = vmatprep.subr.mxu0 0.0
    %2368 = vmatpush1.msra.mxu0 0.0
    %2369 = vmatprep.subr.mxu0 0.0
    %2370 = vmatpush1.msra.mxu0 0.0
    %2371 = vmatprep.subr.mxu0 0.0
    %2372 = vmatpush1.msra.mxu0 0.0
    %2373 = vmatprep.subr.mxu0 0.0
    %2374 = vmatpush1.msra.mxu0 0.0
    %2375 = vmatprep.mubr.f32.mxu0 0.0
    %2376 = vmatmul.mubr.f32.gmra.mrb[0].mxu0 %v2309
    %v2377 = vpop.f32.mrb[0].mxu0
    %v2378 = vadd.f32 0.0, %v2377
    %v2379 = vpop.f32.mrb[0].mxu0
    %2380 = vdwg.mxu0
    %v2382 = vsel %vm104, %v2307, 0
    %2384 = vmatprep.subr.mxu0 0.0
    %2385 = vmatpush1.msra.mxu0 %v2025
    %2386 = vmatprep.subr.mxu0 0.0
    %2387 = vmatpush1.msra.mxu0 %v2026
    %2388 = vmatprep.subr.mxu0 0.0
    %2389 = vmatpush1.msra.mxu0 0.0
    %2390 = vmatprep.subr.mxu0 0.0
    %2391 = vmatpush1.msra.mxu0 0.0
    %2392 = vmatprep.subr.mxu0 0.0
    %2393 = vmatpush1.msra.mxu0 0.0
    %2394 = vmatprep.subr.mxu0 0.0
    %2395 = vmatpush1.msra.mxu0 0.0
    %2396 = vmatprep.subr.mxu0 0.0
    %2397 = vmatpush1.msra.mxu0 0.0
    %2398 = vmatprep.subr.mxu0 0.0
    %2399 = vmatpush1.msra.mxu0 0.0
    %2400 = vmatprep.subr.mxu0 0.0
    %2401 = vmatpush1.msra.mxu0 0.0
    %2402 = vmatprep.subr.mxu0 0.0
    %2403 = vmatpush1.msra.mxu0 0.0
    %2404 = vmatprep.subr.mxu0 0.0
    %2405 = vmatpush1.msra.mxu0 0.0
    %2406 = vmatprep.subr.mxu0 0.0
    %2407 = vmatpush1.msra.mxu0 0.0
    %2408 = vmatprep.subr.mxu0 0.0
    %2409 = vmatpush1.msra.mxu0 0.0
    %2410 = vmatprep.subr.mxu0 0.0
    %2411 = vmatpush1.msra.mxu0 0.0
    %2412 = vmatprep.subr.mxu0 0.0
    %2413 = vmatpush1.msra.mxu0 0.0
    %2414 = vmatprep.subr.mxu0 0.0
    %2415 = vmatpush1.msra.mxu0 0.0
    %2416 = vmatprep.subr.mxu0 0.0
    %2417 = vmatpush1.msra.mxu0 0.0
    %2418 = vmatprep.subr.mxu0 0.0
    %2419 = vmatpush1.msra.mxu0 0.0
    %2420 = vmatprep.subr.mxu0 0.0
    %2421 = vmatpush1.msra.mxu0 0.0
    %2422 = vmatprep.subr.mxu0 0.0
    %2423 = vmatpush1.msra.mxu0 0.0
    %2424 = vmatprep.subr.mxu0 0.0
    %2425 = vmatpush1.msra.mxu0 0.0
    %2426 = vmatprep.subr.mxu0 0.0
    %2427 = vmatpush1.msra.mxu0 0.0
    %2428 = vmatprep.subr.mxu0 0.0
    %2429 = vmatpush1.msra.mxu0 0.0
    %2430 = vmatprep.subr.mxu0 0.0
    %2431 = vmatpush1.msra.mxu0 0.0
    %2432 = vmatprep.subr.mxu0 0.0
    %2433 = vmatpush1.msra.mxu0 0.0
    %2434 = vmatprep.subr.mxu0 0.0
    %2435 = vmatpush1.msra.mxu0 0.0
    %2436 = vmatprep.subr.mxu0 0.0
    %2437 = vmatpush1.msra.mxu0 0.0
    %2438 = vmatprep.subr.mxu0 0.0
    %2439 = vmatpush1.msra.mxu0 0.0
    %2440 = vmatprep.subr.mxu0 0.0
    %2441 = vmatpush1.msra.mxu0 0.0
    %2442 = vmatprep.subr.mxu0 0.0
    %2443 = vmatpush1.msra.mxu0 0.0
    %2444 = vmatprep.subr.mxu0 0.0
    %2445 = vmatpush1.msra.mxu0 0.0
    %2446 = vmatprep.subr.mxu0 0.0
    %2447 = vmatpush1.msra.mxu0 0.0
    %2448 = vmatprep.mubr.f32.mxu0 0.0
    %2449 = vmatmul.mubr.f32.gmra.mrb[0].mxu0 %v2382
    %v2450 = vpop.f32.mrb[0].mxu0
    %v2451 = vadd.f32 0.0, %v2450
    %v2452 = vpop.f32.mrb[0].mxu0
    %2453 = vdwg.mxu0
    %v2456 = vrot.slane %v2451, 7
    %v2457 = vsel %vm725, %v2456, %v2378
    %v2459 = vrot.slane %v2378, 1
    %v2460 = vsel %vm725, %v2451, %v2459
    %2461 = vrot.lane.b32.xlu0 %v2460, 8
    %v2462 = vpop.permute.xlu0 %2461
    %v2464 = vsel %vm479, %v2457, %v2462
    %v2466 = vsel %vm104, %v2464, 0
    %2468 = vmatprep.subr.mxu0 0.0
    %2469 = vmatpush1.msra.mxu0 %v194
    %2470 = vmatprep.subr.mxu0 0.0
    %2471 = vmatpush1.msra.mxu0 %v195
    %2472 = vmatprep.subr.mxu0 0.0
    %2473 = vmatpush1.msra.mxu0 0.0
    %2474 = vmatprep.subr.mxu0 0.0
    %2475 = vmatpush1.msra.mxu0 0.0
    %2476 = vmatprep.subr.mxu0 0.0
    %2477 = vmatpush1.msra.mxu0 0.0
    %2478 = vmatprep.subr.mxu0 0.0
    %2479 = vmatpush1.msra.mxu0 0.0
    %2480 = vmatprep.subr.mxu0 0.0
    %2481 = vmatpush1.msra.mxu0 0.0
    %2482 = vmatprep.subr.mxu0 0.0
    %2483 = vmatpush1.msra.mxu0 0.0
    %2484 = vmatprep.subr.mxu0 0.0
    %2485 = vmatpush1.msra.mxu0 0.0
    %2486 = vmatprep.subr.mxu0 0.0
    %2487 = vmatpush1.msra.mxu0 0.0
    %2488 = vmatprep.subr.mxu0 0.0
    %2489 = vmatpush1.msra.mxu0 0.0
    %2490 = vmatprep.subr.mxu0 0.0
    %2491 = vmatpush1.msra.mxu0 0.0
    %2492 = vmatprep.subr.mxu0 0.0
    %2493 = vmatpush1.msra.mxu0 0.0
    %2494 = vmatprep.subr.mxu0 0.0
    %2495 = vmatpush1.msra.mxu0 0.0
    %2496 = vmatprep.subr.mxu0 0.0
    %2497 = vmatpush1.msra.mxu0 0.0
    %2498 = vmatprep.subr.mxu0 0.0
    %2499 = vmatpush1.msra.mxu0 0.0
    %2500 = vmatprep.subr.mxu0 0.0
    %2501 = vmatpush1.msra.mxu0 0.0
    %2502 = vmatprep.subr.mxu0 0.0
    %2503 = vmatpush1.msra.mxu0 0.0
    %2504 = vmatprep.subr.mxu0 0.0
    %2505 = vmatpush1.msra.mxu0 0.0
    %2506 = vmatprep.subr.mxu0 0.0
    %2507 = vmatpush1.msra.mxu0 0.0
    %2508 = vmatprep.subr.mxu0 0.0
    %2509 = vmatpush1.msra.mxu0 0.0
    %2510 = vmatprep.subr.mxu0 0.0
    %2511 = vmatpush1.msra.mxu0 0.0
    %2512 = vmatprep.subr.mxu0 0.0
    %2513 = vmatpush1.msra.mxu0 0.0
    %2514 = vmatprep.subr.mxu0 0.0
    %2515 = vmatpush1.msra.mxu0 0.0
    %2516 = vmatprep.subr.mxu0 0.0
    %2517 = vmatpush1.msra.mxu0 0.0
    %2518 = vmatprep.subr.mxu0 0.0
    %2519 = vmatpush1.msra.mxu0 0.0
    %2520 = vmatprep.subr.mxu0 0.0
    %2521 = vmatpush1.msra.mxu0 0.0
    %2522 = vmatprep.subr.mxu0 0.0
    %2523 = vmatpush1.msra.mxu0 0.0
    %2524 = vmatprep.subr.mxu0 0.0
    %2525 = vmatpush1.msra.mxu0 0.0
    %2526 = vmatprep.subr.mxu0 0.0
    %2527 = vmatpush1.msra.mxu0 0.0
    %2528 = vmatprep.subr.mxu0 0.0
    %2529 = vmatpush1.msra.mxu0 0.0
    %2530 = vmatprep.subr.mxu0 0.0
    %2531 = vmatpush1.msra.mxu0 0.0
    %2532 = vmatprep.mubr.f32.mxu0 0.0
    %2533 = vmatmul.mubr.f32.gmra.mrb[0].mxu0 %v2466
    %v2534 = vpop.f32.mrb[0].mxu0
    %v2535 = vadd.f32 0.0, %v2534
    %v2536 = vpop.f32.mrb[0].mxu0
    %2537 = vdwg.mxu0
    %2538 = vmatprep.subr.mxu0 0.0
    %2539 = vmatpush1.msra.mxu0 %v190
    %2540 = vmatprep.subr.mxu0 0.0
    %2541 = vmatpush1.msra.mxu0 %v191
    %2542 = vmatprep.subr.mxu0 0.0
    %2543 = vmatpush1.msra.mxu0 %v192
    %2544 = vmatprep.subr.mxu0 0.0
    %2545 = vmatpush1.msra.mxu0 %v193
    %2546 = vmatprep.subr.mxu0 0.0
    %2547 = vmatpush1.msra.mxu0 0.0
    %2548 = vmatprep.subr.mxu0 0.0
    %2549 = vmatpush1.msra.mxu0 0.0
    %2550 = vmatprep.subr.mxu0 0.0
    %2551 = vmatpush1.msra.mxu0 0.0
    %2552 = vmatprep.subr.mxu0 0.0
    %2553 = vmatpush1.msra.mxu0 0.0
    %2554 = vmatprep.subr.mxu0 0.0
    %2555 = vmatpush1.msra.mxu0 0.0
    %2556 = vmatprep.subr.mxu0 0.0
    %2557 = vmatpush1.msra.mxu0 0.0
    %2558 = vmatprep.subr.mxu0 0.0
    %2559 = vmatpush1.msra.mxu0 0.0
    %2560 = vmatprep.subr.mxu0 0.0
    %2561 = vmatpush1.msra.mxu0 0.0
    %2562 = vmatprep.subr.mxu0 0.0
    %2563 = vmatpush1.msra.mxu0 0.0
    %2564 = vmatprep.subr.mxu0 0.0
    %2565 = vmatpush1.msra.mxu0 0.0
    %2566 = vmatprep.subr.mxu0 0.0
    %2567 = vmatpush1.msra.mxu0 0.0
    %2568 = vmatprep.subr.mxu0 0.0
    %2569 = vmatpush1.msra.mxu0 0.0
    %2570 = vmatprep.subr.mxu0 0.0
    %2571 = vmatpush1.msra.mxu0 0.0
    %2572 = vmatprep.subr.mxu0 0.0
    %2573 = vmatpush1.msra.mxu0 0.0
    %2574 = vmatprep.subr.mxu0 0.0
    %2575 = vmatpush1.msra.mxu0 0.0
    %2576 = vmatprep.subr.mxu0 0.0
    %2577 = vmatpush1.msra.mxu0 0.0
    %2578 = vmatprep.subr.mxu0 0.0
    %2579 = vmatpush1.msra.mxu0 0.0
    %2580 = vmatprep.subr.mxu0 0.0
    %2581 = vmatpush1.msra.mxu0 0.0
    %2582 = vmatprep.subr.mxu0 0.0
    %2583 = vmatpush1.msra.mxu0 0.0
    %2584 = vmatprep.subr.mxu0 0.0
    %2585 = vmatpush1.msra.mxu0 0.0
    %2586 = vmatprep.subr.mxu0 0.0
    %2587 = vmatpush1.msra.mxu0 0.0
    %2588 = vmatprep.subr.mxu0 0.0
    %2589 = vmatpush1.msra.mxu0 0.0
    %2590 = vmatprep.subr.mxu0 0.0
    %2591 = vmatpush1.msra.mxu0 0.0
    %2592 = vmatprep.subr.mxu0 0.0
    %2593 = vmatpush1.msra.mxu0 0.0
    %2594 = vmatprep.subr.mxu0 0.0
    %2595 = vmatpush1.msra.mxu0 0.0
    %2596 = vmatprep.subr.mxu0 0.0
    %2597 = vmatpush1.msra.mxu0 0.0
    %2598 = vmatprep.subr.mxu0 0.0
    %2599 = vmatpush1.msra.mxu0 0.0
    %2600 = vmatprep.subr.mxu0 0.0
    %2601 = vmatpush1.msra.mxu0 0.0
    %2602 = vmatprep.mubr.f32.mxu0 0.0
    %2603 = vmatmul.mubr.f32.gmra.mrb[0].mxu0 %v1619
    %v2604 = vpop.f32.mrb[0].mxu0
    %v2605 = vadd.f32 %v2535, %v2604
    %v2606 = vpop.f32.mrb[0].mxu0
    %2607 = vdwg.mxu0
    %v2608 = vadd.f32 %v2605, %v1435
    %s2609 = scalar_lea.vmem [#allocation10], 2
    %2610 = vst.msk [vmem:[%s2609] sm:$0x3] %vm509, %v2608
    %2611 = vmatprep.subr.mxu0 0.0
    %2612 = vmatpush1.msra.mxu0 %v178
    %2613 = vmatprep.subr.mxu0 0.0
    %2614 = vmatpush1.msra.mxu0 %v179
    %2615 = vmatprep.subr.mxu0 0.0
    %2616 = vmatpush1.msra.mxu0 0.0
    %2617 = vmatprep.subr.mxu0 0.0
    %2618 = vmatpush1.msra.mxu0 0.0
    %2619 = vmatprep.subr.mxu0 0.0
    %2620 = vmatpush1.msra.mxu0 0.0
    %2621 = vmatprep.subr.mxu0 0.0
    %2622 = vmatpush1.msra.mxu0 0.0
    %2623 = vmatprep.subr.mxu0 0.0
    %2624 = vmatpush1.msra.mxu0 0.0
    %2625 = vmatprep.subr.mxu0 0.0
    %2626 = vmatpush1.msra.mxu0 0.0
    %2627 = vmatprep.subr.mxu0 0.0
    %2628 = vmatpush1.msra.mxu0 0.0
    %2629 = vmatprep.subr.mxu0 0.0
    %2630 = vmatpush1.msra.mxu0 0.0
    %2631 = vmatprep.subr.mxu0 0.0
    %2632 = vmatpush1.msra.mxu0 0.0
    %2633 = vmatprep.subr.mxu0 0.0
    %2634 = vmatpush1.msra.mxu0 0.0
    %2635 = vmatprep.subr.mxu0 0.0
    %2636 = vmatpush1.msra.mxu0 0.0
    %2637 = vmatprep.subr.mxu0 0.0
    %2638 = vmatpush1.msra.mxu0 0.0
    %2639 = vmatprep.subr.mxu0 0.0
    %2640 = vmatpush1.msra.mxu0 0.0
    %2641 = vmatprep.subr.mxu0 0.0
    %2642 = vmatpush1.msra.mxu0 0.0
    %2643 = vmatprep.subr.mxu0 0.0
    %2644 = vmatpush1.msra.mxu0 0.0
    %2645 = vmatprep.subr.mxu0 0.0
    %2646 = vmatpush1.msra.mxu0 0.0
    %2647 = vmatprep.subr.mxu0 0.0
    %2648 = vmatpush1.msra.mxu0 0.0
    %2649 = vmatprep.subr.mxu0 0.0
    %2650 = vmatpush1.msra.mxu0 0.0
    %2651 = vmatprep.subr.mxu0 0.0
    %2652 = vmatpush1.msra.mxu0 0.0
    %2653 = vmatprep.subr.mxu0 0.0
    %2654 = vmatpush1.msra.mxu0 0.0
    %2655 = vmatprep.subr.mxu0 0.0
    %2656 = vmatpush1.msra.mxu0 0.0
    %2657 = vmatprep.subr.mxu0 0.0
    %2658 = vmatpush1.msra.mxu0 0.0
    %2659 = vmatprep.subr.mxu0 0.0
    %2660 = vmatpush1.msra.mxu0 0.0
    %2661 = vmatprep.subr.mxu0 0.0
    %2662 = vmatpush1.msra.mxu0 0.0
    %2663 = vmatprep.subr.mxu0 0.0
    %2664 = vmatpush1.msra.mxu0 0.0
    %2665 = vmatprep.subr.mxu0 0.0
    %2666 = vmatpush1.msra.mxu0 0.0
    %2667 = vmatprep.subr.mxu0 0.0
    %2668 = vmatpush1.msra.mxu0 0.0
    %2669 = vmatprep.subr.mxu0 0.0
    %2670 = vmatpush1.msra.mxu0 0.0
    %2671 = vmatprep.subr.mxu0 0.0
    %2672 = vmatpush1.msra.mxu0 0.0
    %2673 = vmatprep.subr.mxu0 0.0
    %2674 = vmatpush1.msra.mxu0 0.0
    %2675 = vmatprep.mubr.f32.mxu0 0.0
    %2676 = vmatmul.mubr.f32.gmra.mrb[0].mxu0 %v2466
    %v2677 = vpop.f32.mrb[0].mxu0
    %v2678 = vadd.f32 0.0, %v2677
    %v2679 = vpop.f32.mrb[0].mxu0
    %2680 = vdwg.mxu0
    %v2682 = vrot.slane %v2678, 4
    %v2684 = vadd.f32 %v175, %v2682
    %2685 = vmatprep.subr.mxu0 0.0
    %2686 = vmatpush1.msra.mxu0 %v180
    %2687 = vmatprep.subr.mxu0 0.0
    %2688 = vmatpush1.msra.mxu0 %v181
    %2689 = vmatprep.subr.mxu0 0.0
    %2690 = vmatpush1.msra.mxu0 %v182
    %2691 = vmatprep.subr.mxu0 0.0
    %2692 = vmatpush1.msra.mxu0 %v183
    %2693 = vmatprep.subr.mxu0 0.0
    %2694 = vmatpush1.msra.mxu0 0.0
    %2695 = vmatprep.subr.mxu0 0.0
    %2696 = vmatpush1.msra.mxu0 0.0
    %2697 = vmatprep.subr.mxu0 0.0
    %2698 = vmatpush1.msra.mxu0 0.0
    %2699 = vmatprep.subr.mxu0 0.0
    %2700 = vmatpush1.msra.mxu0 0.0
    %2701 = vmatprep.subr.mxu0 0.0
    %2702 = vmatpush1.msra.mxu0 0.0
    %2703 = vmatprep.subr.mxu0 0.0
    %2704 = vmatpush1.msra.mxu0 0.0
    %2705 = vmatprep.subr.mxu0 0.0
    %2706 = vmatpush1.msra.mxu0 0.0
    %2707 = vmatprep.subr.mxu0 0.0
    %2708 = vmatpush1.msra.mxu0 0.0
    %2709 = vmatprep.subr.mxu0 0.0
    %2710 = vmatpush1.msra.mxu0 0.0
    %2711 = vmatprep.subr.mxu0 0.0
    %2712 = vmatpush1.msra.mxu0 0.0
    %2713 = vmatprep.subr.mxu0 0.0
    %2714 = vmatpush1.msra.mxu0 0.0
    %2715 = vmatprep.subr.mxu0 0.0
    %2716 = vmatpush1.msra.mxu0 0.0
    %2717 = vmatprep.subr.mxu0 0.0
    %2718 = vmatpush1.msra.mxu0 0.0
    %2719 = vmatprep.subr.mxu0 0.0
    %2720 = vmatpush1.msra.mxu0 0.0
    %2721 = vmatprep.subr.mxu0 0.0
    %2722 = vmatpush1.msra.mxu0 0.0
    %2723 = vmatprep.subr.mxu0 0.0
    %2724 = vmatpush1.msra.mxu0 0.0
    %2725 = vmatprep.subr.mxu0 0.0
    %2726 = vmatpush1.msra.mxu0 0.0
    %2727 = vmatprep.subr.mxu0 0.0
    %2728 = vmatpush1.msra.mxu0 0.0
    %2729 = vmatprep.subr.mxu0 0.0
    %2730 = vmatpush1.msra.mxu0 0.0
    %2731 = vmatprep.subr.mxu0 0.0
    %2732 = vmatpush1.msra.mxu0 0.0
    %2733 = vmatprep.subr.mxu0 0.0
    %2734 = vmatpush1.msra.mxu0 0.0
    %2735 = vmatprep.subr.mxu0 0.0
    %2736 = vmatpush1.msra.mxu0 0.0
    %2737 = vmatprep.subr.mxu0 0.0
    %2738 = vmatpush1.msra.mxu0 0.0
    %2739 = vmatprep.subr.mxu0 0.0
    %2740 = vmatpush1.msra.mxu0 0.0
    %2741 = vmatprep.subr.mxu0 0.0
    %2742 = vmatpush1.msra.mxu0 0.0
    %2743 = vmatprep.subr.mxu0 0.0
    %2744 = vmatpush1.msra.mxu0 0.0
    %2745 = vmatprep.subr.mxu0 0.0
    %2746 = vmatpush1.msra.mxu0 0.0
    %2747 = vmatprep.subr.mxu0 0.0
    %2748 = vmatpush1.msra.mxu0 0.0
    %2749 = vmatprep.mubr.f32.mxu0 0.0
    %2750 = vmatmul.mubr.f32.gmra.mrb[0].mxu0 %v1619
    %v2751 = vpop.f32.mrb[0].mxu0
    %v2752 = vadd.f32 0.0, %v2751
    %v2753 = vpop.f32.mrb[0].mxu0
    %2754 = vdwg.mxu0
    %v2756 = vrot.slane %v2752, 4
    %v2758 = vadd.f32 %v2684, %v2756
    %v2759 = vadd.f32 %v2758, %v357
    %v2760 = vxor.u32 %v2759, 2147483648
    %v2761 = vmul.f32 %v2760, 1.442695
    %v2762 = vpow.pop %v2761
    %v2763 = vadd.f32 %v2762, 1.0
    %v2764 = vrcp.pop %v2763
    %v2765 = vmul.f32 1.0, %v2764
    %v2766 = vtanh.pop %v2759
    %v2768 = vrot.slane %v1608, 6
    %v2770 = vmul.f32 %v2765, %v2768
    %2772 = vrot.lane.b32.xlu0 %v2766, 64
    %v2773 = vpop.permute.xlu0 %2772
    %v2775 = vmul.f32 %v2765, %v2773
    %2777 = vrot.lane.b32.xlu0 %v2775, 32
    %v2778 = vpop.permute.xlu0 %2777
    %v2780 = vadd.f32 %v2770, %v2778
    %v2781 = vtanh.pop %v2780
    %2783 = vrot.lane.b32.xlu0 %v2781, 64
    %v2784 = vpop.permute.xlu0 %2783
    %v2786 = vmul.f32 %v2765, %v2784
    %v2788 = vrot.slane %v2786, 4
    %2789 = vrot.lane.b32.xlu0 %v2788, 32
    %v2790 = vpop.permute.xlu0 %2789
    %v2791 = vsel %vm278, %v2790, 0
    %2793 = vmatprep.subr.mxu0 0.0
    %2794 = vmatpush1.msra.mxu0 %v185
    %2795 = vmatprep.subr.mxu0 0.0
    %2796 = vmatpush1.msra.mxu0 %v186
    %2797 = vmatprep.subr.mxu0 0.0
    %2798 = vmatpush1.msra.mxu0 %v187
    %2799 = vmatprep.subr.mxu0 0.0
    %2800 = vmatpush1.msra.mxu0 %v188
    %2801 = vmatprep.subr.mxu0 0.0
    %2802 = vmatpush1.msra.mxu0 0.0
    %2803 = vmatprep.subr.mxu0 0.0
    %2804 = vmatpush1.msra.mxu0 0.0
    %2805 = vmatprep.subr.mxu0 0.0
    %2806 = vmatpush1.msra.mxu0 0.0
    %2807 = vmatprep.subr.mxu0 0.0
    %2808 = vmatpush1.msra.mxu0 0.0
    %2809 = vmatprep.subr.mxu0 0.0
    %2810 = vmatpush1.msra.mxu0 0.0
    %2811 = vmatprep.subr.mxu0 0.0
    %2812 = vmatpush1.msra.mxu0 0.0
    %2813 = vmatprep.subr.mxu0 0.0
    %2814 = vmatpush1.msra.mxu0 0.0
    %2815 = vmatprep.subr.mxu0 0.0
    %2816 = vmatpush1.msra.mxu0 0.0
    %2817 = vmatprep.subr.mxu0 0.0
    %2818 = vmatpush1.msra.mxu0 0.0
    %2819 = vmatprep.subr.mxu0 0.0
    %2820 = vmatpush1.msra.mxu0 0.0
    %2821 = vmatprep.subr.mxu0 0.0
    %2822 = vmatpush1.msra.mxu0 0.0
    %2823 = vmatprep.subr.mxu0 0.0
    %2824 = vmatpush1.msra.mxu0 0.0
    %2825 = vmatprep.subr.mxu0 0.0
    %2826 = vmatpush1.msra.mxu0 0.0
    %2827 = vmatprep.subr.mxu0 0.0
    %2828 = vmatpush1.msra.mxu0 0.0
    %2829 = vmatprep.subr.mxu0 0.0
    %2830 = vmatpush1.msra.mxu0 0.0
    %2831 = vmatprep.subr.mxu0 0.0
    %2832 = vmatpush1.msra.mxu0 0.0
    %2833 = vmatprep.subr.mxu0 0.0
    %2834 = vmatpush1.msra.mxu0 0.0
    %2835 = vmatprep.subr.mxu0 0.0
    %2836 = vmatpush1.msra.mxu0 0.0
    %2837 = vmatprep.subr.mxu0 0.0
    %2838 = vmatpush1.msra.mxu0 0.0
    %2839 = vmatprep.subr.mxu0 0.0
    %2840 = vmatpush1.msra.mxu0 0.0
    %2841 = vmatprep.subr.mxu0 0.0
    %2842 = vmatpush1.msra.mxu0 0.0
    %2843 = vmatprep.subr.mxu0 0.0
    %2844 = vmatpush1.msra.mxu0 0.0
    %2845 = vmatprep.subr.mxu0 0.0
    %2846 = vmatpush1.msra.mxu0 0.0
    %2847 = vmatprep.subr.mxu0 0.0
    %2848 = vmatpush1.msra.mxu0 0.0
    %2849 = vmatprep.subr.mxu0 0.0
    %2850 = vmatpush1.msra.mxu0 0.0
    %2851 = vmatprep.subr.mxu0 0.0
    %2852 = vmatpush1.msra.mxu0 0.0
    %2853 = vmatprep.subr.mxu0 0.0
    %2854 = vmatpush1.msra.mxu0 0.0
    %2855 = vmatprep.subr.mxu0 0.0
    %2856 = vmatpush1.msra.mxu0 0.0
    %2857 = vmatprep.mubr.f32.mxu0 0.0
    %2858 = vmatmul.mubr.f32.gmra.mrb[0].mxu0 %v2791
    %v2859 = vpop.f32.mrb[0].mxu0
    %v2860 = vadd.f32 %v392, %v2859
    %v2861 = vpop.f32.mrb[0].mxu0
    %2862 = vdwg.mxu0
    %v2863 = vxor.u32 %v2860, 2147483648
    %v2864 = vmul.f32 %v2863, 1.442695
    %v2865 = vpow.pop %v2864
    %v2866 = vadd.f32 %v2865, 1.0
    %v2867 = vrcp.pop %v2866
    %v2868 = vmul.f32 1.0, %v2867
    %v2869 = vmul.f32 %v2860, %v2860
    %2871 = vrot.lane.b32.xlu0 %v2869, 110
    %v2872 = vpop.permute.xlu0 %2871
    %v2874 = vsel %vm509, %v2872, 0.0
    %2875 = vadd.xlane.f32.xlu0 %v2874
    %v2876 = vpop.xlane.xlu0 %2875
    %v2877 = vadd.f32 %v2876, 1e-06
    %v2878 = vrsqrt.pop %v2877
    %v2879 = vmul.f32 %v2860, %v2878
    %v2882 = vunpack.c.l.s4 1966171168
    %v2883 = vunpack.c.0.s8 %v2882
    %v2884 = vlaneseq
    %v2885 = vshrl.u32 %v2884, 7
    %v2886 = vsub.s32 %v2883, %v2885
    %v2887 = vrot.slane %v2879, %v2886
    %v2888 = vcombine.high %v2887, %v2887
    %v2890 = vunpack.c.l.s4 1966171168
    %v2891 = vunpack.c.0.s8 %v2890
    %v2892 = vlaneseq
    %v2893 = vshrl.u32 %v2892, 7
    %v2894 = vsub.s32 %v2891, %v2893
    %v2895 = vrot.slane %v2887, %v2894
    %v2897 = vunpack.c.l.s4 1966171168
    %v2898 = vunpack.c.0.s8 %v2897
    %v2899 = vlaneseq
    %v2900 = vshrl.u32 %v2899, 7
    %v2901 = vsub.s32 %v2898, %v2900
    %v2902 = vrot.slane %v2888, %v2901
    %v2903 = vlaneseq
    %v2904 = vshrl.u32 %v2903, 7
    %v2905 = vsub.s32 0, %v2904
    %v2906 = vrot.slane %v2895, %v2905
    %2907 = vrot.lane.b32.xlu0 %v2906, 110
    %v2908 = vpop.permute.xlu0 %2907
    %v2909 = vsel %vm479, %v2908, 0
    %2911 = vmatprep.subr.mxu0 0.0
    %2912 = vmatpush1.xpose.msra.mxu0 %v2114
    %2913 = vmatprep.subr.mxu0 0.0
    %2914 = vmatpush1.xpose.msra.mxu0 %v2117
    %2915 = vmatprep.subr.mxu0 0.0
    %2916 = vmatpush1.xpose.msra.mxu0 0.0
    %2917 = vmatprep.subr.mxu0 0.0
    %2918 = vmatpush1.xpose.msra.mxu0 0.0
    %2919 = vmatprep.subr.mxu0 0.0
    %2920 = vmatpush1.xpose.msra.mxu0 0.0
    %2921 = vmatprep.subr.mxu0 0.0
    %2922 = vmatpush1.xpose.msra.mxu0 0.0
    %2923 = vmatprep.subr.mxu0 0.0
    %2924 = vmatpush1.xpose.msra.mxu0 0.0
    %2925 = vmatprep.subr.mxu0 0.0
    %2926 = vmatpush1.xpose.msra.mxu0 0.0
    %2927 = vmatprep.subr.mxu0 0.0
    %2928 = vmatpush1.xpose.msra.mxu0 0.0
    %2929 = vmatprep.subr.mxu0 0.0
    %2930 = vmatpush1.xpose.msra.mxu0 0.0
    %2931 = vmatprep.subr.mxu0 0.0
    %2932 = vmatpush1.xpose.msra.mxu0 0.0
    %2933 = vmatprep.subr.mxu0 0.0
    %2934 = vmatpush1.xpose.msra.mxu0 0.0
    %2935 = vmatprep.subr.mxu0 0.0
    %2936 = vmatpush1.xpose.msra.mxu0 0.0
    %2937 = vmatprep.subr.mxu0 0.0
    %2938 = vmatpush1.xpose.msra.mxu0 0.0
    %2939 = vmatprep.subr.mxu0 0.0
    %2940 = vmatpush1.xpose.msra.mxu0 0.0
    %2941 = vmatprep.subr.mxu0 0.0
    %2942 = vmatpush1.xpose.msra.mxu0 0.0
    %2943 = vmatprep.subr.mxu0 0.0
    %2944 = vmatpush1.xpose.msra.mxu0 0.0
    %2945 = vmatprep.subr.mxu0 0.0
    %2946 = vmatpush1.xpose.msra.mxu0 0.0
    %2947 = vmatprep.subr.mxu0 0.0
    %2948 = vmatpush1.xpose.msra.mxu0 0.0
    %2949 = vmatprep.subr.mxu0 0.0
    %2950 = vmatpush1.xpose.msra.mxu0 0.0
    %2951 = vmatprep.subr.mxu0 0.0
    %2952 = vmatpush1.xpose.msra.mxu0 0.0
    %2953 = vmatprep.subr.mxu0 0.0
    %2954 = vmatpush1.xpose.msra.mxu0 0.0
    %2955 = vmatprep.subr.mxu0 0.0
    %2956 = vmatpush1.xpose.msra.mxu0 0.0
    %2957 = vmatprep.subr.mxu0 0.0
    %2958 = vmatpush1.xpose.msra.mxu0 0.0
    %2959 = vmatprep.subr.mxu0 0.0
    %2960 = vmatpush1.xpose.msra.mxu0 0.0
    %2961 = vmatprep.subr.mxu0 0.0
    %2962 = vmatpush1.xpose.msra.mxu0 0.0
    %2963 = vmatprep.subr.mxu0 0.0
    %2964 = vmatpush1.xpose.msra.mxu0 0.0
    %2965 = vmatprep.subr.mxu0 0.0
    %2966 = vmatpush1.xpose.msra.mxu0 0.0
    %2967 = vmatprep.subr.mxu0 0.0
    %2968 = vmatpush1.xpose.msra.mxu0 0.0
    %2969 = vmatprep.subr.mxu0 0.0
    %2970 = vmatpush1.xpose.msra.mxu0 0.0
    %2971 = vmatprep.subr.mxu0 0.0
    %2972 = vmatpush1.xpose.msra.mxu0 0.0
    %2973 = vmatprep.subr.mxu0 0.0
    %2974 = vmatpush1.xpose.msra.mxu0 0.0
    %2975 = vmatprep.mubr.f32.mxu0 0.0
    %2976 = vmatmul.mubr.f32.gmra.mrb[0].mxu0 %v2909
    %v2977 = vpop.f32.mrb[0].mxu0
    %v2978 = vadd.f32 0.0, %v2977
    %v2979 = vpop.f32.mrb[0].mxu0
    %2980 = vdwg.mxu0
    %v2981 = vlaneseq
    %v2982 = vshrl.u32 %v2981, 7
    %v2983 = vsub.s32 0, %v2982
    %v2984 = vrot.slane %v2902, %v2983
    %2985 = vrot.lane.b32.xlu0 %v2984, 110
    %v2986 = vpop.permute.xlu0 %2985
    %v2987 = vsel %vm479, %v2986, 0
    %2989 = vmatprep.subr.mxu0 0.0
    %2990 = vmatpush1.xpose.msra.mxu0 %v2193
    %2991 = vmatprep.subr.mxu0 0.0
    %2992 = vmatpush1.xpose.msra.mxu0 %v2196
    %2993 = vmatprep.subr.mxu0 0.0
    %2994 = vmatpush1.xpose.msra.mxu0 0.0
    %2995 = vmatprep.subr.mxu0 0.0
    %2996 = vmatpush1.xpose.msra.mxu0 0.0
    %2997 = vmatprep.subr.mxu0 0.0
    %2998 = vmatpush1.xpose.msra.mxu0 0.0
    %2999 = vmatprep.subr.mxu0 0.0
    %3000 = vmatpush1.xpose.msra.mxu0 0.0
    %3001 = vmatprep.subr.mxu0 0.0
    %3002 = vmatpush1.xpose.msra.mxu0 0.0
    %3003 = vmatprep.subr.mxu0 0.0
    %3004 = vmatpush1.xpose.msra.mxu0 0.0
    %3005 = vmatprep.subr.mxu0 0.0
    %3006 = vmatpush1.xpose.msra.mxu0 0.0
    %3007 = vmatprep.subr.mxu0 0.0
    %3008 = vmatpush1.xpose.msra.mxu0 0.0
    %3009 = vmatprep.subr.mxu0 0.0
    %3010 = vmatpush1.xpose.msra.mxu0 0.0
    %3011 = vmatprep.subr.mxu0 0.0
    %3012 = vmatpush1.xpose.msra.mxu0 0.0
    %3013 = vmatprep.subr.mxu0 0.0
    %3014 = vmatpush1.xpose.msra.mxu0 0.0
    %3015 = vmatprep.subr.mxu0 0.0
    %3016 = vmatpush1.xpose.msra.mxu0 0.0
    %3017 = vmatprep.subr.mxu0 0.0
    %3018 = vmatpush1.xpose.msra.mxu0 0.0
    %3019 = vmatprep.subr.mxu0 0.0
    %3020 = vmatpush1.xpose.msra.mxu0 0.0
    %3021 = vmatprep.subr.mxu0 0.0
    %3022 = vmatpush1.xpose.msra.mxu0 0.0
    %3023 = vmatprep.subr.mxu0 0.0
    %3024 = vmatpush1.xpose.msra.mxu0 0.0
    %3025 = vmatprep.subr.mxu0 0.0
    %3026 = vmatpush1.xpose.msra.mxu0 0.0
    %3027 = vmatprep.subr.mxu0 0.0
    %3028 = vmatpush1.xpose.msra.mxu0 0.0
    %3029 = vmatprep.subr.mxu0 0.0
    %3030 = vmatpush1.xpose.msra.mxu0 0.0
    %3031 = vmatprep.subr.mxu0 0.0
    %3032 = vmatpush1.xpose.msra.mxu0 0.0
    %3033 = vmatprep.subr.mxu0 0.0
    %3034 = vmatpush1.xpose.msra.mxu0 0.0
    %3035 = vmatprep.subr.mxu0 0.0
    %3036 = vmatpush1.xpose.msra.mxu0 0.0
    %3037 = vmatprep.subr.mxu0 0.0
    %3038 = vmatpush1.xpose.msra.mxu0 0.0
    %3039 = vmatprep.subr.mxu0 0.0
    %3040 = vmatpush1.xpose.msra.mxu0 0.0
    %3041 = vmatprep.subr.mxu0 0.0
    %3042 = vmatpush1.xpose.msra.mxu0 0.0
    %3043 = vmatprep.subr.mxu0 0.0
    %3044 = vmatpush1.xpose.msra.mxu0 0.0
    %3045 = vmatprep.subr.mxu0 0.0
    %3046 = vmatpush1.xpose.msra.mxu0 0.0
    %3047 = vmatprep.subr.mxu0 0.0
    %3048 = vmatpush1.xpose.msra.mxu0 0.0
    %3049 = vmatprep.subr.mxu0 0.0
    %3050 = vmatpush1.xpose.msra.mxu0 0.0
    %3051 = vmatprep.subr.mxu0 0.0
    %3052 = vmatpush1.xpose.msra.mxu0 0.0
    %3053 = vmatprep.mubr.f32.mxu0 0.0
    %3054 = vmatmul.mubr.f32.gmra.mrb[0].mxu0 %v2987
    %v3055 = vpop.f32.mrb[0].mxu0
    %v3056 = vadd.f32 0.0, %v3055
    %v3057 = vpop.f32.mrb[0].mxu0
    %3058 = vdwg.mxu0
    %v3059 = vmax.f32 %v2860, 0.0
    %v3060 = vand.u32 2147483647, %v2860
    %v3061 = vsub.f32 0.0, %v3060
    %v3062 = vmul.f32 %v3061, 1.442695
    %v3063 = vpow.pop %v3062
    %v3064 = vadd.f32 %v3063, 1.0
    %v3065 = vlog2.pop %v3064
    %v3066 = vmul.f32 %v3065, 0.6931472
    %v3067 = vadd.f32 %v3059, %v3066
    %v3068 = vadd.f32 %v3067, 1.0
    %3070 = vset.pattern.permute.xlu0 26
    %3071 = vperm.xlu0 %3070, %v3068
    %v3072 = vpop.permute.xlu0 %3071
    %v3076 = vrot.slane %v3056, 7
    %v3077 = vsel %vm725, %v3076, %v2978
    %v3079 = vmul.f32 %v3072, %v3077
    %v3080 = vsel %vm729, %v3079, -inf
    %3081 = vmax.xlane.f32.xlu0 %v3080
    %v3082 = vpop.xlane.xlu0 %3081
    %v3083 = vsub.f32 %v3079, %v3082
    %v3084 = vmul.f32 %v3083, 1.442695
    %v3085 = vpow.pop %v3084
    %v3086 = vsel %vm729, %v3085, 0.0
    %3087 = vadd.xlane.f32.xlu0 %v3086
    %v3088 = vpop.xlane.xlu0 %3087
    %v3089 = vrcp.pop %v3088
    %v3090 = vmul.f32 %v3085, %v3089
    %3092 = vset.pattern.permute.xlu0 43
    %3093 = vperm.xlu0 %3092, %v2868
    %v3094 = vpop.permute.xlu0 %3093
    %v3096 = vmul.f32 %v3094, %v3090
    %v3097 = vlaneseq
    %v3098 = vshrl.u32 %v3097, 7
    %v3099 = vsub.s32 0, %v3098
    %v3100 = vrot.slane %v3096, %v3099
    %3102 = vbcast.lane.b32.xlu0 %v3100, 256
    %v3103 = vpop.permute.xlu0 %3102
    %s3105 = sor.u32 256, 8
    %3106 = vbcast.lane.b32.xlu0 %v3100, %s3105
    %v3107 = vpop.permute.xlu0 %3106
    %v3108 = vlaneseq
    %v3109 = vshrl.u32 %v3108, 7
    %v3110 = vsub.s32 1, %v3109
    %v3111 = vrot.slane %v3096, %v3110
    %3113 = vbcast.lane.b32.xlu0 %v3111, 256
    %v3114 = vpop.permute.xlu0 %3113
    %s3116 = sor.u32 256, 8
    %3117 = vbcast.lane.b32.xlu0 %v3111, %s3116
    %v3118 = vpop.permute.xlu0 %3117
    %v3120 = vunpack.c.l.s4 1966171168
    %v3121 = vunpack.c.0.s8 %v3120
    %v3122 = vlaneseq
    %v3123 = vshrl.u32 %v3122, 7
    %v3124 = vsub.s32 %v3121, %v3123
    %v3125 = vrot.slane %v2868, %v3124
    %v3126 = vcombine.high %v3125, %v3125
    %v3128 = vunpack.c.l.s4 1966171168
    %v3129 = vunpack.c.0.s8 %v3128
    %v3130 = vlaneseq
    %v3131 = vshrl.u32 %v3130, 7
    %v3132 = vsub.s32 %v3129, %v3131
    %v3133 = vrot.slane %v3125, %v3132
    %v3135 = vunpack.c.l.s4 1966171168
    %v3136 = vunpack.c.0.s8 %v3135
    %v3137 = vlaneseq
    %v3138 = vshrl.u32 %v3137, 7
    %v3139 = vsub.s32 %v3136, %v3138
    %v3140 = vrot.slane %v3126, %v3139
    %v3141 = vlaneseq
    %v3142 = vshrl.u32 %v3141, 7
    %v3143 = vsub.s32 0, %v3142
    %v3144 = vrot.slane %v3133, %v3143
    %v3145 = vlaneseq
    %v3146 = vshrl.u32 %v3145, 7
    %v3147 = vsub.s32 0, %v3146
    %v3148 = vrot.slane %v3140, %v3147
    %v3151 = vmul.f32 %v3103, %v3144
    %v3152 = vmul.f32 %v3107, %v3144
    %v3153 = vmul.f32 %v3114, %v3148
    %v3154 = vmul.f32 %v3118, %v3148
    %v3155 = vsub.f32 1.0, %v3151
    %v3156 = vsub.f32 1.0, %v3152
    %v3157 = vsub.f32 1.0, %v3153
    %v3158 = vsub.f32 1.0, %v3154
    %3163 = vrot.lane.b32.xlu0 %v3155, 101
    %v3164 = vpop.permute.xlu0 %3163
    %3165 = vrot.lane.b32.xlu0 %v3156, 101
    %v3166 = vpop.permute.xlu0 %3165
    %3167 = vrot.lane.b32.xlu0 %v3157, 101
    %v3168 = vpop.permute.xlu0 %3167
    %3169 = vrot.lane.b32.xlu0 %v3158, 101
    %v3170 = vpop.permute.xlu0 %3169
    %v3175 = vmul.f32 %v2023, %v3164
    %v3176 = vmul.f32 %v2024, %v3166
    %v3177 = vmul.f32 %v2025, %v3168
    %v3178 = vmul.f32 %v2026, %v3170
    %3183 = vrot.lane.b32.xlu0 %v3151, 93
    %v3184 = vpop.permute.xlu0 %3183
    %3185 = vrot.lane.b32.xlu0 %v3152, 93
    %v3186 = vpop.permute.xlu0 %3185
    %3187 = vrot.lane.b32.xlu0 %v3153, 93
    %v3188 = vpop.permute.xlu0 %3187
    %3189 = vrot.lane.b32.xlu0 %v3154, 93
    %v3190 = vpop.permute.xlu0 %3189
    %v3195 = vadd.f32 %v3175, %v3184
    %v3196 = vadd.f32 %v3176, %v3186
    %v3197 = vadd.f32 %v3177, %v3188
    %v3198 = vadd.f32 %v3178, %v3190
    %v3199 = vmul.f32 %v3195, %v3195
    %v3200 = vmul.f32 %v3196, %v3196
    %v3201 = vmul.f32 %v3197, %v3197
    %v3202 = vmul.f32 %v3198, %v3198
    %v3203 = vsel %vm479, %v3199, 0.0
    %3204 = vadd.xlane.f32.xlu0 %v3203
    %v3205 = vpop.xlane.xlu0 %3204
    %v3206 = vsel %vm479, %v3200, 0.0
    %3207 = vadd.xlane.f32.xlu0 %v3206
    %v3208 = vpop.xlane.xlu0 %3207
    %v3209 = vsel %vm479, %v3201, 0.0
    %3210 = vadd.xlane.f32.xlu0 %v3209
    %v3211 = vpop.xlane.xlu0 %3210
    %v3212 = vsel %vm479, %v3202, 0.0
    %3213 = vadd.xlane.f32.xlu0 %v3212
    %v3214 = vpop.xlane.xlu0 %3213
    %v3215 = vadd.f32 %v3205, 1e-06
    %v3216 = vadd.f32 %v3208, 1e-06
    %v3217 = vadd.f32 %v3211, 1e-06
    %v3218 = vadd.f32 %v3214, 1e-06
    %v3219 = vrsqrt.pop %v3215
    %v3220 = vrsqrt.pop %v3216
    %v3221 = vrsqrt.pop %v3217
    %v3222 = vrsqrt.pop %v3218
    %v3223 = vmul.f32 %v3195, %v3219
    %v3224 = vmul.f32 %v3196, %v3220
    %v3225 = vmul.f32 %v3197, %v3221
    %v3226 = vmul.f32 %v3198, %v3222
    %v3229 = vunpack.c.l.s4 1966171168
    %v3230 = vunpack.c.0.s8 %v3229
    %v3231 = vlaneseq
    %v3232 = vshrl.u32 %v3231, 7
    %v3233 = vsub.s32 %v3230, %v3232
    %v3234 = vrot.slane %v2860, %v3233
    %v3235 = vcombine.high %v3234, %v3234
    %v3237 = vunpack.c.l.s4 1966171168
    %v3238 = vunpack.c.0.s8 %v3237
    %v3239 = vlaneseq
    %v3240 = vshrl.u32 %v3239, 7
    %v3241 = vsub.s32 %v3238, %v3240
    %v3242 = vrot.slane %v3234, %v3241
    %v3244 = vunpack.c.l.s4 1966171168
    %v3245 = vunpack.c.0.s8 %v3244
    %v3246 = vlaneseq
    %v3247 = vshrl.u32 %v3246, 7
    %v3248 = vsub.s32 %v3245, %v3247
    %v3249 = vrot.slane %v3235, %v3248
    %v3252 = vlaneseq
    %v3253 = vshrl.u32 %v3252, 7
    %v3254 = vsub.s32 0, %v3253
    %v3255 = vrot.slane %v3242, %v3254
    %v3256 = vlaneseq
    %v3257 = vshrl.u32 %v3256, 7
    %v3258 = vsub.s32 0, %v3257
    %v3259 = vrot.slane %v3249, %v3258
    %3260 = vrot.lane.b32.xlu0 %v3255, 120
    %v3261 = vpop.permute.xlu0 %3260
    %3262 = vrot.lane.b32.xlu0 %v3259, 120
    %v3263 = vpop.permute.xlu0 %3262
    %v3266 = vsel %vm916, %v3242, %v3261
    %v3267 = vsel %vm916, %v3249, %v3263
    %v3268 = vmul.f32 %v3266, %v3266
    %v3269 = vmul.f32 %v3267, %v3267
    %v3270 = vsel %vm509, %v3268, 0.0
    %3271 = vadd.xlane.f32.xlu0 %v3270
    %v3272 = vpop.xlane.xlu0 %3271
    %v3273 = vsel %vm509, %v3269, 0.0
    %3274 = vadd.xlane.f32.xlu0 %v3273
    %v3275 = vpop.xlane.xlu0 %3274
    %v3276 = vadd.f32 %v3272, 1e-06
    %v3277 = vadd.f32 %v3275, 1e-06
    %v3278 = vrsqrt.pop %v3276
    %v3279 = vrsqrt.pop %v3277
    %v3280 = vmul.f32 %v3266, %v3278
    %v3281 = vmul.f32 %v3267, %v3279
    %v3283 = vsel %vm479, %v3280, 0
    %v3286 = vsel %vm479, %v3223, 0
    %v3289 = vsel %vm479, %v3224, 0
    %3291 = vmatprep.subr.mxu0 0.0
    %3292 = vmatpush1.xpose.msra.mxu0 %v3286
    %3293 = vmatprep.subr.mxu0 0.0
    %3294 = vmatpush1.xpose.msra.mxu0 %v3289
    %3295 = vmatprep.subr.mxu0 0.0
    %3296 = vmatpush1.xpose.msra.mxu0 0.0
    %3297 = vmatprep.subr.mxu0 0.0
    %3298 = vmatpush1.xpose.msra.mxu0 0.0
    %3299 = vmatprep.subr.mxu0 0.0
    %3300 = vmatpush1.xpose.msra.mxu0 0.0
    %3301 = vmatprep.subr.mxu0 0.0
    %3302 = vmatpush1.xpose.msra.mxu0 0.0
    %3303 = vmatprep.subr.mxu0 0.0
    %3304 = vmatpush1.xpose.msra.mxu0 0.0
    %3305 = vmatprep.subr.mxu0 0.0
    %3306 = vmatpush1.xpose.msra.mxu0 0.0
    %3307 = vmatprep.subr.mxu0 0.0
    %3308 = vmatpush1.xpose.msra.mxu0 0.0
    %3309 = vmatprep.subr.mxu0 0.0
    %3310 = vmatpush1.xpose.msra.mxu0 0.0
    %3311 = vmatprep.subr.mxu0 0.0
    %3312 = vmatpush1.xpose.msra.mxu0 0.0
    %3313 = vmatprep.subr.mxu0 0.0
    %3314 = vmatpush1.xpose.msra.mxu0 0.0
    %3315 = vmatprep.subr.mxu0 0.0
    %3316 = vmatpush1.xpose.msra.mxu0 0.0
    %3317 = vmatprep.subr.mxu0 0.0
    %3318 = vmatpush1.xpose.msra.mxu0 0.0
    %3319 = vmatprep.subr.mxu0 0.0
    %3320 = vmatpush1.xpose.msra.mxu0 0.0
    %3321 = vmatprep.subr.mxu0 0.0
    %3322 = vmatpush1.xpose.msra.mxu0 0.0
    %3323 = vmatprep.subr.mxu0 0.0
    %3324 = vmatpush1.xpose.msra.mxu0 0.0
    %3325 = vmatprep.subr.mxu0 0.0
    %3326 = vmatpush1.xpose.msra.mxu0 0.0
    %3327 = vmatprep.subr.mxu0 0.0
    %3328 = vmatpush1.xpose.msra.mxu0 0.0
    %3329 = vmatprep.subr.mxu0 0.0
    %3330 = vmatpush1.xpose.msra.mxu0 0.0
    %3331 = vmatprep.subr.mxu0 0.0
    %3332 = vmatpush1.xpose.msra.mxu0 0.0
    %3333 = vmatprep.subr.mxu0 0.0
    %3334 = vmatpush1.xpose.msra.mxu0 0.0
    %3335 = vmatprep.subr.mxu0 0.0
    %3336 = vmatpush1.xpose.msra.mxu0 0.0
    %3337 = vmatprep.subr.mxu0 0.0
    %3338 = vmatpush1.xpose.msra.mxu0 0.0
    %3339 = vmatprep.subr.mxu0 0.0
    %3340 = vmatpush1.xpose.msra.mxu0 0.0
    %3341 = vmatprep.subr.mxu0 0.0
    %3342 = vmatpush1.xpose.msra.mxu0 0.0
    %3343 = vmatprep.subr.mxu0 0.0
    %3344 = vmatpush1.xpose.msra.mxu0 0.0
    %3345 = vmatprep.subr.mxu0 0.0
    %3346 = vmatpush1.xpose.msra.mxu0 0.0
    %3347 = vmatprep.subr.mxu0 0.0
    %3348 = vmatpush1.xpose.msra.mxu0 0.0
    %3349 = vmatprep.subr.mxu0 0.0
    %3350 = vmatpush1.xpose.msra.mxu0 0.0
    %3351 = vmatprep.subr.mxu0 0.0
    %3352 = vmatpush1.xpose.msra.mxu0 0.0
    %3353 = vmatprep.subr.mxu0 0.0
    %3354 = vmatpush1.xpose.msra.mxu0 0.0
    %3355 = vmatprep.mubr.f32.mxu0 0.0
    %3356 = vmatmul.mubr.f32.gmra.mrb[0].mxu0 %v3283
    %v3357 = vpop.f32.mrb[0].mxu0
    %v3358 = vadd.f32 0.0, %v3357
    %v3359 = vpop.f32.mrb[0].mxu0
    %3360 = vdwg.mxu0
    %v3362 = vsel %vm479, %v3281, 0
    %v3365 = vsel %vm479, %v3225, 0
    %v3368 = vsel %vm479, %v3226, 0
    %3370 = vmatprep.subr.mxu0 0.0
    %3371 = vmatpush1.xpose.msra.mxu0 %v3365
    %3372 = vmatprep.subr.mxu0 0.0
    %3373 = vmatpush1.xpose.msra.mxu0 %v3368
    %3374 = vmatprep.subr.mxu0 0.0
    %3375 = vmatpush1.xpose.msra.mxu0 0.0
    %3376 = vmatprep.subr.mxu0 0.0
    %3377 = vmatpush1.xpose.msra.mxu0 0.0
    %3378 = vmatprep.subr.mxu0 0.0
    %3379 = vmatpush1.xpose.msra.mxu0 0.0
    %3380 = vmatprep.subr.mxu0 0.0
    %3381 = vmatpush1.xpose.msra.mxu0 0.0
    %3382 = vmatprep.subr.mxu0 0.0
    %3383 = vmatpush1.xpose.msra.mxu0 0.0
    %3384 = vmatprep.subr.mxu0 0.0
    %3385 = vmatpush1.xpose.msra.mxu0 0.0
    %3386 = vmatprep.subr.mxu0 0.0
    %3387 = vmatpush1.xpose.msra.mxu0 0.0
    %3388 = vmatprep.subr.mxu0 0.0
    %3389 = vmatpush1.xpose.msra.mxu0 0.0
    %3390 = vmatprep.subr.mxu0 0.0
    %3391 = vmatpush1.xpose.msra.mxu0 0.0
    %3392 = vmatprep.subr.mxu0 0.0
    %3393 = vmatpush1.xpose.msra.mxu0 0.0
    %3394 = vmatprep.subr.mxu0 0.0
    %3395 = vmatpush1.xpose.msra.mxu0 0.0
    %3396 = vmatprep.subr.mxu0 0.0
    %3397 = vmatpush1.xpose.msra.mxu0 0.0
    %3398 = vmatprep.subr.mxu0 0.0
    %3399 = vmatpush1.xpose.msra.mxu0 0.0
    %3400 = vmatprep.subr.mxu0 0.0
    %3401 = vmatpush1.xpose.msra.mxu0 0.0
    %3402 = vmatprep.subr.mxu0 0.0
    %3403 = vmatpush1.xpose.msra.mxu0 0.0
    %3404 = vmatprep.subr.mxu0 0.0
    %3405 = vmatpush1.xpose.msra.mxu0 0.0
    %3406 = vmatprep.subr.mxu0 0.0
    %3407 = vmatpush1.xpose.msra.mxu0 0.0
    %3408 = vmatprep.subr.mxu0 0.0
    %3409 = vmatpush1.xpose.msra.mxu0 0.0
    %3410 = vmatprep.subr.mxu0 0.0
    %3411 = vmatpush1.xpose.msra.mxu0 0.0
    %3412 = vmatprep.subr.mxu0 0.0
    %3413 = vmatpush1.xpose.msra.mxu0 0.0
    %3414 = vmatprep.subr.mxu0 0.0
    %3415 = vmatpush1.xpose.msra.mxu0 0.0
    %3416 = vmatprep.subr.mxu0 0.0
    %3417 = vmatpush1.xpose.msra.mxu0 0.0
    %3418 = vmatprep.subr.mxu0 0.0
    %3419 = vmatpush1.xpose.msra.mxu0 0.0
    %3420 = vmatprep.subr.mxu0 0.0
    %3421 = vmatpush1.xpose.msra.mxu0 0.0
    %3422 = vmatprep.subr.mxu0 0.0
    %3423 = vmatpush1.xpose.msra.mxu0 0.0
    %3424 = vmatprep.subr.mxu0 0.0
    %3425 = vmatpush1.xpose.msra.mxu0 0.0
    %3426 = vmatprep.subr.mxu0 0.0
    %3427 = vmatpush1.xpose.msra.mxu0 0.0
    %3428 = vmatprep.subr.mxu0 0.0
    %3429 = vmatpush1.xpose.msra.mxu0 0.0
    %3430 = vmatprep.subr.mxu0 0.0
    %3431 = vmatpush1.xpose.msra.mxu0 0.0
    %3432 = vmatprep.subr.mxu0 0.0
    %3433 = vmatpush1.xpose.msra.mxu0 0.0
    %3434 = vmatprep.mubr.f32.mxu0 0.0
    %3435 = vmatmul.mubr.f32.gmra.mrb[0].mxu0 %v3362
    %v3436 = vpop.f32.mrb[0].mxu0
    %v3437 = vadd.f32 0.0, %v3436
    %v3438 = vpop.f32.mrb[0].mxu0
    %3439 = vdwg.mxu0
    %v3440 = vlaneseq
    %v3441 = vshrl.u32 %v3440, 7
    %v3442 = vsub.s32 0, %v3441
    %v3443 = vrot.slane %v3068, %v3442
    %s3445 = sor.u32 256, 16
    %3446 = vbcast.lane.b32.xlu0 %v3443, %s3445
    %v3447 = vpop.permute.xlu0 %3446
    %v3448 = vlaneseq
    %v3449 = vshrl.u32 %v3448, 7
    %v3450 = vsub.s32 1, %v3449
    %v3451 = vrot.slane %v3068, %v3450
    %s3453 = sor.u32 256, 16
    %3454 = vbcast.lane.b32.xlu0 %v3451, %s3453
    %v3455 = vpop.permute.xlu0 %3454
    %v3456 = vmul.f32 %v3447, %v3358
    %v3457 = vmul.f32 %v3455, %v3437
    %v3458 = vsel %vm729, %v3456, -inf
    %3459 = vmax.xlane.f32.xlu0 %v3458
    %v3460 = vpop.xlane.xlu0 %3459
    %v3461 = vsel %vm729, %v3457, -inf
    %3462 = vmax.xlane.f32.xlu0 %v3461
    %v3463 = vpop.xlane.xlu0 %3462
    %v3464 = vsub.f32 %v3456, %v3460
    %v3465 = vsub.f32 %v3457, %v3463
    %v3466 = vmul.f32 %v3464, 1.442695
    %v3467 = vpow.pop %v3466
    %v3468 = vmul.f32 %v3465, 1.442695
    %v3469 = vpow.pop %v3468
    %v3470 = vsel %vm729, %v3467, 0.0
    %3471 = vadd.xlane.f32.xlu0 %v3470
    %v3472 = vpop.xlane.xlu0 %3471
    %v3473 = vsel %vm729, %v3469, 0.0
    %3474 = vadd.xlane.f32.xlu0 %v3473
    %v3475 = vpop.xlane.xlu0 %3474
    %v3476 = vrcp.pop %v3472
    %v3477 = vmul.f32 %v3467, %v3476
    %v3478 = vrcp.pop %v3475
    %v3479 = vmul.f32 %v3469, %v3478
    %v3481 = vsel %vm104, %v3477, 0
    %3483 = vmatprep.subr.mxu0 0.0
    %3484 = vmatpush1.msra.mxu0 %v3195
    %3485 = vmatprep.subr.mxu0 0.0
    %3486 = vmatpush1.msra.mxu0 %v3196
    %3487 = vmatprep.subr.mxu0 0.0
    %3488 = vmatpush1.msra.mxu0 0.0
    %3489 = vmatprep.subr.mxu0 0.0
    %3490 = vmatpush1.msra.mxu0 0.0
    %3491 = vmatprep.subr.mxu0 0.0
    %3492 = vmatpush1.msra.mxu0 0.0
    %3493 = vmatprep.subr.mxu0 0.0
    %3494 = vmatpush1.msra.mxu0 0.0
    %3495 = vmatprep.subr.mxu0 0.0
    %3496 = vmatpush1.msra.mxu0 0.0
    %3497 = vmatprep.subr.mxu0 0.0
    %3498 = vmatpush1.msra.mxu0 0.0
    %3499 = vmatprep.subr.mxu0 0.0
    %3500 = vmatpush1.msra.mxu0 0.0
    %3501 = vmatprep.subr.mxu0 0.0
    %3502 = vmatpush1.msra.mxu0 0.0
    %3503 = vmatprep.subr.mxu0 0.0
    %3504 = vmatpush1.msra.mxu0 0.0
    %3505 = vmatprep.subr.mxu0 0.0
    %3506 = vmatpush1.msra.mxu0 0.0
    %3507 = vmatprep.subr.mxu0 0.0
    %3508 = vmatpush1.msra.mxu0 0.0
    %3509 = vmatprep.subr.mxu0 0.0
    %3510 = vmatpush1.msra.mxu0 0.0
    %3511 = vmatprep.subr.mxu0 0.0
    %3512 = vmatpush1.msra.mxu0 0.0
    %3513 = vmatprep.subr.mxu0 0.0
    %3514 = vmatpush1.msra.mxu0 0.0
    %3515 = vmatprep.subr.mxu0 0.0
    %3516 = vmatpush1.msra.mxu0 0.0
    %3517 = vmatprep.subr.mxu0 0.0
    %3518 = vmatpush1.msra.mxu0 0.0
    %3519 = vmatprep.subr.mxu0 0.0
    %3520 = vmatpush1.msra.mxu0 0.0
    %3521 = vmatprep.subr.mxu0 0.0
    %3522 = vmatpush1.msra.mxu0 0.0
    %3523 = vmatprep.subr.mxu0 0.0
    %3524 = vmatpush1.msra.mxu0 0.0
    %3525 = vmatprep.subr.mxu0 0.0
    %3526 = vmatpush1.msra.mxu0 0.0
    %3527 = vmatprep.subr.mxu0 0.0
    %3528 = vmatpush1.msra.mxu0 0.0
    %3529 = vmatprep.subr.mxu0 0.0
    %3530 = vmatpush1.msra.mxu0 0.0
    %3531 = vmatprep.subr.mxu0 0.0
    %3532 = vmatpush1.msra.mxu0 0.0
    %3533 = vmatprep.subr.mxu0 0.0
    %3534 = vmatpush1.msra.mxu0 0.0
    %3535 = vmatprep.subr.mxu0 0.0
    %3536 = vmatpush1.msra.mxu0 0.0
    %3537 = vmatprep.subr.mxu0 0.0
    %3538 = vmatpush1.msra.mxu0 0.0
    %3539 = vmatprep.subr.mxu0 0.0
    %3540 = vmatpush1.msra.mxu0 0.0
    %3541 = vmatprep.subr.mxu0 0.0
    %3542 = vmatpush1.msra.mxu0 0.0
    %3543 = vmatprep.subr.mxu0 0.0
    %3544 = vmatpush1.msra.mxu0 0.0
    %3545 = vmatprep.subr.mxu0 0.0
    %3546 = vmatpush1.msra.mxu0 0.0
    %3547 = vmatprep.mubr.f32.mxu0 0.0
    %3548 = vmatmul.mubr.f32.gmra.mrb[0].mxu0 %v3481
    %v3549 = vpop.f32.mrb[0].mxu0
    %v3550 = vadd.f32 0.0, %v3549
    %v3551 = vpop.f32.mrb[0].mxu0
    %3552 = vdwg.mxu0
    %v3554 = vsel %vm104, %v3479, 0
    %3556 = vmatprep.subr.mxu0 0.0
    %3557 = vmatpush1.msra.mxu0 %v3197
    %3558 = vmatprep.subr.mxu0 0.0
    %3559 = vmatpush1.msra.mxu0 %v3198
    %3560 = vmatprep.subr.mxu0 0.0
    %3561 = vmatpush1.msra.mxu0 0.0
    %3562 = vmatprep.subr.mxu0 0.0
    %3563 = vmatpush1.msra.mxu0 0.0
    %3564 = vmatprep.subr.mxu0 0.0
    %3565 = vmatpush1.msra.mxu0 0.0
    %3566 = vmatprep.subr.mxu0 0.0
    %3567 = vmatpush1.msra.mxu0 0.0
    %3568 = vmatprep.subr.mxu0 0.0
    %3569 = vmatpush1.msra.mxu0 0.0
    %3570 = vmatprep.subr.mxu0 0.0
    %3571 = vmatpush1.msra.mxu0 0.0
    %3572 = vmatprep.subr.mxu0 0.0
    %3573 = vmatpush1.msra.mxu0 0.0
    %3574 = vmatprep.subr.mxu0 0.0
    %3575 = vmatpush1.msra.mxu0 0.0
    %3576 = vmatprep.subr.mxu0 0.0
    %3577 = vmatpush1.msra.mxu0 0.0
    %3578 = vmatprep.subr.mxu0 0.0
    %3579 = vmatpush1.msra.mxu0 0.0
    %3580 = vmatprep.subr.mxu0 0.0
    %3581 = vmatpush1.msra.mxu0 0.0
    %3582 = vmatprep.subr.mxu0 0.0
    %3583 = vmatpush1.msra.mxu0 0.0
    %3584 = vmatprep.subr.mxu0 0.0
    %3585 = vmatpush1.msra.mxu0 0.0
    %3586 = vmatprep.subr.mxu0 0.0
    %3587 = vmatpush1.msra.mxu0 0.0
    %3588 = vmatprep.subr.mxu0 0.0
    %3589 = vmatpush1.msra.mxu0 0.0
    %3590 = vmatprep.subr.mxu0 0.0
    %3591 = vmatpush1.msra.mxu0 0.0
    %3592 = vmatprep.subr.mxu0 0.0
    %3593 = vmatpush1.msra.mxu0 0.0
    %3594 = vmatprep.subr.mxu0 0.0
    %3595 = vmatpush1.msra.mxu0 0.0
    %3596 = vmatprep.subr.mxu0 0.0
    %3597 = vmatpush1.msra.mxu0 0.0
    %3598 = vmatprep.subr.mxu0 0.0
    %3599 = vmatpush1.msra.mxu0 0.0
    %3600 = vmatprep.subr.mxu0 0.0
    %3601 = vmatpush1.msra.mxu0 0.0
    %3602 = vmatprep.subr.mxu0 0.0
    %3603 = vmatpush1.msra.mxu0 0.0
    %3604 = vmatprep.subr.mxu0 0.0
    %3605 = vmatpush1.msra.mxu0 0.0
    %3606 = vmatprep.subr.mxu0 0.0
    %3607 = vmatpush1.msra.mxu0 0.0
    %3608 = vmatprep.subr.mxu0 0.0
    %3609 = vmatpush1.msra.mxu0 0.0
    %3610 = vmatprep.subr.mxu0 0.0
    %3611 = vmatpush1.msra.mxu0 0.0
    %3612 = vmatprep.subr.mxu0 0.0
    %3613 = vmatpush1.msra.mxu0 0.0
    %3614 = vmatprep.subr.mxu0 0.0
    %3615 = vmatpush1.msra.mxu0 0.0
    %3616 = vmatprep.subr.mxu0 0.0
    %3617 = vmatpush1.msra.mxu0 0.0
    %3618 = vmatprep.subr.mxu0 0.0
    %3619 = vmatpush1.msra.mxu0 0.0
    %3620 = vmatprep.mubr.f32.mxu0 0.0
    %3621 = vmatmul.mubr.f32.gmra.mrb[0].mxu0 %v3554
    %v3622 = vpop.f32.mrb[0].mxu0
    %v3623 = vadd.f32 0.0, %v3622
    %v3624 = vpop.f32.mrb[0].mxu0
    %3625 = vdwg.mxu0
    %v3628 = vrot.slane %v3623, 7
    %v3629 = vsel %vm725, %v3628, %v3550
    %v3631 = vrot.slane %v3550, 1
    %v3632 = vsel %vm725, %v3623, %v3631
    %3633 = vrot.lane.b32.xlu0 %v3632, 8
    %v3634 = vpop.permute.xlu0 %3633
    %v3636 = vsel %vm479, %v3629, %v3634
    %v3638 = vsel %vm104, %v3636, 0
    %3640 = vmatprep.subr.mxu0 0.0
    %3641 = vmatpush1.msra.mxu0 %v194
    %3642 = vmatprep.subr.mxu0 0.0
    %3643 = vmatpush1.msra.mxu0 %v195
    %3644 = vmatprep.subr.mxu0 0.0
    %3645 = vmatpush1.msra.mxu0 0.0
    %3646 = vmatprep.subr.mxu0 0.0
    %3647 = vmatpush1.msra.mxu0 0.0
    %3648 = vmatprep.subr.mxu0 0.0
    %3649 = vmatpush1.msra.mxu0 0.0
    %3650 = vmatprep.subr.mxu0 0.0
    %3651 = vmatpush1.msra.mxu0 0.0
    %3652 = vmatprep.subr.mxu0 0.0
    %3653 = vmatpush1.msra.mxu0 0.0
    %3654 = vmatprep.subr.mxu0 0.0
    %3655 = vmatpush1.msra.mxu0 0.0
    %3656 = vmatprep.subr.mxu0 0.0
    %3657 = vmatpush1.msra.mxu0 0.0
    %3658 = vmatprep.subr.mxu0 0.0
    %3659 = vmatpush1.msra.mxu0 0.0
    %3660 = vmatprep.subr.mxu0 0.0
    %3661 = vmatpush1.msra.mxu0 0.0
    %3662 = vmatprep.subr.mxu0 0.0
    %3663 = vmatpush1.msra.mxu0 0.0
    %3664 = vmatprep.subr.mxu0 0.0
    %3665 = vmatpush1.msra.mxu0 0.0
    %3666 = vmatprep.subr.mxu0 0.0
    %3667 = vmatpush1.msra.mxu0 0.0
    %3668 = vmatprep.subr.mxu0 0.0
    %3669 = vmatpush1.msra.mxu0 0.0
    %3670 = vmatprep.subr.mxu0 0.0
    %3671 = vmatpush1.msra.mxu0 0.0
    %3672 = vmatprep.subr.mxu0 0.0
    %3673 = vmatpush1.msra.mxu0 0.0
    %3674 = vmatprep.subr.mxu0 0.0
    %3675 = vmatpush1.msra.mxu0 0.0
    %3676 = vmatprep.subr.mxu0 0.0
    %3677 = vmatpush1.msra.mxu0 0.0
    %3678 = vmatprep.subr.mxu0 0.0
    %3679 = vmatpush1.msra.mxu0 0.0
    %3680 = vmatprep.subr.mxu0 0.0
    %3681 = vmatpush1.msra.mxu0 0.0
    %3682 = vmatprep.subr.mxu0 0.0
    %3683 = vmatpush1.msra.mxu0 0.0
    %3684 = vmatprep.subr.mxu0 0.0
    %3685 = vmatpush1.msra.mxu0 0.0
    %3686 = vmatprep.subr.mxu0 0.0
    %3687 = vmatpush1.msra.mxu0 0.0
    %3688 = vmatprep.subr.mxu0 0.0
    %3689 = vmatpush1.msra.mxu0 0.0
    %3690 = vmatprep.subr.mxu0 0.0
    %3691 = vmatpush1.msra.mxu0 0.0
    %3692 = vmatprep.subr.mxu0 0.0
    %3693 = vmatpush1.msra.mxu0 0.0
    %3694 = vmatprep.subr.mxu0 0.0
    %3695 = vmatpush1.msra.mxu0 0.0
    %3696 = vmatprep.subr.mxu0 0.0
    %3697 = vmatpush1.msra.mxu0 0.0
    %3698 = vmatprep.subr.mxu0 0.0
    %3699 = vmatpush1.msra.mxu0 0.0
    %3700 = vmatprep.subr.mxu0 0.0
    %3701 = vmatpush1.msra.mxu0 0.0
    %3702 = vmatprep.subr.mxu0 0.0
    %3703 = vmatpush1.msra.mxu0 0.0
    %3704 = vmatprep.mubr.f32.mxu0 0.0
    %3705 = vmatmul.mubr.f32.gmra.mrb[0].mxu0 %v3638
    %v3706 = vpop.f32.mrb[0].mxu0
    %v3707 = vadd.f32 0.0, %v3706
    %v3708 = vpop.f32.mrb[0].mxu0
    %3709 = vdwg.mxu0
    %3710 = vmatprep.subr.mxu0 0.0
    %3711 = vmatpush1.msra.mxu0 %v190
    %3712 = vmatprep.subr.mxu0 0.0
    %3713 = vmatpush1.msra.mxu0 %v191
    %3714 = vmatprep.subr.mxu0 0.0
    %3715 = vmatpush1.msra.mxu0 %v192
    %3716 = vmatprep.subr.mxu0 0.0
    %3717 = vmatpush1.msra.mxu0 %v193
    %3718 = vmatprep.subr.mxu0 0.0
    %3719 = vmatpush1.msra.mxu0 0.0
    %3720 = vmatprep.subr.mxu0 0.0
    %3721 = vmatpush1.msra.mxu0 0.0
    %3722 = vmatprep.subr.mxu0 0.0
    %3723 = vmatpush1.msra.mxu0 0.0
    %3724 = vmatprep.subr.mxu0 0.0
    %3725 = vmatpush1.msra.mxu0 0.0
    %3726 = vmatprep.subr.mxu0 0.0
    %3727 = vmatpush1.msra.mxu0 0.0
    %3728 = vmatprep.subr.mxu0 0.0
    %3729 = vmatpush1.msra.mxu0 0.0
    %3730 = vmatprep.subr.mxu0 0.0
    %3731 = vmatpush1.msra.mxu0 0.0
    %3732 = vmatprep.subr.mxu0 0.0
    %3733 = vmatpush1.msra.mxu0 0.0
    %3734 = vmatprep.subr.mxu0 0.0
    %3735 = vmatpush1.msra.mxu0 0.0
    %3736 = vmatprep.subr.mxu0 0.0
    %3737 = vmatpush1.msra.mxu0 0.0
    %3738 = vmatprep.subr.mxu0 0.0
    %3739 = vmatpush1.msra.mxu0 0.0
    %3740 = vmatprep.subr.mxu0 0.0
    %3741 = vmatpush1.msra.mxu0 0.0
    %3742 = vmatprep.subr.mxu0 0.0
    %3743 = vmatpush1.msra.mxu0 0.0
    %3744 = vmatprep.subr.mxu0 0.0
    %3745 = vmatpush1.msra.mxu0 0.0
    %3746 = vmatprep.subr.mxu0 0.0
    %3747 = vmatpush1.msra.mxu0 0.0
    %3748 = vmatprep.subr.mxu0 0.0
    %3749 = vmatpush1.msra.mxu0 0.0
    %3750 = vmatprep.subr.mxu0 0.0
    %3751 = vmatpush1.msra.mxu0 0.0
    %3752 = vmatprep.subr.mxu0 0.0
    %3753 = vmatpush1.msra.mxu0 0.0
    %3754 = vmatprep.subr.mxu0 0.0
    %3755 = vmatpush1.msra.mxu0 0.0
    %3756 = vmatprep.subr.mxu0 0.0
    %3757 = vmatpush1.msra.mxu0 0.0
    %3758 = vmatprep.subr.mxu0 0.0
    %3759 = vmatpush1.msra.mxu0 0.0
    %3760 = vmatprep.subr.mxu0 0.0
    %3761 = vmatpush1.msra.mxu0 0.0
    %3762 = vmatprep.subr.mxu0 0.0
    %3763 = vmatpush1.msra.mxu0 0.0
    %3764 = vmatprep.subr.mxu0 0.0
    %3765 = vmatpush1.msra.mxu0 0.0
    %3766 = vmatprep.subr.mxu0 0.0
    %3767 = vmatpush1.msra.mxu0 0.0
    %3768 = vmatprep.subr.mxu0 0.0
    %3769 = vmatpush1.msra.mxu0 0.0
    %3770 = vmatprep.subr.mxu0 0.0
    %3771 = vmatpush1.msra.mxu0 0.0
    %3772 = vmatprep.subr.mxu0 0.0
    %3773 = vmatpush1.msra.mxu0 0.0
    %3774 = vmatprep.mubr.f32.mxu0 0.0
    %3775 = vmatmul.mubr.f32.gmra.mrb[0].mxu0 %v2791
    %v3776 = vpop.f32.mrb[0].mxu0
    %v3777 = vadd.f32 %v3707, %v3776
    %v3778 = vpop.f32.mrb[0].mxu0
    %3779 = vdwg.mxu0
    %v3780 = vadd.f32 %v3777, %v1435
    %s3781 = scalar_lea.vmem [#allocation10], 4
    %3782 = vst.msk [vmem:[%s3781] sm:$0x3] %vm509, %v3780
    %3783 = vmatprep.subr.mxu0 0.0
    %3784 = vmatpush1.msra.mxu0 %v178
    %3785 = vmatprep.subr.mxu0 0.0
    %3786 = vmatpush1.msra.mxu0 %v179
    %3787 = vmatprep.subr.mxu0 0.0
    %3788 = vmatpush1.msra.mxu0 0.0
    %3789 = vmatprep.subr.mxu0 0.0
    %3790 = vmatpush1.msra.mxu0 0.0
    %3791 = vmatprep.subr.mxu0 0.0
    %3792 = vmatpush1.msra.mxu0 0.0
    %3793 = vmatprep.subr.mxu0 0.0
    %3794 = vmatpush1.msra.mxu0 0.0
    %3795 = vmatprep.subr.mxu0 0.0
    %3796 = vmatpush1.msra.mxu0 0.0
    %3797 = vmatprep.subr.mxu0 0.0
    %3798 = vmatpush1.msra.mxu0 0.0
    %3799 = vmatprep.subr.mxu0 0.0
    %3800 = vmatpush1.msra.mxu0 0.0
    %3801 = vmatprep.subr.mxu0 0.0
    %3802 = vmatpush1.msra.mxu0 0.0
    %3803 = vmatprep.subr.mxu0 0.0
    %3804 = vmatpush1.msra.mxu0 0.0
    %3805 = vmatprep.subr.mxu0 0.0
    %3806 = vmatpush1.msra.mxu0 0.0
    %3807 = vmatprep.subr.mxu0 0.0
    %3808 = vmatpush1.msra.mxu0 0.0
    %3809 = vmatprep.subr.mxu0 0.0
    %3810 = vmatpush1.msra.mxu0 0.0
    %3811 = vmatprep.subr.mxu0 0.0
    %3812 = vmatpush1.msra.mxu0 0.0
    %3813 = vmatprep.subr.mxu0 0.0
    %3814 = vmatpush1.msra.mxu0 0.0
    %3815 = vmatprep.subr.mxu0 0.0
    %3816 = vmatpush1.msra.mxu0 0.0
    %3817 = vmatprep.subr.mxu0 0.0
    %3818 = vmatpush1.msra.mxu0 0.0
    %3819 = vmatprep.subr.mxu0 0.0
    %3820 = vmatpush1.msra.mxu0 0.0
    %3821 = vmatprep.subr.mxu0 0.0
    %3822 = vmatpush1.msra.mxu0 0.0
    %3823 = vmatprep.subr.mxu0 0.0
    %3824 = vmatpush1.msra.mxu0 0.0
    %3825 = vmatprep.subr.mxu0 0.0
    %3826 = vmatpush1.msra.mxu0 0.0
    %3827 = vmatprep.subr.mxu0 0.0
    %3828 = vmatpush1.msra.mxu0 0.0
    %3829 = vmatprep.subr.mxu0 0.0
    %3830 = vmatpush1.msra.mxu0 0.0
    %3831 = vmatprep.subr.mxu0 0.0
    %3832 = vmatpush1.msra.mxu0 0.0
    %3833 = vmatprep.subr.mxu0 0.0
    %3834 = vmatpush1.msra.mxu0 0.0
    %3835 = vmatprep.subr.mxu0 0.0
    %3836 = vmatpush1.msra.mxu0 0.0
    %3837 = vmatprep.subr.mxu0 0.0
    %3838 = vmatpush1.msra.mxu0 0.0
    %3839 = vmatprep.subr.mxu0 0.0
    %3840 = vmatpush1.msra.mxu0 0.0
    %3841 = vmatprep.subr.mxu0 0.0
    %3842 = vmatpush1.msra.mxu0 0.0
    %3843 = vmatprep.subr.mxu0 0.0
    %3844 = vmatpush1.msra.mxu0 0.0
    %3845 = vmatprep.subr.mxu0 0.0
    %3846 = vmatpush1.msra.mxu0 0.0
    %3847 = vmatprep.mubr.f32.mxu0 0.0
    %3848 = vmatmul.mubr.f32.gmra.mrb[0].mxu0 %v3638
    %v3849 = vpop.f32.mrb[0].mxu0
    %v3850 = vadd.f32 0.0, %v3849
    %v3851 = vpop.f32.mrb[0].mxu0
    %3852 = vdwg.mxu0
    %v3854 = vrot.slane %v3850, 2
    %v3856 = vadd.f32 %v175, %v3854
    %3857 = vmatprep.subr.mxu0 0.0
    %3858 = vmatpush1.msra.mxu0 %v180
    %3859 = vmatprep.subr.mxu0 0.0
    %3860 = vmatpush1.msra.mxu0 %v181
    %3861 = vmatprep.subr.mxu0 0.0
    %3862 = vmatpush1.msra.mxu0 %v182
    %3863 = vmatprep.subr.mxu0 0.0
    %3864 = vmatpush1.msra.mxu0 %v183
    %3865 = vmatprep.subr.mxu0 0.0
    %3866 = vmatpush1.msra.mxu0 0.0
    %3867 = vmatprep.subr.mxu0 0.0
    %3868 = vmatpush1.msra.mxu0 0.0
    %3869 = vmatprep.subr.mxu0 0.0
    %3870 = vmatpush1.msra.mxu0 0.0
    %3871 = vmatprep.subr.mxu0 0.0
    %3872 = vmatpush1.msra.mxu0 0.0
    %3873 = vmatprep.subr.mxu0 0.0
    %3874 = vmatpush1.msra.mxu0 0.0
    %3875 = vmatprep.subr.mxu0 0.0
    %3876 = vmatpush1.msra.mxu0 0.0
    %3877 = vmatprep.subr.mxu0 0.0
    %3878 = vmatpush1.msra.mxu0 0.0
    %3879 = vmatprep.subr.mxu0 0.0
    %3880 = vmatpush1.msra.mxu0 0.0
    %3881 = vmatprep.subr.mxu0 0.0
    %3882 = vmatpush1.msra.mxu0 0.0
    %3883 = vmatprep.subr.mxu0 0.0
    %3884 = vmatpush1.msra.mxu0 0.0
    %3885 = vmatprep.subr.mxu0 0.0
    %3886 = vmatpush1.msra.mxu0 0.0
    %3887 = vmatprep.subr.mxu0 0.0
    %3888 = vmatpush1.msra.mxu0 0.0
    %3889 = vmatprep.subr.mxu0 0.0
    %3890 = vmatpush1.msra.mxu0 0.0
    %3891 = vmatprep.subr.mxu0 0.0
    %3892 = vmatpush1.msra.mxu0 0.0
    %3893 = vmatprep.subr.mxu0 0.0
    %3894 = vmatpush1.msra.mxu0 0.0
    %3895 = vmatprep.subr.mxu0 0.0
    %3896 = vmatpush1.msra.mxu0 0.0
    %3897 = vmatprep.subr.mxu0 0.0
    %3898 = vmatpush1.msra.mxu0 0.0
    %3899 = vmatprep.subr.mxu0 0.0
    %3900 = vmatpush1.msra.mxu0 0.0
    %3901 = vmatprep.subr.mxu0 0.0
    %3902 = vmatpush1.msra.mxu0 0.0
    %3903 = vmatprep.subr.mxu0 0.0
    %3904 = vmatpush1.msra.mxu0 0.0
    %3905 = vmatprep.subr.mxu0 0.0
    %3906 = vmatpush1.msra.mxu0 0.0
    %3907 = vmatprep.subr.mxu0 0.0
    %3908 = vmatpush1.msra.mxu0 0.0
    %3909 = vmatprep.subr.mxu0 0.0
    %3910 = vmatpush1.msra.mxu0 0.0
    %3911 = vmatprep.subr.mxu0 0.0
    %3912 = vmatpush1.msra.mxu0 0.0
    %3913 = vmatprep.subr.mxu0 0.0
    %3914 = vmatpush1.msra.mxu0 0.0
    %3915 = vmatprep.subr.mxu0 0.0
    %3916 = vmatpush1.msra.mxu0 0.0
    %3917 = vmatprep.subr.mxu0 0.0
    %3918 = vmatpush1.msra.mxu0 0.0
    %3919 = vmatprep.subr.mxu0 0.0
    %3920 = vmatpush1.msra.mxu0 0.0
    %3921 = vmatprep.mubr.f32.mxu0 0.0
    %3922 = vmatmul.mubr.f32.gmra.mrb[0].mxu0 %v2791
    %v3923 = vpop.f32.mrb[0].mxu0
    %v3924 = vadd.f32 0.0, %v3923
    %v3925 = vpop.f32.mrb[0].mxu0
    %3926 = vdwg.mxu0
    %v3928 = vrot.slane %v3924, 2
    %v3930 = vadd.f32 %v3856, %v3928
    %v3931 = vadd.f32 %v3930, %v357
    %v3932 = vxor.u32 %v3931, 2147483648
    %v3933 = vmul.f32 %v3932, 1.442695
    %v3934 = vpow.pop %v3933
    %v3935 = vadd.f32 %v3934, 1.0
    %v3936 = vrcp.pop %v3935
    %v3937 = vmul.f32 1.0, %v3936
    %v3938 = vtanh.pop %v3931
    %v3940 = vrot.slane %v2780, 6
    %v3942 = vmul.f32 %v3937, %v3940
    %3944 = vrot.lane.b32.xlu0 %v3938, 64
    %v3945 = vpop.permute.xlu0 %3944
    %v3947 = vmul.f32 %v3937, %v3945
    %3949 = vrot.lane.b32.xlu0 %v3947, 32
    %v3950 = vpop.permute.xlu0 %3949
    %v3952 = vadd.f32 %v3942, %v3950
    %v3953 = vtanh.pop %v3952
    %3955 = vrot.lane.b32.xlu0 %v3953, 64
    %v3956 = vpop.permute.xlu0 %3955
    %v3958 = vmul.f32 %v3937, %v3956
    %v3960 = vrot.slane %v3958, 6
    %3961 = vrot.lane.b32.xlu0 %v3960, 32
    %v3962 = vpop.permute.xlu0 %3961
    %v3963 = vsel %vm278, %v3962, 0
    %3965 = vmatprep.subr.mxu0 0.0
    %3966 = vmatpush1.msra.mxu0 %v185
    %3967 = vmatprep.subr.mxu0 0.0
    %3968 = vmatpush1.msra.mxu0 %v186
    %3969 = vmatprep.subr.mxu0 0.0
    %3970 = vmatpush1.msra.mxu0 %v187
    %3971 = vmatprep.subr.mxu0 0.0
    %3972 = vmatpush1.msra.mxu0 %v188
    %3973 = vmatprep.subr.mxu0 0.0
    %3974 = vmatpush1.msra.mxu0 0.0
    %3975 = vmatprep.subr.mxu0 0.0
    %3976 = vmatpush1.msra.mxu0 0.0
    %3977 = vmatprep.subr.mxu0 0.0
    %3978 = vmatpush1.msra.mxu0 0.0
    %3979 = vmatprep.subr.mxu0 0.0
    %3980 = vmatpush1.msra.mxu0 0.0
    %3981 = vmatprep.subr.mxu0 0.0
    %3982 = vmatpush1.msra.mxu0 0.0
    %3983 = vmatprep.subr.mxu0 0.0
    %3984 = vmatpush1.msra.mxu0 0.0
    %3985 = vmatprep.subr.mxu0 0.0
    %3986 = vmatpush1.msra.mxu0 0.0
    %3987 = vmatprep.subr.mxu0 0.0
    %3988 = vmatpush1.msra.mxu0 0.0
    %3989 = vmatprep.subr.mxu0 0.0
    %3990 = vmatpush1.msra.mxu0 0.0
    %3991 = vmatprep.subr.mxu0 0.0
    %3992 = vmatpush1.msra.mxu0 0.0
    %3993 = vmatprep.subr.mxu0 0.0
    %3994 = vmatpush1.msra.mxu0 0.0
    %3995 = vmatprep.subr.mxu0 0.0
    %3996 = vmatpush1.msra.mxu0 0.0
    %3997 = vmatprep.subr.mxu0 0.0
    %3998 = vmatpush1.msra.mxu0 0.0
    %3999 = vmatprep.subr.mxu0 0.0
    %4000 = vmatpush1.msra.mxu0 0.0
    %4001 = vmatprep.subr.mxu0 0.0
    %4002 = vmatpush1.msra.mxu0 0.0
    %4003 = vmatprep.subr.mxu0 0.0
    %4004 = vmatpush1.msra.mxu0 0.0
    %4005 = vmatprep.subr.mxu0 0.0
    %4006 = vmatpush1.msra.mxu0 0.0
    %4007 = vmatprep.subr.mxu0 0.0
    %4008 = vmatpush1.msra.mxu0 0.0
    %4009 = vmatprep.subr.mxu0 0.0
    %4010 = vmatpush1.msra.mxu0 0.0
    %4011 = vmatprep.subr.mxu0 0.0
    %4012 = vmatpush1.msra.mxu0 0.0
    %4013 = vmatprep.subr.mxu0 0.0
    %4014 = vmatpush1.msra.mxu0 0.0
    %4015 = vmatprep.subr.mxu0 0.0
    %4016 = vmatpush1.msra.mxu0 0.0
    %4017 = vmatprep.subr.mxu0 0.0
    %4018 = vmatpush1.msra.mxu0 0.0
    %4019 = vmatprep.subr.mxu0 0.0
    %4020 = vmatpush1.msra.mxu0 0.0
    %4021 = vmatprep.subr.mxu0 0.0
    %4022 = vmatpush1.msra.mxu0 0.0
    %4023 = vmatprep.subr.mxu0 0.0
    %4024 = vmatpush1.msra.mxu0 0.0
    %4025 = vmatprep.subr.mxu0 0.0
    %4026 = vmatpush1.msra.mxu0 0.0
    %4027 = vmatprep.subr.mxu0 0.0
    %4028 = vmatpush1.msra.mxu0 0.0
    %4029 = vmatprep.mubr.f32.mxu0 0.0
    %4030 = vmatmul.mubr.f32.gmra.mrb[0].mxu0 %v3963
    %v4031 = vpop.f32.mrb[0].mxu0
    %v4032 = vadd.f32 %v392, %v4031
    %v4033 = vpop.f32.mrb[0].mxu0
    %4034 = vdwg.mxu0
    %v4035 = vxor.u32 %v4032, 2147483648
    %v4036 = vmul.f32 %v4035, 1.442695
    %v4037 = vpow.pop %v4036
    %v4038 = vadd.f32 %v4037, 1.0
    %v4039 = vrcp.pop %v4038
    %v4040 = vmul.f32 1.0, %v4039
    %v4041 = vmul.f32 %v4032, %v4032
    %4043 = vrot.lane.b32.xlu0 %v4041, 110
    %v4044 = vpop.permute.xlu0 %4043
    %v4046 = vsel %vm509, %v4044, 0.0
    %4047 = vadd.xlane.f32.xlu0 %v4046
    %v4048 = vpop.xlane.xlu0 %4047
    %v4049 = vadd.f32 %v4048, 1e-06
    %v4050 = vrsqrt.pop %v4049
    %v4051 = vmul.f32 %v4032, %v4050
    %v4054 = vunpack.c.l.s4 1966171168
    %v4055 = vunpack.c.0.s8 %v4054
    %v4056 = vlaneseq
    %v4057 = vshrl.u32 %v4056, 7
    %v4058 = vsub.s32 %v4055, %v4057
    %v4059 = vrot.slane %v4051, %v4058
    %v4060 = vcombine.high %v4059, %v4059
    %v4062 = vunpack.c.l.s4 1966171168
    %v4063 = vunpack.c.0.s8 %v4062
    %v4064 = vlaneseq
    %v4065 = vshrl.u32 %v4064, 7
    %v4066 = vsub.s32 %v4063, %v4065
    %v4067 = vrot.slane %v4059, %v4066
    %v4069 = vunpack.c.l.s4 1966171168
    %v4070 = vunpack.c.0.s8 %v4069
    %v4071 = vlaneseq
    %v4072 = vshrl.u32 %v4071, 7
    %v4073 = vsub.s32 %v4070, %v4072
    %v4074 = vrot.slane %v4060, %v4073
    %v4075 = vlaneseq
    %v4076 = vshrl.u32 %v4075, 7
    %v4077 = vsub.s32 0, %v4076
    %v4078 = vrot.slane %v4067, %v4077
    %4079 = vrot.lane.b32.xlu0 %v4078, 110
    %v4080 = vpop.permute.xlu0 %4079
    %v4081 = vsel %vm479, %v4080, 0
    %4083 = vmatprep.subr.mxu0 0.0
    %4084 = vmatpush1.xpose.msra.mxu0 %v3286
    %4085 = vmatprep.subr.mxu0 0.0
    %4086 = vmatpush1.xpose.msra.mxu0 %v3289
    %4087 = vmatprep.subr.mxu0 0.0
    %4088 = vmatpush1.xpose.msra.mxu0 0.0
    %4089 = vmatprep.subr.mxu0 0.0
    %4090 = vmatpush1.xpose.msra.mxu0 0.0
    %4091 = vmatprep.subr.mxu0 0.0
    %4092 = vmatpush1.xpose.msra.mxu0 0.0
    %4093 = vmatprep.subr.mxu0 0.0
    %4094 = vmatpush1.xpose.msra.mxu0 0.0
    %4095 = vmatprep.subr.mxu0 0.0
    %4096 = vmatpush1.xpose.msra.mxu0 0.0
    %4097 = vmatprep.subr.mxu0 0.0
    %4098 = vmatpush1.xpose.msra.mxu0 0.0
    %4099 = vmatprep.subr.mxu0 0.0
    %4100 = vmatpush1.xpose.msra.mxu0 0.0
    %4101 = vmatprep.subr.mxu0 0.0
    %4102 = vmatpush1.xpose.msra.mxu0 0.0
    %4103 = vmatprep.subr.mxu0 0.0
    %4104 = vmatpush1.xpose.msra.mxu0 0.0
    %4105 = vmatprep.subr.mxu0 0.0
    %4106 = vmatpush1.xpose.msra.mxu0 0.0
    %4107 = vmatprep.subr.mxu0 0.0
    %4108 = vmatpush1.xpose.msra.mxu0 0.0
    %4109 = vmatprep.subr.mxu0 0.0
    %4110 = vmatpush1.xpose.msra.mxu0 0.0
    %4111 = vmatprep.subr.mxu0 0.0
    %4112 = vmatpush1.xpose.msra.mxu0 0.0
    %4113 = vmatprep.subr.mxu0 0.0
    %4114 = vmatpush1.xpose.msra.mxu0 0.0
    %4115 = vmatprep.subr.mxu0 0.0
    %4116 = vmatpush1.xpose.msra.mxu0 0.0
    %4117 = vmatprep.subr.mxu0 0.0
    %4118 = vmatpush1.xpose.msra.mxu0 0.0
    %4119 = vmatprep.subr.mxu0 0.0
    %4120 = vmatpush1.xpose.msra.mxu0 0.0
    %4121 = vmatprep.subr.mxu0 0.0
    %4122 = vmatpush1.xpose.msra.mxu0 0.0
    %4123 = vmatprep.subr.mxu0 0.0
    %4124 = vmatpush1.xpose.msra.mxu0 0.0
    %4125 = vmatprep.subr.mxu0 0.0
    %4126 = vmatpush1.xpose.msra.mxu0 0.0
    %4127 = vmatprep.subr.mxu0 0.0
    %4128 = vmatpush1.xpose.msra.mxu0 0.0
    %4129 = vmatprep.subr.mxu0 0.0
    %4130 = vmatpush1.xpose.msra.mxu0 0.0
    %4131 = vmatprep.subr.mxu0 0.0
    %4132 = vmatpush1.xpose.msra.mxu0 0.0
    %4133 = vmatprep.subr.mxu0 0.0
    %4134 = vmatpush1.xpose.msra.mxu0 0.0
    %4135 = vmatprep.subr.mxu0 0.0
    %4136 = vmatpush1.xpose.msra.mxu0 0.0
    %4137 = vmatprep.subr.mxu0 0.0
    %4138 = vmatpush1.xpose.msra.mxu0 0.0
    %4139 = vmatprep.subr.mxu0 0.0
    %4140 = vmatpush1.xpose.msra.mxu0 0.0
    %4141 = vmatprep.subr.mxu0 0.0
    %4142 = vmatpush1.xpose.msra.mxu0 0.0
    %4143 = vmatprep.subr.mxu0 0.0
    %4144 = vmatpush1.xpose.msra.mxu0 0.0
    %4145 = vmatprep.subr.mxu0 0.0
    %4146 = vmatpush1.xpose.msra.mxu0 0.0
    %4147 = vmatprep.mubr.f32.mxu0 0.0
    %4148 = vmatmul.mubr.f32.gmra.mrb[0].mxu0 %v4081
    %v4149 = vpop.f32.mrb[0].mxu0
    %v4150 = vadd.f32 0.0, %v4149
    %v4151 = vpop.f32.mrb[0].mxu0
    %4152 = vdwg.mxu0
    %v4153 = vlaneseq
    %v4154 = vshrl.u32 %v4153, 7
    %v4155 = vsub.s32 0, %v4154
    %v4156 = vrot.slane %v4074, %v4155
    %4157 = vrot.lane.b32.xlu0 %v4156, 110
    %v4158 = vpop.permute.xlu0 %4157
    %v4159 = vsel %vm479, %v4158, 0
    %4161 = vmatprep.subr.mxu0 0.0
    %4162 = vmatpush1.xpose.msra.mxu0 %v3365
    %4163 = vmatprep.subr.mxu0 0.0
    %4164 = vmatpush1.xpose.msra.mxu0 %v3368
    %4165 = vmatprep.subr.mxu0 0.0
    %4166 = vmatpush1.xpose.msra.mxu0 0.0
    %4167 = vmatprep.subr.mxu0 0.0
    %4168 = vmatpush1.xpose.msra.mxu0 0.0
    %4169 = vmatprep.subr.mxu0 0.0
    %4170 = vmatpush1.xpose.msra.mxu0 0.0
    %4171 = vmatprep.subr.mxu0 0.0
    %4172 = vmatpush1.xpose.msra.mxu0 0.0
    %4173 = vmatprep.subr.mxu0 0.0
    %4174 = vmatpush1.xpose.msra.mxu0 0.0
    %4175 = vmatprep.subr.mxu0 0.0
    %4176 = vmatpush1.xpose.msra.mxu0 0.0
    %4177 = vmatprep.subr.mxu0 0.0
    %4178 = vmatpush1.xpose.msra.mxu0 0.0
    %4179 = vmatprep.subr.mxu0 0.0
    %4180 = vmatpush1.xpose.msra.mxu0 0.0
    %4181 = vmatprep.subr.mxu0 0.0
    %4182 = vmatpush1.xpose.msra.mxu0 0.0
    %4183 = vmatprep.subr.mxu0 0.0
    %4184 = vmatpush1.xpose.msra.mxu0 0.0
    %4185 = vmatprep.subr.mxu0 0.0
    %4186 = vmatpush1.xpose.msra.mxu0 0.0
    %4187 = vmatprep.subr.mxu0 0.0
    %4188 = vmatpush1.xpose.msra.mxu0 0.0
    %4189 = vmatprep.subr.mxu0 0.0
    %4190 = vmatpush1.xpose.msra.mxu0 0.0
    %4191 = vmatprep.subr.mxu0 0.0
    %4192 = vmatpush1.xpose.msra.mxu0 0.0
    %4193 = vmatprep.subr.mxu0 0.0
    %4194 = vmatpush1.xpose.msra.mxu0 0.0
    %4195 = vmatprep.subr.mxu0 0.0
    %4196 = vmatpush1.xpose.msra.mxu0 0.0
    %4197 = vmatprep.subr.mxu0 0.0
    %4198 = vmatpush1.xpose.msra.mxu0 0.0
    %4199 = vmatprep.subr.mxu0 0.0
    %4200 = vmatpush1.xpose.msra.mxu0 0.0
    %4201 = vmatprep.subr.mxu0 0.0
    %4202 = vmatpush1.xpose.msra.mxu0 0.0
    %4203 = vmatprep.subr.mxu0 0.0
    %4204 = vmatpush1.xpose.msra.mxu0 0.0
    %4205 = vmatprep.subr.mxu0 0.0
    %4206 = vmatpush1.xpose.msra.mxu0 0.0
    %4207 = vmatprep.subr.mxu0 0.0
    %4208 = vmatpush1.xpose.msra.mxu0 0.0
    %4209 = vmatprep.subr.mxu0 0.0
    %4210 = vmatpush1.xpose.msra.mxu0 0.0
    %4211 = vmatprep.subr.mxu0 0.0
    %4212 = vmatpush1.xpose.msra.mxu0 0.0
    %4213 = vmatprep.subr.mxu0 0.0
    %4214 = vmatpush1.xpose.msra.mxu0 0.0
    %4215 = vmatprep.subr.mxu0 0.0
    %4216 = vmatpush1.xpose.msra.mxu0 0.0
    %4217 = vmatprep.subr.mxu0 0.0
    %4218 = vmatpush1.xpose.msra.mxu0 0.0
    %4219 = vmatprep.subr.mxu0 0.0
    %4220 = vmatpush1.xpose.msra.mxu0 0.0
    %4221 = vmatprep.subr.mxu0 0.0
    %4222 = vmatpush1.xpose.msra.mxu0 0.0
    %4223 = vmatprep.subr.mxu0 0.0
    %4224 = vmatpush1.xpose.msra.mxu0 0.0
    %4225 = vmatprep.mubr.f32.mxu0 0.0
    %4226 = vmatmul.mubr.f32.gmra.mrb[0].mxu0 %v4159
    %v4227 = vpop.f32.mrb[0].mxu0
    %v4228 = vadd.f32 0.0, %v4227
    %v4229 = vpop.f32.mrb[0].mxu0
    %4230 = vdwg.mxu0
    %v4231 = vmax.f32 %v4032, 0.0
    %v4232 = vand.u32 2147483647, %v4032
    %v4233 = vsub.f32 0.0, %v4232
    %v4234 = vmul.f32 %v4233, 1.442695
    %v4235 = vpow.pop %v4234
    %v4236 = vadd.f32 %v4235, 1.0
    %v4237 = vlog2.pop %v4236
    %v4238 = vmul.f32 %v4237, 0.6931472
    %v4239 = vadd.f32 %v4231, %v4238
    %v4240 = vadd.f32 %v4239, 1.0
    %4242 = vset.pattern.permute.xlu0 26
    %4243 = vperm.xlu0 %4242, %v4240
    %v4244 = vpop.permute.xlu0 %4243
    %v4248 = vrot.slane %v4228, 7
    %v4249 = vsel %vm725, %v4248, %v4150
    %v4251 = vmul.f32 %v4244, %v4249
    %v4252 = vsel %vm729, %v4251, -inf
    %4253 = vmax.xlane.f32.xlu0 %v4252
    %v4254 = vpop.xlane.xlu0 %4253
    %v4255 = vsub.f32 %v4251, %v4254
    %v4256 = vmul.f32 %v4255, 1.442695
    %v4257 = vpow.pop %v4256
    %v4258 = vsel %vm729, %v4257, 0.0
    %4259 = vadd.xlane.f32.xlu0 %v4258
    %v4260 = vpop.xlane.xlu0 %4259
    %v4261 = vrcp.pop %v4260
    %v4262 = vmul.f32 %v4257, %v4261
    %4264 = vset.pattern.permute.xlu0 43
    %4265 = vperm.xlu0 %4264, %v4040
    %v4266 = vpop.permute.xlu0 %4265
    %v4268 = vmul.f32 %v4266, %v4262
    %v4269 = vlaneseq
    %v4270 = vshrl.u32 %v4269, 7
    %v4271 = vsub.s32 0, %v4270
    %v4272 = vrot.slane %v4268, %v4271
    %4274 = vbcast.lane.b32.xlu0 %v4272, 256
    %v4275 = vpop.permute.xlu0 %4274
    %s4277 = sor.u32 256, 8
    %4278 = vbcast.lane.b32.xlu0 %v4272, %s4277
    %v4279 = vpop.permute.xlu0 %4278
    %v4280 = vlaneseq
    %v4281 = vshrl.u32 %v4280, 7
    %v4282 = vsub.s32 1, %v4281
    %v4283 = vrot.slane %v4268, %v4282
    %4285 = vbcast.lane.b32.xlu0 %v4283, 256
    %v4286 = vpop.permute.xlu0 %4285
    %s4288 = sor.u32 256, 8
    %4289 = vbcast.lane.b32.xlu0 %v4283, %s4288
    %v4290 = vpop.permute.xlu0 %4289
    %v4292 = vunpack.c.l.s4 1966171168
    %v4293 = vunpack.c.0.s8 %v4292
    %v4294 = vlaneseq
    %v4295 = vshrl.u32 %v4294, 7
    %v4296 = vsub.s32 %v4293, %v4295
    %v4297 = vrot.slane %v4040, %v4296
    %v4298 = vcombine.high %v4297, %v4297
    %v4300 = vunpack.c.l.s4 1966171168
    %v4301 = vunpack.c.0.s8 %v4300
    %v4302 = vlaneseq
    %v4303 = vshrl.u32 %v4302, 7
    %v4304 = vsub.s32 %v4301, %v4303
    %v4305 = vrot.slane %v4297, %v4304
    %v4307 = vunpack.c.l.s4 1966171168
    %v4308 = vunpack.c.0.s8 %v4307
    %v4309 = vlaneseq
    %v4310 = vshrl.u32 %v4309, 7
    %v4311 = vsub.s32 %v4308, %v4310
    %v4312 = vrot.slane %v4298, %v4311
    %v4313 = vlaneseq
    %v4314 = vshrl.u32 %v4313, 7
    %v4315 = vsub.s32 0, %v4314
    %v4316 = vrot.slane %v4305, %v4315
    %v4317 = vlaneseq
    %v4318 = vshrl.u32 %v4317, 7
    %v4319 = vsub.s32 0, %v4318
    %v4320 = vrot.slane %v4312, %v4319
    %v4323 = vmul.f32 %v4275, %v4316
    %v4324 = vmul.f32 %v4279, %v4316
    %v4325 = vmul.f32 %v4286, %v4320
    %v4326 = vmul.f32 %v4290, %v4320
    %v4327 = vsub.f32 1.0, %v4323
    %v4328 = vsub.f32 1.0, %v4324
    %v4329 = vsub.f32 1.0, %v4325
    %v4330 = vsub.f32 1.0, %v4326
    %4335 = vrot.lane.b32.xlu0 %v4327, 101
    %v4336 = vpop.permute.xlu0 %4335
    %4337 = vrot.lane.b32.xlu0 %v4328, 101
    %v4338 = vpop.permute.xlu0 %4337
    %4339 = vrot.lane.b32.xlu0 %v4329, 101
    %v4340 = vpop.permute.xlu0 %4339
    %4341 = vrot.lane.b32.xlu0 %v4330, 101
    %v4342 = vpop.permute.xlu0 %4341
    %v4347 = vmul.f32 %v3195, %v4336
    %v4348 = vmul.f32 %v3196, %v4338
    %v4349 = vmul.f32 %v3197, %v4340
    %v4350 = vmul.f32 %v3198, %v4342
    %4355 = vrot.lane.b32.xlu0 %v4323, 93
    %v4356 = vpop.permute.xlu0 %4355
    %4357 = vrot.lane.b32.xlu0 %v4324, 93
    %v4358 = vpop.permute.xlu0 %4357
    %4359 = vrot.lane.b32.xlu0 %v4325, 93
    %v4360 = vpop.permute.xlu0 %4359
    %4361 = vrot.lane.b32.xlu0 %v4326, 93
    %v4362 = vpop.permute.xlu0 %4361
    %v4367 = vadd.f32 %v4347, %v4356
    %v4368 = vadd.f32 %v4348, %v4358
    %v4369 = vadd.f32 %v4349, %v4360
    %v4370 = vadd.f32 %v4350, %v4362
    %v4371 = vmul.f32 %v4367, %v4367
    %v4372 = vmul.f32 %v4368, %v4368
    %v4373 = vmul.f32 %v4369, %v4369
    %v4374 = vmul.f32 %v4370, %v4370
    %v4375 = vsel %vm479, %v4371, 0.0
    %4376 = vadd.xlane.f32.xlu0 %v4375
    %v4377 = vpop.xlane.xlu0 %4376
    %v4378 = vsel %vm479, %v4372, 0.0
    %4379 = vadd.xlane.f32.xlu0 %v4378
    %v4380 = vpop.xlane.xlu0 %4379
    %v4381 = vsel %vm479, %v4373, 0.0
    %4382 = vadd.xlane.f32.xlu0 %v4381
    %v4383 = vpop.xlane.xlu0 %4382
    %v4384 = vsel %vm479, %v4374, 0.0
    %4385 = vadd.xlane.f32.xlu0 %v4384
    %v4386 = vpop.xlane.xlu0 %4385
    %v4387 = vadd.f32 %v4377, 1e-06
    %v4388 = vadd.f32 %v4380, 1e-06
    %v4389 = vadd.f32 %v4383, 1e-06
    %v4390 = vadd.f32 %v4386, 1e-06
    %v4391 = vrsqrt.pop %v4387
    %v4392 = vrsqrt.pop %v4388
    %v4393 = vrsqrt.pop %v4389
    %v4394 = vrsqrt.pop %v4390
    %v4395 = vmul.f32 %v4367, %v4391
    %v4396 = vmul.f32 %v4368, %v4392
    %v4397 = vmul.f32 %v4369, %v4393
    %v4398 = vmul.f32 %v4370, %v4394
    %v4401 = vunpack.c.l.s4 1966171168
    %v4402 = vunpack.c.0.s8 %v4401
    %v4403 = vlaneseq
    %v4404 = vshrl.u32 %v4403, 7
    %v4405 = vsub.s32 %v4402, %v4404
    %v4406 = vrot.slane %v4032, %v4405
    %v4407 = vcombine.high %v4406, %v4406
    %v4409 = vunpack.c.l.s4 1966171168
    %v4410 = vunpack.c.0.s8 %v4409
    %v4411 = vlaneseq
    %v4412 = vshrl.u32 %v4411, 7
    %v4413 = vsub.s32 %v4410, %v4412
    %v4414 = vrot.slane %v4406, %v4413
    %v4416 = vunpack.c.l.s4 1966171168
    %v4417 = vunpack.c.0.s8 %v4416
    %v4418 = vlaneseq
    %v4419 = vshrl.u32 %v4418, 7
    %v4420 = vsub.s32 %v4417, %v4419
    %v4421 = vrot.slane %v4407, %v4420
    %v4424 = vlaneseq
    %v4425 = vshrl.u32 %v4424, 7
    %v4426 = vsub.s32 0, %v4425
    %v4427 = vrot.slane %v4414, %v4426
    %v4428 = vlaneseq
    %v4429 = vshrl.u32 %v4428, 7
    %v4430 = vsub.s32 0, %v4429
    %v4431 = vrot.slane %v4421, %v4430
    %4432 = vrot.lane.b32.xlu0 %v4427, 120
    %v4433 = vpop.permute.xlu0 %4432
    %4434 = vrot.lane.b32.xlu0 %v4431, 120
    %v4435 = vpop.permute.xlu0 %4434
    %v4438 = vsel %vm916, %v4414, %v4433
    %v4439 = vsel %vm916, %v4421, %v4435
    %v4440 = vmul.f32 %v4438, %v4438
    %v4441 = vmul.f32 %v4439, %v4439
    %v4442 = vsel %vm509, %v4440, 0.0
    %4443 = vadd.xlane.f32.xlu0 %v4442
    %v4444 = vpop.xlane.xlu0 %4443
    %v4445 = vsel %vm509, %v4441, 0.0
    %4446 = vadd.xlane.f32.xlu0 %v4445
    %v4447 = vpop.xlane.xlu0 %4446
    %v4448 = vadd.f32 %v4444, 1e-06
    %v4449 = vadd.f32 %v4447, 1e-06
    %v4450 = vrsqrt.pop %v4448
    %v4451 = vrsqrt.pop %v4449
    %v4452 = vmul.f32 %v4438, %v4450
    %v4453 = vmul.f32 %v4439, %v4451
    %v4455 = vsel %vm479, %v4452, 0
    %v4458 = vsel %vm479, %v4395, 0
    %v4461 = vsel %vm479, %v4396, 0
    %4463 = vmatprep.subr.mxu0 0.0
    %4464 = vmatpush1.xpose.msra.mxu0 %v4458
    %4465 = vmatprep.subr.mxu0 0.0
    %4466 = vmatpush1.xpose.msra.mxu0 %v4461
    %4467 = vmatprep.subr.mxu0 0.0
    %4468 = vmatpush1.xpose.msra.mxu0 0.0
    %4469 = vmatprep.subr.mxu0 0.0
    %4470 = vmatpush1.xpose.msra.mxu0 0.0
    %4471 = vmatprep.subr.mxu0 0.0
    %4472 = vmatpush1.xpose.msra.mxu0 0.0
    %4473 = vmatprep.subr.mxu0 0.0
    %4474 = vmatpush1.xpose.msra.mxu0 0.0
    %4475 = vmatprep.subr.mxu0 0.0
    %4476 = vmatpush1.xpose.msra.mxu0 0.0
    %4477 = vmatprep.subr.mxu0 0.0
    %4478 = vmatpush1.xpose.msra.mxu0 0.0
    %4479 = vmatprep.subr.mxu0 0.0
    %4480 = vmatpush1.xpose.msra.mxu0 0.0
    %4481 = vmatprep.subr.mxu0 0.0
    %4482 = vmatpush1.xpose.msra.mxu0 0.0
    %4483 = vmatprep.subr.mxu0 0.0
    %4484 = vmatpush1.xpose.msra.mxu0 0.0
    %4485 = vmatprep.subr.mxu0 0.0
    %4486 = vmatpush1.xpose.msra.mxu0 0.0
    %4487 = vmatprep.subr.mxu0 0.0
    %4488 = vmatpush1.xpose.msra.mxu0 0.0
    %4489 = vmatprep.subr.mxu0 0.0
    %4490 = vmatpush1.xpose.msra.mxu0 0.0
    %4491 = vmatprep.subr.mxu0 0.0
    %4492 = vmatpush1.xpose.msra.mxu0 0.0
    %4493 = vmatprep.subr.mxu0 0.0
    %4494 = vmatpush1.xpose.msra.mxu0 0.0
    %4495 = vmatprep.subr.mxu0 0.0
    %4496 = vmatpush1.xpose.msra.mxu0 0.0
    %4497 = vmatprep.subr.mxu0 0.0
    %4498 = vmatpush1.xpose.msra.mxu0 0.0
    %4499 = vmatprep.subr.mxu0 0.0
    %4500 = vmatpush1.xpose.msra.mxu0 0.0
    %4501 = vmatprep.subr.mxu0 0.0
    %4502 = vmatpush1.xpose.msra.mxu0 0.0
    %4503 = vmatprep.subr.mxu0 0.0
    %4504 = vmatpush1.xpose.msra.mxu0 0.0
    %4505 = vmatprep.subr.mxu0 0.0
    %4506 = vmatpush1.xpose.msra.mxu0 0.0
    %4507 = vmatprep.subr.mxu0 0.0
    %4508 = vmatpush1.xpose.msra.mxu0 0.0
    %4509 = vmatprep.subr.mxu0 0.0
    %4510 = vmatpush1.xpose.msra.mxu0 0.0
    %4511 = vmatprep.subr.mxu0 0.0
    %4512 = vmatpush1.xpose.msra.mxu0 0.0
    %4513 = vmatprep.subr.mxu0 0.0
    %4514 = vmatpush1.xpose.msra.mxu0 0.0
    %4515 = vmatprep.subr.mxu0 0.0
    %4516 = vmatpush1.xpose.msra.mxu0 0.0
    %4517 = vmatprep.subr.mxu0 0.0
    %4518 = vmatpush1.xpose.msra.mxu0 0.0
    %4519 = vmatprep.subr.mxu0 0.0
    %4520 = vmatpush1.xpose.msra.mxu0 0.0
    %4521 = vmatprep.subr.mxu0 0.0
    %4522 = vmatpush1.xpose.msra.mxu0 0.0
    %4523 = vmatprep.subr.mxu0 0.0
    %4524 = vmatpush1.xpose.msra.mxu0 0.0
    %4525 = vmatprep.subr.mxu0 0.0
    %4526 = vmatpush1.xpose.msra.mxu0 0.0
    %4527 = vmatprep.mubr.f32.mxu0 0.0
    %4528 = vmatmul.mubr.f32.gmra.mrb[0].mxu0 %v4455
    %v4529 = vpop.f32.mrb[0].mxu0
    %v4530 = vadd.f32 0.0, %v4529
    %v4531 = vpop.f32.mrb[0].mxu0
    %4532 = vdwg.mxu0
    %v4534 = vsel %vm479, %v4453, 0
    %v4537 = vsel %vm479, %v4397, 0
    %v4540 = vsel %vm479, %v4398, 0
    %4542 = vmatprep.subr.mxu0 0.0
    %4543 = vmatpush1.xpose.msra.mxu0 %v4537
    %4544 = vmatprep.subr.mxu0 0.0
    %4545 = vmatpush1.xpose.msra.mxu0 %v4540
    %4546 = vmatprep.subr.mxu0 0.0
    %4547 = vmatpush1.xpose.msra.mxu0 0.0
    %4548 = vmatprep.subr.mxu0 0.0
    %4549 = vmatpush1.xpose.msra.mxu0 0.0
    %4550 = vmatprep.subr.mxu0 0.0
    %4551 = vmatpush1.xpose.msra.mxu0 0.0
    %4552 = vmatprep.subr.mxu0 0.0
    %4553 = vmatpush1.xpose.msra.mxu0 0.0
    %4554 = vmatprep.subr.mxu0 0.0
    %4555 = vmatpush1.xpose.msra.mxu0 0.0
    %4556 = vmatprep.subr.mxu0 0.0
    %4557 = vmatpush1.xpose.msra.mxu0 0.0
    %4558 = vmatprep.subr.mxu0 0.0
    %4559 = vmatpush1.xpose.msra.mxu0 0.0
    %4560 = vmatprep.subr.mxu0 0.0
    %4561 = vmatpush1.xpose.msra.mxu0 0.0
    %4562 = vmatprep.subr.mxu0 0.0
    %4563 = vmatpush1.xpose.msra.mxu0 0.0
    %4564 = vmatprep.subr.mxu0 0.0
    %4565 = vmatpush1.xpose.msra.mxu0 0.0
    %4566 = vmatprep.subr.mxu0 0.0
    %4567 = vmatpush1.xpose.msra.mxu0 0.0
    %4568 = vmatprep.subr.mxu0 0.0
    %4569 = vmatpush1.xpose.msra.mxu0 0.0
    %4570 = vmatprep.subr.mxu0 0.0
    %4571 = vmatpush1.xpose.msra.mxu0 0.0
    %4572 = vmatprep.subr.mxu0 0.0
    %4573 = vmatpush1.xpose.msra.mxu0 0.0
    %4574 = vmatprep.subr.mxu0 0.0
    %4575 = vmatpush1.xpose.msra.mxu0 0.0
    %4576 = vmatprep.subr.mxu0 0.0
    %4577 = vmatpush1.xpose.msra.mxu0 0.0
    %4578 = vmatprep.subr.mxu0 0.0
    %4579 = vmatpush1.xpose.msra.mxu0 0.0
    %4580 = vmatprep.subr.mxu0 0.0
    %4581 = vmatpush1.xpose.msra.mxu0 0.0
    %4582 = vmatprep.subr.mxu0 0.0
    %4583 = vmatpush1.xpose.msra.mxu0 0.0
    %4584 = vmatprep.subr.mxu0 0.0
    %4585 = vmatpush1.xpose.msra.mxu0 0.0
    %4586 = vmatprep.subr.mxu0 0.0
    %4587 = vmatpush1.xpose.msra.mxu0 0.0
    %4588 = vmatprep.subr.mxu0 0.0
    %4589 = vmatpush1.xpose.msra.mxu0 0.0
    %4590 = vmatprep.subr.mxu0 0.0
    %4591 = vmatpush1.xpose.msra.mxu0 0.0
    %4592 = vmatprep.subr.mxu0 0.0
    %4593 = vmatpush1.xpose.msra.mxu0 0.0
    %4594 = vmatprep.subr.mxu0 0.0
    %4595 = vmatpush1.xpose.msra.mxu0 0.0
    %4596 = vmatprep.subr.mxu0 0.0
    %4597 = vmatpush1.xpose.msra.mxu0 0.0
    %4598 = vmatprep.subr.mxu0 0.0
    %4599 = vmatpush1.xpose.msra.mxu0 0.0
    %4600 = vmatprep.subr.mxu0 0.0
    %4601 = vmatpush1.xpose.msra.mxu0 0.0
    %4602 = vmatprep.subr.mxu0 0.0
    %4603 = vmatpush1.xpose.msra.mxu0 0.0
    %4604 = vmatprep.subr.mxu0 0.0
    %4605 = vmatpush1.xpose.msra.mxu0 0.0
    %4606 = vmatprep.mubr.f32.mxu0 0.0
    %4607 = vmatmul.mubr.f32.gmra.mrb[0].mxu0 %v4534
    %v4608 = vpop.f32.mrb[0].mxu0
    %v4609 = vadd.f32 0.0, %v4608
    %v4610 = vpop.f32.mrb[0].mxu0
    %4611 = vdwg.mxu0
    %v4612 = vlaneseq
    %v4613 = vshrl.u32 %v4612, 7
    %v4614 = vsub.s32 0, %v4613
    %v4615 = vrot.slane %v4240, %v4614
    %s4617 = sor.u32 256, 16
    %4618 = vbcast.lane.b32.xlu0 %v4615, %s4617
    %v4619 = vpop.permute.xlu0 %4618
    %v4620 = vlaneseq
    %v4621 = vshrl.u32 %v4620, 7
    %v4622 = vsub.s32 1, %v4621
    %v4623 = vrot.slane %v4240, %v4622
    %s4625 = sor.u32 256, 16
    %4626 = vbcast.lane.b32.xlu0 %v4623, %s4625
    %v4627 = vpop.permute.xlu0 %4626
    %v4628 = vmul.f32 %v4619, %v4530
    %v4629 = vmul.f32 %v4627, %v4609
    %v4630 = vsel %vm729, %v4628, -inf
    %4631 = vmax.xlane.f32.xlu0 %v4630
    %v4632 = vpop.xlane.xlu0 %4631
    %v4633 = vsel %vm729, %v4629, -inf
    %4634 = vmax.xlane.f32.xlu0 %v4633
    %v4635 = vpop.xlane.xlu0 %4634
    %v4636 = vsub.f32 %v4628, %v4632
    %v4637 = vsub.f32 %v4629, %v4635
    %v4638 = vmul.f32 %v4636, 1.442695
    %v4639 = vpow.pop %v4638
    %v4640 = vmul.f32 %v4637, 1.442695
    %v4641 = vpow.pop %v4640
    %v4642 = vsel %vm729, %v4639, 0.0
    %4643 = vadd.xlane.f32.xlu0 %v4642
    %v4644 = vpop.xlane.xlu0 %4643
    %v4645 = vsel %vm729, %v4641, 0.0
    %4646 = vadd.xlane.f32.xlu0 %v4645
    %v4647 = vpop.xlane.xlu0 %4646
    %v4648 = vrcp.pop %v4644
    %v4649 = vmul.f32 %v4639, %v4648
    %v4650 = vrcp.pop %v4647
    %v4651 = vmul.f32 %v4641, %v4650
    %v4653 = vsel %vm104, %v4649, 0
    %4655 = vmatprep.subr.mxu0 0.0
    %4656 = vmatpush1.msra.mxu0 %v4367
    %4657 = vmatprep.subr.mxu0 0.0
    %4658 = vmatpush1.msra.mxu0 %v4368
    %4659 = vmatprep.subr.mxu0 0.0
    %4660 = vmatpush1.msra.mxu0 0.0
    %4661 = vmatprep.subr.mxu0 0.0
    %4662 = vmatpush1.msra.mxu0 0.0
    %4663 = vmatprep.subr.mxu0 0.0
    %4664 = vmatpush1.msra.mxu0 0.0
    %4665 = vmatprep.subr.mxu0 0.0
    %4666 = vmatpush1.msra.mxu0 0.0
    %4667 = vmatprep.subr.mxu0 0.0
    %4668 = vmatpush1.msra.mxu0 0.0
    %4669 = vmatprep.subr.mxu0 0.0
    %4670 = vmatpush1.msra.mxu0 0.0
    %4671 = vmatprep.subr.mxu0 0.0
    %4672 = vmatpush1.msra.mxu0 0.0
    %4673 = vmatprep.subr.mxu0 0.0
    %4674 = vmatpush1.msra.mxu0 0.0
    %4675 = vmatprep.subr.mxu0 0.0
    %4676 = vmatpush1.msra.mxu0 0.0
    %4677 = vmatprep.subr.mxu0 0.0
    %4678 = vmatpush1.msra.mxu0 0.0
    %4679 = vmatprep.subr.mxu0 0.0
    %4680 = vmatpush1.msra.mxu0 0.0
    %4681 = vmatprep.subr.mxu0 0.0
    %4682 = vmatpush1.msra.mxu0 0.0
    %4683 = vmatprep.subr.mxu0 0.0
    %4684 = vmatpush1.msra.mxu0 0.0
    %4685 = vmatprep.subr.mxu0 0.0
    %4686 = vmatpush1.msra.mxu0 0.0
    %4687 = vmatprep.subr.mxu0 0.0
    %4688 = vmatpush1.msra.mxu0 0.0
    %4689 = vmatprep.subr.mxu0 0.0
    %4690 = vmatpush1.msra.mxu0 0.0
    %4691 = vmatprep.subr.mxu0 0.0
    %4692 = vmatpush1.msra.mxu0 0.0
    %4693 = vmatprep.subr.mxu0 0.0
    %4694 = vmatpush1.msra.mxu0 0.0
    %4695 = vmatprep.subr.mxu0 0.0
    %4696 = vmatpush1.msra.mxu0 0.0
    %4697 = vmatprep.subr.mxu0 0.0
    %4698 = vmatpush1.msra.mxu0 0.0
    %4699 = vmatprep.subr.mxu0 0.0
    %4700 = vmatpush1.msra.mxu0 0.0
    %4701 = vmatprep.subr.mxu0 0.0
    %4702 = vmatpush1.msra.mxu0 0.0
    %4703 = vmatprep.subr.mxu0 0.0
    %4704 = vmatpush1.msra.mxu0 0.0
    %4705 = vmatprep.subr.mxu0 0.0
    %4706 = vmatpush1.msra.mxu0 0.0
    %4707 = vmatprep.subr.mxu0 0.0
    %4708 = vmatpush1.msra.mxu0 0.0
    %4709 = vmatprep.subr.mxu0 0.0
    %4710 = vmatpush1.msra.mxu0 0.0
    %4711 = vmatprep.subr.mxu0 0.0
    %4712 = vmatpush1.msra.mxu0 0.0
    %4713 = vmatprep.subr.mxu0 0.0
    %4714 = vmatpush1.msra.mxu0 0.0
    %4715 = vmatprep.subr.mxu0 0.0
    %4716 = vmatpush1.msra.mxu0 0.0
    %4717 = vmatprep.subr.mxu0 0.0
    %4718 = vmatpush1.msra.mxu0 0.0
    %4719 = vmatprep.mubr.f32.mxu0 0.0
    %4720 = vmatmul.mubr.f32.gmra.mrb[0].mxu0 %v4653
    %v4721 = vpop.f32.mrb[0].mxu0
    %v4722 = vadd.f32 0.0, %v4721
    %v4723 = vpop.f32.mrb[0].mxu0
    %4724 = vdwg.mxu0
    %v4726 = vsel %vm104, %v4651, 0
    %4728 = vmatprep.subr.mxu0 0.0
    %4729 = vmatpush1.msra.mxu0 %v4369
    %4730 = vmatprep.subr.mxu0 0.0
    %4731 = vmatpush1.msra.mxu0 %v4370
    %4732 = vmatprep.subr.mxu0 0.0
    %4733 = vmatpush1.msra.mxu0 0.0
    %4734 = vmatprep.subr.mxu0 0.0
    %4735 = vmatpush1.msra.mxu0 0.0
    %4736 = vmatprep.subr.mxu0 0.0
    %4737 = vmatpush1.msra.mxu0 0.0
    %4738 = vmatprep.subr.mxu0 0.0
    %4739 = vmatpush1.msra.mxu0 0.0
    %4740 = vmatprep.subr.mxu0 0.0
    %4741 = vmatpush1.msra.mxu0 0.0
    %4742 = vmatprep.subr.mxu0 0.0
    %4743 = vmatpush1.msra.mxu0 0.0
    %4744 = vmatprep.subr.mxu0 0.0
    %4745 = vmatpush1.msra.mxu0 0.0
    %4746 = vmatprep.subr.mxu0 0.0
    %4747 = vmatpush1.msra.mxu0 0.0
    %4748 = vmatprep.subr.mxu0 0.0
    %4749 = vmatpush1.msra.mxu0 0.0
    %4750 = vmatprep.subr.mxu0 0.0
    %4751 = vmatpush1.msra.mxu0 0.0
    %4752 = vmatprep.subr.mxu0 0.0
    %4753 = vmatpush1.msra.mxu0 0.0
    %4754 = vmatprep.subr.mxu0 0.0
    %4755 = vmatpush1.msra.mxu0 0.0
    %4756 = vmatprep.subr.mxu0 0.0
    %4757 = vmatpush1.msra.mxu0 0.0
    %4758 = vmatprep.subr.mxu0 0.0
    %4759 = vmatpush1.msra.mxu0 0.0
    %4760 = vmatprep.subr.mxu0 0.0
    %4761 = vmatpush1.msra.mxu0 0.0
    %4762 = vmatprep.subr.mxu0 0.0
    %4763 = vmatpush1.msra.mxu0 0.0
    %4764 = vmatprep.subr.mxu0 0.0
    %4765 = vmatpush1.msra.mxu0 0.0
    %4766 = vmatprep.subr.mxu0 0.0
    %4767 = vmatpush1.msra.mxu0 0.0
    %4768 = vmatprep.subr.mxu0 0.0
    %4769 = vmatpush1.msra.mxu0 0.0
    %4770 = vmatprep.subr.mxu0 0.0
    %4771 = vmatpush1.msra.mxu0 0.0
    %4772 = vmatprep.subr.mxu0 0.0
    %4773 = vmatpush1.msra.mxu0 0.0
    %4774 = vmatprep.subr.mxu0 0.0
    %4775 = vmatpush1.msra.mxu0 0.0
    %4776 = vmatprep.subr.mxu0 0.0
    %4777 = vmatpush1.msra.mxu0 0.0
    %4778 = vmatprep.subr.mxu0 0.0
    %4779 = vmatpush1.msra.mxu0 0.0
    %4780 = vmatprep.subr.mxu0 0.0
    %4781 = vmatpush1.msra.mxu0 0.0
    %4782 = vmatprep.subr.mxu0 0.0
    %4783 = vmatpush1.msra.mxu0 0.0
    %4784 = vmatprep.subr.mxu0 0.0
    %4785 = vmatpush1.msra.mxu0 0.0
    %4786 = vmatprep.subr.mxu0 0.0
    %4787 = vmatpush1.msra.mxu0 0.0
    %4788 = vmatprep.subr.mxu0 0.0
    %4789 = vmatpush1.msra.mxu0 0.0
    %4790 = vmatprep.subr.mxu0 0.0
    %4791 = vmatpush1.msra.mxu0 0.0
    %4792 = vmatprep.mubr.f32.mxu0 0.0
    %4793 = vmatmul.mubr.f32.gmra.mrb[0].mxu0 %v4726
    %v4794 = vpop.f32.mrb[0].mxu0
    %v4795 = vadd.f32 0.0, %v4794
    %v4796 = vpop.f32.mrb[0].mxu0
    %4797 = vdwg.mxu0
    %v4800 = vrot.slane %v4795, 7
    %v4801 = vsel %vm725, %v4800, %v4722
    %v4803 = vrot.slane %v4722, 1
    %v4804 = vsel %vm725, %v4795, %v4803
    %4805 = vrot.lane.b32.xlu0 %v4804, 8
    %v4806 = vpop.permute.xlu0 %4805
    %v4808 = vsel %vm479, %v4801, %v4806
    %v4810 = vsel %vm104, %v4808, 0
    %4812 = vmatprep.subr.mxu0 0.0
    %4813 = vmatpush1.msra.mxu0 %v194
    %4814 = vmatprep.subr.mxu0 0.0
    %4815 = vmatpush1.msra.mxu0 %v195
    %4816 = vmatprep.subr.mxu0 0.0
    %4817 = vmatpush1.msra.mxu0 0.0
    %4818 = vmatprep.subr.mxu0 0.0
    %4819 = vmatpush1.msra.mxu0 0.0
    %4820 = vmatprep.subr.mxu0 0.0
    %4821 = vmatpush1.msra.mxu0 0.0
    %4822 = vmatprep.subr.mxu0 0.0
    %4823 = vmatpush1.msra.mxu0 0.0
    %4824 = vmatprep.subr.mxu0 0.0
    %4825 = vmatpush1.msra.mxu0 0.0
    %4826 = vmatprep.subr.mxu0 0.0
    %4827 = vmatpush1.msra.mxu0 0.0
    %4828 = vmatprep.subr.mxu0 0.0
    %4829 = vmatpush1.msra.mxu0 0.0
    %4830 = vmatprep.subr.mxu0 0.0
    %4831 = vmatpush1.msra.mxu0 0.0
    %4832 = vmatprep.subr.mxu0 0.0
    %4833 = vmatpush1.msra.mxu0 0.0
    %4834 = vmatprep.subr.mxu0 0.0
    %4835 = vmatpush1.msra.mxu0 0.0
    %4836 = vmatprep.subr.mxu0 0.0
    %4837 = vmatpush1.msra.mxu0 0.0
    %4838 = vmatprep.subr.mxu0 0.0
    %4839 = vmatpush1.msra.mxu0 0.0
    %4840 = vmatprep.subr.mxu0 0.0
    %4841 = vmatpush1.msra.mxu0 0.0
    %4842 = vmatprep.subr.mxu0 0.0
    %4843 = vmatpush1.msra.mxu0 0.0
    %4844 = vmatprep.subr.mxu0 0.0
    %4845 = vmatpush1.msra.mxu0 0.0
    %4846 = vmatprep.subr.mxu0 0.0
    %4847 = vmatpush1.msra.mxu0 0.0
    %4848 = vmatprep.subr.mxu0 0.0
    %4849 = vmatpush1.msra.mxu0 0.0
    %4850 = vmatprep.subr.mxu0 0.0
    %4851 = vmatpush1.msra.mxu0 0.0
    %4852 = vmatprep.subr.mxu0 0.0
    %4853 = vmatpush1.msra.mxu0 0.0
    %4854 = vmatprep.subr.mxu0 0.0
    %4855 = vmatpush1.msra.mxu0 0.0
    %4856 = vmatprep.subr.mxu0 0.0
    %4857 = vmatpush1.msra.mxu0 0.0
    %4858 = vmatprep.subr.mxu0 0.0
    %4859 = vmatpush1.msra.mxu0 0.0
    %4860 = vmatprep.subr.mxu0 0.0
    %4861 = vmatpush1.msra.mxu0 0.0
    %4862 = vmatprep.subr.mxu0 0.0
    %4863 = vmatpush1.msra.mxu0 0.0
    %4864 = vmatprep.subr.mxu0 0.0
    %4865 = vmatpush1.msra.mxu0 0.0
    %4866 = vmatprep.subr.mxu0 0.0
    %4867 = vmatpush1.msra.mxu0 0.0
    %4868 = vmatprep.subr.mxu0 0.0
    %4869 = vmatpush1.msra.mxu0 0.0
    %4870 = vmatprep.subr.mxu0 0.0
    %4871 = vmatpush1.msra.mxu0 0.0
    %4872 = vmatprep.subr.mxu0 0.0
    %4873 = vmatpush1.msra.mxu0 0.0
    %4874 = vmatprep.subr.mxu0 0.0
    %4875 = vmatpush1.msra.mxu0 0.0
    %4876 = vmatprep.mubr.f32.mxu0 0.0
    %4877 = vmatmul.mubr.f32.gmra.mrb[0].mxu0 %v4810
    %v4878 = vpop.f32.mrb[0].mxu0
    %v4879 = vadd.f32 0.0, %v4878
    %v4880 = vpop.f32.mrb[0].mxu0
    %4881 = vdwg.mxu0
    %4882 = vmatprep.subr.mxu0 0.0
    %4883 = vmatpush1.msra.mxu0 %v190
    %4884 = vmatprep.subr.mxu0 0.0
    %4885 = vmatpush1.msra.mxu0 %v191
    %4886 = vmatprep.subr.mxu0 0.0
    %4887 = vmatpush1.msra.mxu0 %v192
    %4888 = vmatprep.subr.mxu0 0.0
    %4889 = vmatpush1.msra.mxu0 %v193
    %4890 = vmatprep.subr.mxu0 0.0
    %4891 = vmatpush1.msra.mxu0 0.0
    %4892 = vmatprep.subr.mxu0 0.0
    %4893 = vmatpush1.msra.mxu0 0.0
    %4894 = vmatprep.subr.mxu0 0.0
    %4895 = vmatpush1.msra.mxu0 0.0
    %4896 = vmatprep.subr.mxu0 0.0
    %4897 = vmatpush1.msra.mxu0 0.0
    %4898 = vmatprep.subr.mxu0 0.0
    %4899 = vmatpush1.msra.mxu0 0.0
    %4900 = vmatprep.subr.mxu0 0.0
    %4901 = vmatpush1.msra.mxu0 0.0
    %4902 = vmatprep.subr.mxu0 0.0
    %4903 = vmatpush1.msra.mxu0 0.0
    %4904 = vmatprep.subr.mxu0 0.0
    %4905 = vmatpush1.msra.mxu0 0.0
    %4906 = vmatprep.subr.mxu0 0.0
    %4907 = vmatpush1.msra.mxu0 0.0
    %4908 = vmatprep.subr.mxu0 0.0
    %4909 = vmatpush1.msra.mxu0 0.0
    %4910 = vmatprep.subr.mxu0 0.0
    %4911 = vmatpush1.msra.mxu0 0.0
    %4912 = vmatprep.subr.mxu0 0.0
    %4913 = vmatpush1.msra.mxu0 0.0
    %4914 = vmatprep.subr.mxu0 0.0
    %4915 = vmatpush1.msra.mxu0 0.0
    %4916 = vmatprep.subr.mxu0 0.0
    %4917 = vmatpush1.msra.mxu0 0.0
    %4918 = vmatprep.subr.mxu0 0.0
    %4919 = vmatpush1.msra.mxu0 0.0
    %4920 = vmatprep.subr.mxu0 0.0
    %4921 = vmatpush1.msra.mxu0 0.0
    %4922 = vmatprep.subr.mxu0 0.0
    %4923 = vmatpush1.msra.mxu0 0.0
    %4924 = vmatprep.subr.mxu0 0.0
    %4925 = vmatpush1.msra.mxu0 0.0
    %4926 = vmatprep.subr.mxu0 0.0
    %4927 = vmatpush1.msra.mxu0 0.0
    %4928 = vmatprep.subr.mxu0 0.0
    %4929 = vmatpush1.msra.mxu0 0.0
    %4930 = vmatprep.subr.mxu0 0.0
    %4931 = vmatpush1.msra.mxu0 0.0
    %4932 = vmatprep.subr.mxu0 0.0
    %4933 = vmatpush1.msra.mxu0 0.0
    %4934 = vmatprep.subr.mxu0 0.0
    %4935 = vmatpush1.msra.mxu0 0.0
    %4936 = vmatprep.subr.mxu0 0.0
    %4937 = vmatpush1.msra.mxu0 0.0
    %4938 = vmatprep.subr.mxu0 0.0
    %4939 = vmatpush1.msra.mxu0 0.0
    %4940 = vmatprep.subr.mxu0 0.0
    %4941 = vmatpush1.msra.mxu0 0.0
    %4942 = vmatprep.subr.mxu0 0.0
    %4943 = vmatpush1.msra.mxu0 0.0
    %4944 = vmatprep.subr.mxu0 0.0
    %4945 = vmatpush1.msra.mxu0 0.0
    %4946 = vmatprep.mubr.f32.mxu0 0.0
    %4947 = vmatmul.mubr.f32.gmra.mrb[0].mxu0 %v3963
    %v4948 = vpop.f32.mrb[0].mxu0
    %v4949 = vadd.f32 %v4879, %v4948
    %v4950 = vpop.f32.mrb[0].mxu0
    %4951 = vdwg.mxu0
    %v4952 = vadd.f32 %v4949, %v1435
    %s4953 = scalar_lea.vmem [#allocation10], 6
    %4954 = vst.msk [vmem:[%s4953] sm:$0x3] %vm509, %v4952
    %4955 = vrot.lane.b32.xlu0 %v3958, 32
    %v4956 = vpop.permute.xlu0 %4955
    %vm4958 = vcmask 261126
    %4959 = vst.msk [vmem:[#allocation11 - $0x6] sm:$0xc0] %vm4958, %v4956
    %4961 = vrot.lane.b32.xlu0 %v3952, 96
    %v4962 = vpop.permute.xlu0 %4961
    %4964 = vst.msk [vmem:[#allocation13 - $0x6] sm:$0xc0] %vm4958, %v4962
    %4965 = vst.msk [vmem:[%s17] sm:$0x3] %vm729, %v4808
    %4966 = vst.msk [vmem:[%s18] sm:$0xff] %vm479, %v4367
    %4967 = vst.msk [vmem:[%s18 + $0x8] sm:$0xff] %vm479, %v4368
    %4968 = vst.msk [vmem:[%s18 + $0x10] sm:$0xff] %vm479, %v4369
    %4969 = vst.msk [vmem:[%s18 + $0x18] sm:$0xff] %vm479, %v4370
    // Predicated region
    $region74: #{dnc_forward.1} parent=1 // pred_check
      _
    $region75: #{dnc_forward.1} parent=1 // pred_check_branch
      %4971 = sbr.rel (0) target = $region77
    $region76: #{dnc_forward.1} parent=1 // pred_region
      %s4973 = ssub.s32 128, 128
      %4974 = vsyncadd [#allocation4], %s4973
      %s4975 = sshll.u32 [#allocation10], 4
      %s4976 = int_to_ptr.vmem [resolvable:$true] %s4975
      %4981 = dma.vmem_to_hbm [thread:$0]  %s4976, 128, %s14, [#allocation4], 32, 32, 2
    $region77: #{dnc_forward.1} parent=1 // pred_fallthru
      _
    // Predicated region
    $region78: #{dnc_forward.1} parent=1 // pred_check
      _
    $region79: #{dnc_forward.1} parent=1 // pred_check_branch
      %4983 = sbr.rel (0) target = $region81
    $region80: #{dnc_forward.1} parent=1 // pred_region
      %s4985 = ssub.s32 32, 32
      %4986 = vsyncadd [#allocation12], %s4985
      %s4988 = sshll.u32 [#allocation11], 4
      %s4989 = int_to_ptr.vmem [resolvable:$true] %s4988
      %4991 = dma.vmem_to_hbm [thread:$0]  %s4989, 32, %s15, [#allocation12]
    $region81: #{dnc_forward.1} parent=1 // pred_fallthru
      _
    // Predicated region
    $region82: #{dnc_forward.1} parent=1 // pred_check
      _
    $region83: #{dnc_forward.1} parent=1 // pred_check_branch
      %4993 = sbr.rel (0) target = $region85
    $region84: #{dnc_forward.1} parent=1 // pred_region
      %s4995 = ssub.s32 32, 32
      %4996 = vsyncadd [#allocation12], %s4995
      %s4998 = sshll.u32 [#allocation13], 4
      %s4999 = int_to_ptr.vmem [resolvable:$true] %s4998
      %5001 = dma.vmem_to_hbm [thread:$0]  %s4999, 32, %s16, [#allocation12]
    $region85: #{dnc_forward.1} parent=1 // pred_fallthru
      _
    // Predicated region
    $region86: #{dnc_forward.1} parent=1 // pred_check
      _
    $region87: #{dnc_forward.1} parent=1 // pred_check_branch
      %5003 = sbr.rel (0) target = $region89
    $region88: #{dnc_forward.1} parent=1 // pred_region
      _
    $region89: #{dnc_forward.1} parent=1 // pred_fallthru
      _
    // Predicated region
    $region90: #{dnc_forward.1} parent=1 // pred_check
      _
    $region91: #{dnc_forward.1} parent=1 // pred_check_branch
      %5005 = sbr.rel (0) target = $region93
    $region92: #{dnc_forward.1} parent=1 // pred_region
      _
    $region93: #{dnc_forward.1} parent=1 // pred_fallthru
      _
    // Predicated region
    $region94: #{dnc_forward.1} parent=1 // pred_check
      _
    $region95: #{dnc_forward.1} parent=1 // pred_check_branch
      %5007 = sbr.rel (0) target = $region97
    $region96: #{dnc_forward.1} parent=1 // pred_region
      %5008 = dma.done [#allocation4], 128
    $region97: #{dnc_forward.1} parent=1 // pred_fallthru
      _
    // Predicated region
    $region98: #{dnc_forward.1} parent=1 // pred_check
      _
    $region99: #{dnc_forward.1} parent=1 // pred_check_branch
      %5010 = sbr.rel (0) target = $region101
    $region100: #{dnc_forward.1} parent=1 // pred_region
      %5011 = dma.done [#allocation12], 32
    $region101: #{dnc_forward.1} parent=1 // pred_fallthru
      _
    // Predicated region
    $region102: #{dnc_forward.1} parent=1 // pred_check
      _
    $region103: #{dnc_forward.1} parent=1 // pred_check_branch
      %5013 = sbr.rel (0) target = $region105
    $region104: #{dnc_forward.1} parent=1 // pred_region
      %5014 = dma.done [#allocation12], 32
    $region105: #{dnc_forward.1} parent=1 // pred_fallthru
      _
    // Predicated region
    $region106: #{dnc_forward.1} parent=1 // pred_check
      _
    $region107: #{dnc_forward.1} parent=1 // pred_check_branch
      %5016 = sbr.rel (0) target = $region109
    $region108: #{dnc_forward.1} parent=1 // pred_region
      _
    $region109: #{dnc_forward.1} parent=1 // pred_fallthru
      _
    // Predicated region
    $region110: #{dnc_forward.1} parent=1 // pred_check
      _
    $region111: #{dnc_forward.1} parent=1 // pred_check_branch
      %5018 = sbr.rel (0) target = $region113
    $region112: #{dnc_forward.1} parent=1 // pred_region
      _
    $region113: #{dnc_forward.1} parent=1 // pred_fallthru
      _
    %5019 = vsyncpa [#allocation3], 1
    %5020 = vsyncpa [#allocation6], 1
    %5021 = vsyncpa [#allocation9], 1
    %5022 = vsyncpa [#allocation4], 1
    %5023 = vsyncpa [#allocation12], 1

</llo_original>
